<compile_context>
chip_gen: v6e
topology: v6e:2x2x1
jax: 0.10.0
libtpu: 0.0.40
codegen_flags: <defaults>
</compile_context>

<pallas_src>
import jax
import jax.numpy as jnp
from jax.experimental import pallas as pl
from jax.experimental.pallas import tpu as pltpu


# ----------------------------------------------------------------------------
# SEBlock: Pallas TPU kernel
# ----------------------------------------------------------------------------

def _se_block_kernel(x_ref, w1_ref, b1_ref, w2_ref, b2_ref, o_ref):
    # x_ref: (TB, C, HW), w1: (C, Cr), b1: (1, Cr), w2: (Cr, C), b2: (1, C)
    xf = x_ref[...].astype(jnp.float32)                           # (TB, C, HW)

    # Squeeze: global average pool over the lane-dense spatial axis.
    pooled = jnp.mean(xf, axis=2)                                 # (TB, C)

    # Excitation: batched FC -> ReLU -> FC -> Sigmoid (one matmul per FC).
    h = jnp.dot(pooled, w1_ref[...],
                preferred_element_type=jnp.float32) + b1_ref[...]  # (TB, Cr)
    h = jnp.maximum(h, 0.0)
    z = jnp.dot(h, w2_ref[...],
                preferred_element_type=jnp.float32) + b2_ref[...]  # (TB, C)
    y = jax.nn.sigmoid(z)                                         # (TB, C)

    # Scale + residual: x*y + x == x*(1+y), broadcast over spatial.
    o_ref[...] = (xf * (1.0 + y)[:, :, None]).astype(o_ref.dtype)


def _pick_batch_tile(batch, c, hw, itemsize, target_bytes=2 * 1024 * 1024):
    """Largest divisor of `batch` whose (TB, C, HW) block stays <= ~2 MiB."""
    tb = 1
    for cand in range(1, batch + 1):
        if batch % cand == 0 and cand * c * hw * itemsize <= target_bytes:
            tb = cand
    return tb


def se_block(x, w1, b1, w2, b2):
    """SEBlock forward.  x: (B, C, H, W).  w1: (C, Cr), b1: (Cr,),
    w2: (Cr, C), b2: (C,) -- stored input-major (transposed vs nn.Linear)."""
    B, C, H, W = x.shape
    HW = H * W
    Cr = w1.shape[1]

    TB = _pick_batch_tile(B, C, HW, x.dtype.itemsize)
    # TODO(synk): for production-scale SE blocks whose (1, C, HW) slab would
    # overflow v7x's 64 MiB VMEM, add an HW grid axis with a partial-sum
    # pooling pass (two-phase) instead of a single resident tile.

    x_flat = x.reshape(B, C, HW)
    b1_2d = b1.reshape(1, Cr)
    b2_2d = b2.reshape(1, C)

    out_flat = pl.pallas_call(
        _se_block_kernel,
        out_shape=jax.ShapeDtypeStruct((B, C, HW), x.dtype),
        grid_spec=pltpu.PrefetchScalarGridSpec(
            num_scalar_prefetch=0,
            grid=(B // TB,),
            in_specs=[
                pl.BlockSpec((TB, C, HW), lambda b: (b, 0, 0)),   # x tile
                # Grid-invariant params (constant index_map -> fetched once).
                pl.BlockSpec((C, Cr), lambda b: (0, 0)),          # w1
                pl.BlockSpec((1, Cr), lambda b: (0, 0)),          # b1
                pl.BlockSpec((Cr, C), lambda b: (0, 0)),          # w2
                pl.BlockSpec((1, C), lambda b: (0, 0)),           # b2
            ],
            out_specs=pl.BlockSpec((TB, C, HW), lambda b: (b, 0, 0)),
        ),
        compiler_params=pltpu.CompilerParams(
            dimension_semantics=("parallel",)),
    )(x_flat, w1, b1_2d, w2, b2_2d)

    return out_flat.reshape(B, C, H, W)


def se_block_reference(x, w1, b1, w2, b2):
    """Pure-JAX reference mirroring the PyTorch SEBlock forward."""
    y = jnp.mean(x, axis=(2, 3))                                  # (B, C)
    y = jnp.maximum(
        jnp.dot(y, w1, precision=jax.lax.Precision.HIGHEST) + b1, 0.0)
    y = jax.nn.sigmoid(
        jnp.dot(y, w2, precision=jax.lax.Precision.HIGHEST) + b2)
    return x * y[:, :, None, None] + x


# ----------------------------------------------------------------------------
# Encoder trunk: DoubleConv (conv3x3 + folded BN + ReLU) x2, MaxPool 2x2 (XLA)
# ----------------------------------------------------------------------------

def _conv3x3(x, w):
    return jax.lax.conv_general_dilated(
        x, w, window_strides=(1, 1), padding=((1, 1), (1, 1)),
        dimension_numbers=("NCHW", "OIHW", "NCHW"))


def _bn_relu(x, scale, shift):
    return jnp.maximum(
        x * scale[None, :, None, None] + shift[None, :, None, None], 0.0)


def _double_conv(x, p):
    w_a, s_a, sh_a, w_b, s_b, sh_b = p
    x = _bn_relu(_conv3x3(x, w_a), s_a, sh_a)
    x = _bn_relu(_conv3x3(x, w_b), s_b, sh_b)
    return x


def _max_pool_2x2(x):
    return jax.lax.reduce_window(
        x, jnp.asarray(-jnp.inf, dtype=x.dtype), jax.lax.max,
        window_dimensions=(1, 1, 2, 2), window_strides=(1, 1, 2, 2),
        padding="VALID")


def conv_trunk(x, params):
    e1 = _double_conv(x, params["conv1"])
    e2 = _double_conv(_max_pool_2x2(e1), params["conv2"])
    e3 = _double_conv(_max_pool_2x2(e2), params["conv3"])
    e4 = _double_conv(_max_pool_2x2(e3), params["conv4"])
    e5 = _double_conv(_max_pool_2x2(e4), params["conv5"])
    return e1, e2, e3, e4, e5


def encoder_forward_with_pre(x, params, se_fn=se_block):
    """Returns ((e1..e5) with SE applied, pre-SE trunk features) in one trace
    so the conv trunk is compiled/computed exactly once."""
    pre = conv_trunk(x, params)
    e1 = se_fn(pre[0], *params["se1"])
    e2 = se_fn(pre[1], *params["se2"])
    e3 = se_fn(pre[2], *params["se3"])
    e4 = se_fn(pre[3], *params["se4"])
    return (e1, e2, e3, e4, pre[4]), pre


def encoder_forward(x, params, se_fn=se_block):
    outs, _ = encoder_forward_with_pre(x, params, se_fn)
    return outs


# ----------------------------------------------------------------------------
# Deterministic synthetic parameters (BatchNorm folded into scale/shift)
# ----------------------------------------------------------------------------

def init_encoder_params(key, in_channels, features, reduction=16):
    keys = iter(jax.random.split(key, 64))

    def conv_w(cout, cin):
        fan_in = cin * 9
        return (jax.random.normal(next(keys), (cout, cin, 3, 3), jnp.float32)
                / jnp.sqrt(fan_in * 1.0))

    def folded_bn(c):
        k1, k2, k3, k4 = jax.random.split(next(keys), 4)
        gamma = 1.0 + 0.1 * jax.random.normal(k1, (c,), jnp.float32)
        beta = 0.1 * jax.random.normal(k2, (c,), jnp.float32)
        mean = 0.1 * jax.random.normal(k3, (c,), jnp.float32)
        var = jax.random.uniform(k4, (c,), jnp.float32, minval=0.5, maxval=1.5)
        scale = gamma / jnp.sqrt(var + 1e-5)
        return scale, beta - mean * scale

    def double_conv_params(cin, cout):
        w_a = conv_w(cout, cin)
        s_a, sh_a = folded_bn(cout)
        w_b = conv_w(cout, cout)
        s_b, sh_b = folded_bn(cout)
        return (w_a, s_a, sh_a, w_b, s_b, sh_b)

    def se_params(c):
        cr = max(c // reduction, 1)
        w1 = (jax.random.normal(next(keys), (c, cr), jnp.float32)
              / jnp.sqrt(c * 1.0))
        b1 = 0.1 * jax.random.normal(next(keys), (cr,), jnp.float32)
        w2 = (jax.random.normal(next(keys), (cr, c), jnp.float32)
              / jnp.sqrt(cr * 1.0))
        b2 = 0.1 * jax.random.normal(next(keys), (c,), jnp.float32)
        return (w1, b1, w2, b2)

    chans = [in_channels] + list(features)
    params = {}
    for i in range(5):
        params[f"conv{i + 1}"] = double_conv_params(chans[i], chans[i + 1])
    for i in range(4):
        params[f"se{i + 1}"] = se_params(features[i])
    return params


if __name__ == "__main__":
    B, C_in, H, W = 2, 4, 16, 16
    features = [32, 64, 128, 256, 256]     # SEBlock on features[0..3]

    key = jax.random.PRNGKey(0)
    k_params, k_x = jax.random.split(key)
    params = init_encoder_params(k_params, C_in, features)
    x = jax.random.normal(k_x, (B, C_in, H, W), dtype=jnp.float32)

    # Single jitted forward: conv trunk via XLA, SE blocks via Pallas.  Also
    # returns the pre-SE trunk features so correctness can be checked against
    # the pure-JAX SE reference without recompiling / re-running the trunk.
    fwd = jax.jit(lambda xx: encoder_forward_with_pre(xx, params, se_block))
    (e_out, pre) = jax.block_until_ready(fwd(x))
    e1, e2, e3, e4, e5 = e_out

    assert e1.shape == (B, features[0], H, W)
    assert e2.shape == (B, features[1], H // 2, W // 2)
    assert e3.shape == (B, features[2], H // 4, W // 4)
    assert e4.shape == (B, features[3], H // 8, W // 8)
    assert e5.shape == (B, features[4], H // 16, W // 16)

    # Correctness: Pallas SE kernel output vs pure-JAX reference on the exact
    # same pre-SE features (shared trunk computed once, so it cannot drift).
    for i, (e_got, e_pre) in enumerate(zip((e1, e2, e3, e4), pre[:4])):
        sp = params[f"se{i + 1}"]
        ref = se_block_reference(e_pre, *sp)
        assert e_got.shape == e_pre.shape
        assert jnp.allclose(e_got, ref, atol=1e-4, rtol=1e-4), \
            f"SE block {i + 1} mismatch vs reference"

    print("KERNEL_OK")
</pallas_src>

<mosaic_0001>
module attributes {stable_mosaic.version = 11 : i64} {
  func.func @_se_block_kernel(%arg0: i32, %arg1: memref<2x256x4xf32, #tpu.memory_space<vmem>>, %arg2: memref<256x16xf32, #tpu.memory_space<vmem>>, %arg3: memref<1x16xf32, #tpu.memory_space<vmem>>, %arg4: memref<16x256xf32, #tpu.memory_space<vmem>>, %arg5: memref<1x256xf32, #tpu.memory_space<vmem>>, %arg6: memref<2x256x4xf32, #tpu.memory_space<vmem>>) attributes {dimension_semantics = [#tpu.dimension_semantics<parallel>], iteration_bounds = array<i64: 1>, scalar_prefetch = 0 : i64, scratch_operands = 0 : i64, tpu.core_type = #tpu.core_type<tc>, window_params = [{transform_indices = @transform_0, window_bounds = array<i64: 2, 256, 4>}, {pipeline_mode = #tpu.pipeline_mode<synchronous>, transform_indices = @transform_1, window_bounds = array<i64: 256, 16>}, {pipeline_mode = #tpu.pipeline_mode<synchronous>, transform_indices = @transform_2, window_bounds = array<i64: 1, 16>}, {pipeline_mode = #tpu.pipeline_mode<synchronous>, transform_indices = @transform_3, window_bounds = array<i64: 16, 256>}, {pipeline_mode = #tpu.pipeline_mode<synchronous>, transform_indices = @transform_4, window_bounds = array<i64: 1, 256>}, {transform_indices = @transform_5, window_bounds = array<i64: 2, 256, 4>}]} {
    %c0 = arith.constant 0 : index
    %c0_0 = arith.constant 0 : index
    %c0_1 = arith.constant 0 : index
    %0 = vector.load %arg1[%c0, %c0_0, %c0_1] : memref<2x256x4xf32, #tpu.memory_space<vmem>>, vector<2x256x4xf32>
    %cst = arith.constant dense<0.000000e+00> : vector<2x256xf32>
    %1 = vector.multi_reduction <add>, %0, %cst [2] : vector<2x256x4xf32> to vector<2x256xf32>
    %cst_2 = arith.constant 4.000000e+00 : f32
    %2 = vector.broadcast %cst_2 : f32 to vector<2x256xf32>
    %3 = arith.divf %1, %2 : vector<2x256xf32>
    %c0_3 = arith.constant 0 : index
    %c0_4 = arith.constant 0 : index
    %4 = vector.load %arg2[%c0_3, %c0_4] : memref<256x16xf32, #tpu.memory_space<vmem>>, vector<256x16xf32>
    %cst_5 = arith.constant dense<0.000000e+00> : vector<2x16xf32>
    %5 = tpu.matmul %3, %4, %cst_5 {dimension_numbers = #tpu.dot_dimension_numbers<[1], [0], [0], [1], [0, 0, 1, 1], [], []>} : vector<2x256xf32>, vector<256x16xf32>, vector<2x16xf32> -> vector<2x16xf32>
    %c0_6 = arith.constant 0 : index
    %c0_7 = arith.constant 0 : index
    %6 = vector.load %arg3[%c0_6, %c0_7] : memref<1x16xf32, #tpu.memory_space<vmem>>, vector<1x16xf32>
    %7 = vector.broadcast %6 : vector<1x16xf32> to vector<2x16xf32>
    %8 = arith.addf %5, %7 : vector<2x16xf32>
    %cst_8 = arith.constant 0.000000e+00 : f32
    %9 = vector.broadcast %cst_8 : f32 to vector<2x16xf32>
    %10 = arith.maximumf %8, %9 : vector<2x16xf32>
    %c0_9 = arith.constant 0 : index
    %c0_10 = arith.constant 0 : index
    %11 = vector.load %arg4[%c0_9, %c0_10] : memref<16x256xf32, #tpu.memory_space<vmem>>, vector<16x256xf32>
    %cst_11 = arith.constant dense<0.000000e+00> : vector<2x256xf32>
    %12 = tpu.matmul %10, %11, %cst_11 {dimension_numbers = #tpu.dot_dimension_numbers<[1], [0], [0], [1], [0, 0, 1, 1], [], []>} : vector<2x16xf32>, vector<16x256xf32>, vector<2x256xf32> -> vector<2x256xf32>
    %c0_12 = arith.constant 0 : index
    %c0_13 = arith.constant 0 : index
    %13 = vector.load %arg5[%c0_12, %c0_13] : memref<1x256xf32, #tpu.memory_space<vmem>>, vector<1x256xf32>
    %14 = vector.broadcast %13 : vector<1x256xf32> to vector<2x256xf32>
    %15 = arith.addf %12, %14 : vector<2x256xf32>
    %16 = arith.negf %15 : vector<2x256xf32>
    %17 = math.exp %16 : vector<2x256xf32>
    %cst_14 = arith.constant 1.000000e+00 : f32
    %18 = vector.broadcast %cst_14 : f32 to vector<2x256xf32>
    %19 = arith.addf %18, %17 : vector<2x256xf32>
    %20 = arith.divf %18, %19 : vector<2x256xf32>
    %cst_15 = arith.constant 1.000000e+00 : f32
    %21 = vector.broadcast %cst_15 : f32 to vector<2x256xf32>
    %22 = arith.addf %21, %20 : vector<2x256xf32>
    %23 = vector.shape_cast %22 : vector<2x256xf32> to vector<2x256x1xf32>
    %24 = vector.broadcast %23 : vector<2x256x1xf32> to vector<2x256x4xf32>
    %25 = arith.mulf %0, %24 : vector<2x256x4xf32>
    %c0_16 = arith.constant 0 : index
    %c0_17 = arith.constant 0 : index
    %c0_18 = arith.constant 0 : index
    %26 = vector.load %arg6[%c0_16, %c0_17, %c0_18] : memref<2x256x4xf32, #tpu.memory_space<vmem>>, vector<2x256x4xf32>
    tpu.vector_store %arg6[%c0_16, %c0_17, %c0_18], %25 {strides = array<i32>} : memref<2x256x4xf32, #tpu.memory_space<vmem>>, vector<2x256x4xf32>,
    return
  }
  func.func @transform_0(%arg0: i32) -> (i32, i32, i32) {
    %c0_i32 = arith.constant 0 : i32
    %c0_i32_0 = arith.constant 0 : i32
    %c0_i32_1 = arith.constant 0 : i32
    return %arg0, %c0_i32, %c0_i32_0 : i32, i32, i32
  }
  func.func @transform_1(%arg0: i32) -> (i32, i32) {
    %c0_i32 = arith.constant 0 : i32
    %c0_i32_0 = arith.constant 0 : i32
    %c0_i32_1 = arith.constant 0 : i32
    return %c0_i32, %c0_i32_0 : i32, i32
  }
  func.func @transform_2(%arg0: i32) -> (i32, i32) {
    %c0_i32 = arith.constant 0 : i32
    %c0_i32_0 = arith.constant 0 : i32
    %c0_i32_1 = arith.constant 0 : i32
    return %c0_i32, %c0_i32_0 : i32, i32
  }
  func.func @transform_3(%arg0: i32) -> (i32, i32) {
    %c0_i32 = arith.constant 0 : i32
    %c0_i32_0 = arith.constant 0 : i32
    %c0_i32_1 = arith.constant 0 : i32
    return %c0_i32, %c0_i32_0 : i32, i32
  }
  func.func @transform_4(%arg0: i32) -> (i32, i32) {
    %c0_i32 = arith.constant 0 : i32
    %c0_i32_0 = arith.constant 0 : i32
    %c0_i32_1 = arith.constant 0 : i32
    return %c0_i32, %c0_i32_0 : i32, i32
  }
  func.func @transform_5(%arg0: i32) -> (i32, i32, i32) {
    %c0_i32 = arith.constant 0 : i32
    %c0_i32_0 = arith.constant 0 : i32
    %c0_i32_1 = arith.constant 0 : i32
    return %arg0, %c0_i32, %c0_i32_0 : i32, i32, i32
  }
}

module attributes {stable_mosaic.version = 11 : i64} {
  func.func @_se_block_kernel(%arg0: i32, %arg1: memref<2x128x16xf32, #tpu.memory_space<vmem>>, %arg2: memref<128x8xf32, #tpu.memory_space<vmem>>, %arg3: memref<1x8xf32, #tpu.memory_space<vmem>>, %arg4: memref<8x128xf32, #tpu.memory_space<vmem>>, %arg5: memref<1x128xf32, #tpu.memory_space<vmem>>, %arg6: memref<2x128x16xf32, #tpu.memory_space<vmem>>) attributes {dimension_semantics = [#tpu.dimension_semantics<parallel>], iteration_bounds = array<i64: 1>, scalar_prefetch = 0 : i64, scratch_operands = 0 : i64, tpu.core_type = #tpu.core_type<tc>, window_params = [{transform_indices = @transform_0, window_bounds = array<i64: 2, 128, 16>}, {pipeline_mode = #tpu.pipeline_mode<synchronous>, transform_indices = @transform_1, window_bounds = array<i64: 128, 8>}, {pipeline_mode = #tpu.pipeline_mode<synchronous>, transform_indices = @transform_2, window_bounds = array<i64: 1, 8>}, {pipeline_mode = #tpu.pipeline_mode<synchronous>, transform_indices = @transform_3, window_bounds = array<i64: 8, 128>}, {pipeline_mode = #tpu.pipeline_mode<synchronous>, transform_indices = @transform_4, window_bounds = array<i64: 1, 128>}, {transform_indices = @transform_5, window_bounds = array<i64: 2, 128, 16>}]} {
    %c0 = arith.constant 0 : index
    %c0_0 = arith.constant 0 : index
    %c0_1 = arith.constant 0 : index
    %0 = vector.load %arg1[%c0, %c0_0, %c0_1] : memref<2x128x16xf32, #tpu.memory_space<vmem>>, vector<2x128x16xf32>
    %cst = arith.constant dense<0.000000e+00> : vector<2x128xf32>
    %1 = vector.multi_reduction <add>, %0, %cst [2] : vector<2x128x16xf32> to vector<2x128xf32>
    %cst_2 = arith.constant 1.600000e+01 : f32
    %2 = vector.broadcast %cst_2 : f32 to vector<2x128xf32>
    %3 = arith.divf %1, %2 : vector<2x128xf32>
    %c0_3 = arith.constant 0 : index
    %c0_4 = arith.constant 0 : index
    %4 = vector.load %arg2[%c0_3, %c0_4] : memref<128x8xf32, #tpu.memory_space<vmem>>, vector<128x8xf32>
    %cst_5 = arith.constant dense<0.000000e+00> : vector<2x8xf32>
    %5 = tpu.matmul %3, %4, %cst_5 {dimension_numbers = #tpu.dot_dimension_numbers<[1], [0], [0], [1], [0, 0, 1, 1], [], []>} : vector<2x128xf32>, vector<128x8xf32>, vector<2x8xf32> -> vector<2x8xf32>
    %c0_6 = arith.constant 0 : index
    %c0_7 = arith.constant 0 : index
    %6 = vector.load %arg3[%c0_6, %c0_7] : memref<1x8xf32, #tpu.memory_space<vmem>>, vector<1x8xf32>
    %7 = vector.broadcast %6 : vector<1x8xf32> to vector<2x8xf32>
    %8 = arith.addf %5, %7 : vector<2x8xf32>
    %cst_8 = arith.constant 0.000000e+00 : f32
    %9 = vector.broadcast %cst_8 : f32 to vector<2x8xf32>
    %10 = arith.maximumf %8, %9 : vector<2x8xf32>
    %c0_9 = arith.constant 0 : index
    %c0_10 = arith.constant 0 : index
    %11 = vector.load %arg4[%c0_9, %c0_10] : memref<8x128xf32, #tpu.memory_space<vmem>>, vector<8x128xf32>
    %cst_11 = arith.constant dense<0.000000e+00> : vector<2x128xf32>
    %12 = tpu.matmul %10, %11, %cst_11 {dimension_numbers = #tpu.dot_dimension_numbers<[1], [0], [0], [1], [0, 0, 1, 1], [], []>} : vector<2x8xf32>, vector<8x128xf32>, vector<2x128xf32> -> vector<2x128xf32>
    %c0_12 = arith.constant 0 : index
    %c0_13 = arith.constant 0 : index
    %13 = vector.load %arg5[%c0_12, %c0_13] : memref<1x128xf32, #tpu.memory_space<vmem>>, vector<1x128xf32>
    %14 = vector.broadcast %13 : vector<1x128xf32> to vector<2x128xf32>
    %15 = arith.addf %12, %14 : vector<2x128xf32>
    %16 = arith.negf %15 : vector<2x128xf32>
    %17 = math.exp %16 : vector<2x128xf32>
    %cst_14 = arith.constant 1.000000e+00 : f32
    %18 = vector.broadcast %cst_14 : f32 to vector<2x128xf32>
    %19 = arith.addf %18, %17 : vector<2x128xf32>
    %20 = arith.divf %18, %19 : vector<2x128xf32>
    %cst_15 = arith.constant 1.000000e+00 : f32
    %21 = vector.broadcast %cst_15 : f32 to vector<2x128xf32>
    %22 = arith.addf %21, %20 : vector<2x128xf32>
    %23 = vector.shape_cast %22 : vector<2x128xf32> to vector<2x128x1xf32>
    %24 = vector.broadcast %23 : vector<2x128x1xf32> to vector<2x128x16xf32>
    %25 = arith.mulf %0, %24 : vector<2x128x16xf32>
    %c0_16 = arith.constant 0 : index
    %c0_17 = arith.constant 0 : index
    %c0_18 = arith.constant 0 : index
    %26 = vector.load %arg6[%c0_16, %c0_17, %c0_18] : memref<2x128x16xf32, #tpu.memory_space<vmem>>, vector<2x128x16xf32>
    tpu.vector_store %arg6[%c0_16, %c0_17, %c0_18], %25 {strides = array<i32>} : memref<2x128x16xf32, #tpu.memory_space<vmem>>, vector<2x128x16xf32>,
    return
  }
  func.func @transform_0(%arg0: i32) -> (i32, i32, i32) {
    %c0_i32 = arith.constant 0 : i32
    %c0_i32_0 = arith.constant 0 : i32
    %c0_i32_1 = arith.constant 0 : i32
    return %arg0, %c0_i32, %c0_i32_0 : i32, i32, i32
  }
  func.func @transform_1(%arg0: i32) -> (i32, i32) {
    %c0_i32 = arith.constant 0 : i32
    %c0_i32_0 = arith.constant 0 : i32
    %c0_i32_1 = arith.constant 0 : i32
    return %c0_i32, %c0_i32_0 : i32, i32
  }
  func.func @transform_2(%arg0: i32) -> (i32, i32) {
    %c0_i32 = arith.constant 0 : i32
    %c0_i32_0 = arith.constant 0 : i32
    %c0_i32_1 = arith.constant 0 : i32
    return %c0_i32, %c0_i32_0 : i32, i32
  }
  func.func @transform_3(%arg0: i32) -> (i32, i32) {
    %c0_i32 = arith.constant 0 : i32
    %c0_i32_0 = arith.constant 0 : i32
    %c0_i32_1 = arith.constant 0 : i32
    return %c0_i32, %c0_i32_0 : i32, i32
  }
  func.func @transform_4(%arg0: i32) -> (i32, i32) {
    %c0_i32 = arith.constant 0 : i32
    %c0_i32_0 = arith.constant 0 : i32
    %c0_i32_1 = arith.constant 0 : i32
    return %c0_i32, %c0_i32_0 : i32, i32
  }
  func.func @transform_5(%arg0: i32) -> (i32, i32, i32) {
    %c0_i32 = arith.constant 0 : i32
    %c0_i32_0 = arith.constant 0 : i32
    %c0_i32_1 = arith.constant 0 : i32
    return %arg0, %c0_i32, %c0_i32_0 : i32, i32, i32
  }
}

module attributes {stable_mosaic.version = 11 : i64} {
  func.func @_se_block_kernel(%arg0: i32, %arg1: memref<2x32x256xf32, #tpu.memory_space<vmem>>, %arg2: memref<32x2xf32, #tpu.memory_space<vmem>>, %arg3: memref<1x2xf32, #tpu.memory_space<vmem>>, %arg4: memref<2x32xf32, #tpu.memory_space<vmem>>, %arg5: memref<1x32xf32, #tpu.memory_space<vmem>>, %arg6: memref<2x32x256xf32, #tpu.memory_space<vmem>>) attributes {dimension_semantics = [#tpu.dimension_semantics<parallel>], iteration_bounds = array<i64: 1>, scalar_prefetch = 0 : i64, scratch_operands = 0 : i64, tpu.core_type = #tpu.core_type<tc>, window_params = [{transform_indices = @transform_0, window_bounds = array<i64: 2, 32, 256>}, {pipeline_mode = #tpu.pipeline_mode<synchronous>, transform_indices = @transform_1, window_bounds = array<i64: 32, 2>}, {pipeline_mode = #tpu.pipeline_mode<synchronous>, transform_indices = @transform_2, window_bounds = array<i64: 1, 2>}, {pipeline_mode = #tpu.pipeline_mode<synchronous>, transform_indices = @transform_3, window_bounds = array<i64: 2, 32>}, {pipeline_mode = #tpu.pipeline_mode<synchronous>, transform_indices = @transform_4, window_bounds = array<i64: 1, 32>}, {transform_indices = @transform_5, window_bounds = array<i64: 2, 32, 256>}]} {
    %c0 = arith.constant 0 : index
    %c0_0 = arith.constant 0 : index
    %c0_1 = arith.constant 0 : index
    %0 = vector.load %arg1[%c0, %c0_0, %c0_1] : memref<2x32x256xf32, #tpu.memory_space<vmem>>, vector<2x32x256xf32>
    %cst = arith.constant dense<0.000000e+00> : vector<2x32xf32>
    %1 = vector.multi_reduction <add>, %0, %cst [2] : vector<2x32x256xf32> to vector<2x32xf32>
    %cst_2 = arith.constant 2.560000e+02 : f32
    %2 = vector.broadcast %cst_2 : f32 to vector<2x32xf32>
    %3 = arith.divf %1, %2 : vector<2x32xf32>
    %c0_3 = arith.constant 0 : index
    %c0_4 = arith.constant 0 : index
    %4 = vector.load %arg2[%c0_3, %c0_4] : memref<32x2xf32, #tpu.memory_space<vmem>>, vector<32x2xf32>
    %cst_5 = arith.constant dense<0.000000e+00> : vector<2x2xf32>
    %5 = tpu.matmul %3, %4, %cst_5 {dimension_numbers = #tpu.dot_dimension_numbers<[1], [0], [0], [1], [0, 0, 1, 1], [], []>} : vector<2x32xf32>, vector<32x2xf32>, vector<2x2xf32> -> vector<2x2xf32>
    %c0_6 = arith.constant 0 : index
    %c0_7 = arith.constant 0 : index
    %6 = vector.load %arg3[%c0_6, %c0_7] : memref<1x2xf32, #tpu.memory_space<vmem>>, vector<1x2xf32>
    %7 = vector.broadcast %6 : vector<1x2xf32> to vector<2x2xf32>
    %8 = arith.addf %5, %7 : vector<2x2xf32>
    %cst_8 = arith.constant 0.000000e+00 : f32
    %9 = vector.broadcast %cst_8 : f32 to vector<2x2xf32>
    %10 = arith.maximumf %8, %9 : vector<2x2xf32>
    %c0_9 = arith.constant 0 : index
    %c0_10 = arith.constant 0 : index
    %11 = vector.load %arg4[%c0_9, %c0_10] : memref<2x32xf32, #tpu.memory_space<vmem>>, vector<2x32xf32>
    %cst_11 = arith.constant dense<0.000000e+00> : vector<2x32xf32>
    %12 = tpu.matmul %10, %11, %cst_11 {dimension_numbers = #tpu.dot_dimension_numbers<[1], [0], [0], [1], [0, 0, 1, 1], [], []>} : vector<2x2xf32>, vector<2x32xf32>, vector<2x32xf32> -> vector<2x32xf32>
    %c0_12 = arith.constant 0 : index
    %c0_13 = arith.constant 0 : index
    %13 = vector.load %arg5[%c0_12, %c0_13] : memref<1x32xf32, #tpu.memory_space<vmem>>, vector<1x32xf32>
    %14 = vector.broadcast %13 : vector<1x32xf32> to vector<2x32xf32>
    %15 = arith.addf %12, %14 : vector<2x32xf32>
    %16 = arith.negf %15 : vector<2x32xf32>
    %17 = math.exp %16 : vector<2x32xf32>
    %cst_14 = arith.constant 1.000000e+00 : f32
    %18 = vector.broadcast %cst_14 : f32 to vector<2x32xf32>
    %19 = arith.addf %18, %17 : vector<2x32xf32>
    %20 = arith.divf %18, %19 : vector<2x32xf32>
    %cst_15 = arith.constant 1.000000e+00 : f32
    %21 = vector.broadcast %cst_15 : f32 to vector<2x32xf32>
    %22 = arith.addf %21, %20 : vector<2x32xf32>
    %23 = vector.shape_cast %22 : vector<2x32xf32> to vector<2x32x1xf32>
    %24 = vector.broadcast %23 : vector<2x32x1xf32> to vector<2x32x256xf32>
    %25 = arith.mulf %0, %24 : vector<2x32x256xf32>
    %c0_16 = arith.constant 0 : index
    %c0_17 = arith.constant 0 : index
    %c0_18 = arith.constant 0 : index
    %26 = vector.load %arg6[%c0_16, %c0_17, %c0_18] : memref<2x32x256xf32, #tpu.memory_space<vmem>>, vector<2x32x256xf32>
    tpu.vector_store %arg6[%c0_16, %c0_17, %c0_18], %25 {strides = array<i32>} : memref<2x32x256xf32, #tpu.memory_space<vmem>>, vector<2x32x256xf32>,
    return
  }
  func.func @transform_0(%arg0: i32) -> (i32, i32, i32) {
    %c0_i32 = arith.constant 0 : i32
    %c0_i32_0 = arith.constant 0 : i32
    %c0_i32_1 = arith.constant 0 : i32
    return %arg0, %c0_i32, %c0_i32_0 : i32, i32, i32
  }
  func.func @transform_1(%arg0: i32) -> (i32, i32) {
    %c0_i32 = arith.constant 0 : i32
    %c0_i32_0 = arith.constant 0 : i32
    %c0_i32_1 = arith.constant 0 : i32
    return %c0_i32, %c0_i32_0 : i32, i32
  }
  func.func @transform_2(%arg0: i32) -> (i32, i32) {
    %c0_i32 = arith.constant 0 : i32
    %c0_i32_0 = arith.constant 0 : i32
    %c0_i32_1 = arith.constant 0 : i32
    return %c0_i32, %c0_i32_0 : i32, i32
  }
  func.func @transform_3(%arg0: i32) -> (i32, i32) {
    %c0_i32 = arith.constant 0 : i32
    %c0_i32_0 = arith.constant 0 : i32
    %c0_i32_1 = arith.constant 0 : i32
    return %c0_i32, %c0_i32_0 : i32, i32
  }
  func.func @transform_4(%arg0: i32) -> (i32, i32) {
    %c0_i32 = arith.constant 0 : i32
    %c0_i32_0 = arith.constant 0 : i32
    %c0_i32_1 = arith.constant 0 : i32
    return %c0_i32, %c0_i32_0 : i32, i32
  }
  func.func @transform_5(%arg0: i32) -> (i32, i32, i32) {
    %c0_i32 = arith.constant 0 : i32
    %c0_i32_0 = arith.constant 0 : i32
    %c0_i32_1 = arith.constant 0 : i32
    return %arg0, %c0_i32, %c0_i32_0 : i32, i32, i32
  }
}

module attributes {stable_mosaic.version = 11 : i64} {
  func.func @_se_block_kernel(%arg0: i32, %arg1: memref<2x64x64xf32, #tpu.memory_space<vmem>>, %arg2: memref<64x4xf32, #tpu.memory_space<vmem>>, %arg3: memref<1x4xf32, #tpu.memory_space<vmem>>, %arg4: memref<4x64xf32, #tpu.memory_space<vmem>>, %arg5: memref<1x64xf32, #tpu.memory_space<vmem>>, %arg6: memref<2x64x64xf32, #tpu.memory_space<vmem>>) attributes {dimension_semantics = [#tpu.dimension_semantics<parallel>], iteration_bounds = array<i64: 1>, scalar_prefetch = 0 : i64, scratch_operands = 0 : i64, tpu.core_type = #tpu.core_type<tc>, window_params = [{transform_indices = @transform_0, window_bounds = array<i64: 2, 64, 64>}, {pipeline_mode = #tpu.pipeline_mode<synchronous>, transform_indices = @transform_1, window_bounds = array<i64: 64, 4>}, {pipeline_mode = #tpu.pipeline_mode<synchronous>, transform_indices = @transform_2, window_bounds = array<i64: 1, 4>}, {pipeline_mode = #tpu.pipeline_mode<synchronous>, transform_indices = @transform_3, window_bounds = array<i64: 4, 64>}, {pipeline_mode = #tpu.pipeline_mode<synchronous>, transform_indices = @transform_4, window_bounds = array<i64: 1, 64>}, {transform_indices = @transform_5, window_bounds = array<i64: 2, 64, 64>}]} {
    %c0 = arith.constant 0 : index
    %c0_0 = arith.constant 0 : index
    %c0_1 = arith.constant 0 : index
    %0 = vector.load %arg1[%c0, %c0_0, %c0_1] : memref<2x64x64xf32, #tpu.memory_space<vmem>>, vector<2x64x64xf32>
    %cst = arith.constant dense<0.000000e+00> : vector<2x64xf32>
    %1 = vector.multi_reduction <add>, %0, %cst [2] : vector<2x64x64xf32> to vector<2x64xf32>
    %cst_2 = arith.constant 6.400000e+01 : f32
    %2 = vector.broadcast %cst_2 : f32 to vector<2x64xf32>
    %3 = arith.divf %1, %2 : vector<2x64xf32>
    %c0_3 = arith.constant 0 : index
    %c0_4 = arith.constant 0 : index
    %4 = vector.load %arg2[%c0_3, %c0_4] : memref<64x4xf32, #tpu.memory_space<vmem>>, vector<64x4xf32>
    %cst_5 = arith.constant dense<0.000000e+00> : vector<2x4xf32>
    %5 = tpu.matmul %3, %4, %cst_5 {dimension_numbers = #tpu.dot_dimension_numbers<[1], [0], [0], [1], [0, 0, 1, 1], [], []>} : vector<2x64xf32>, vector<64x4xf32>, vector<2x4xf32> -> vector<2x4xf32>
    %c0_6 = arith.constant 0 : index
    %c0_7 = arith.constant 0 : index
    %6 = vector.load %arg3[%c0_6, %c0_7] : memref<1x4xf32, #tpu.memory_space<vmem>>, vector<1x4xf32>
    %7 = vector.broadcast %6 : vector<1x4xf32> to vector<2x4xf32>
    %8 = arith.addf %5, %7 : vector<2x4xf32>
    %cst_8 = arith.constant 0.000000e+00 : f32
    %9 = vector.broadcast %cst_8 : f32 to vector<2x4xf32>
    %10 = arith.maximumf %8, %9 : vector<2x4xf32>
    %c0_9 = arith.constant 0 : index
    %c0_10 = arith.constant 0 : index
    %11 = vector.load %arg4[%c0_9, %c0_10] : memref<4x64xf32, #tpu.memory_space<vmem>>, vector<4x64xf32>
    %cst_11 = arith.constant dense<0.000000e+00> : vector<2x64xf32>
    %12 = tpu.matmul %10, %11, %cst_11 {dimension_numbers = #tpu.dot_dimension_numbers<[1], [0], [0], [1], [0, 0, 1, 1], [], []>} : vector<2x4xf32>, vector<4x64xf32>, vector<2x64xf32> -> vector<2x64xf32>
    %c0_12 = arith.constant 0 : index
    %c0_13 = arith.constant 0 : index
    %13 = vector.load %arg5[%c0_12, %c0_13] : memref<1x64xf32, #tpu.memory_space<vmem>>, vector<1x64xf32>
    %14 = vector.broadcast %13 : vector<1x64xf32> to vector<2x64xf32>
    %15 = arith.addf %12, %14 : vector<2x64xf32>
    %16 = arith.negf %15 : vector<2x64xf32>
    %17 = math.exp %16 : vector<2x64xf32>
    %cst_14 = arith.constant 1.000000e+00 : f32
    %18 = vector.broadcast %cst_14 : f32 to vector<2x64xf32>
    %19 = arith.addf %18, %17 : vector<2x64xf32>
    %20 = arith.divf %18, %19 : vector<2x64xf32>
    %cst_15 = arith.constant 1.000000e+00 : f32
    %21 = vector.broadcast %cst_15 : f32 to vector<2x64xf32>
    %22 = arith.addf %21, %20 : vector<2x64xf32>
    %23 = vector.shape_cast %22 : vector<2x64xf32> to vector<2x64x1xf32>
    %24 = vector.broadcast %23 : vector<2x64x1xf32> to vector<2x64x64xf32>
    %25 = arith.mulf %0, %24 : vector<2x64x64xf32>
    %c0_16 = arith.constant 0 : index
    %c0_17 = arith.constant 0 : index
    %c0_18 = arith.constant 0 : index
    %26 = vector.load %arg6[%c0_16, %c0_17, %c0_18] : memref<2x64x64xf32, #tpu.memory_space<vmem>>, vector<2x64x64xf32>
    tpu.vector_store %arg6[%c0_16, %c0_17, %c0_18], %25 {strides = array<i32>} : memref<2x64x64xf32, #tpu.memory_space<vmem>>, vector<2x64x64xf32>,
    return
  }
  func.func @transform_0(%arg0: i32) -> (i32, i32, i32) {
    %c0_i32 = arith.constant 0 : i32
    %c0_i32_0 = arith.constant 0 : i32
    %c0_i32_1 = arith.constant 0 : i32
    return %arg0, %c0_i32, %c0_i32_0 : i32, i32, i32
  }
  func.func @transform_1(%arg0: i32) -> (i32, i32) {
    %c0_i32 = arith.constant 0 : i32
    %c0_i32_0 = arith.constant 0 : i32
    %c0_i32_1 = arith.constant 0 : i32
    return %c0_i32, %c0_i32_0 : i32, i32
  }
  func.func @transform_2(%arg0: i32) -> (i32, i32) {
    %c0_i32 = arith.constant 0 : i32
    %c0_i32_0 = arith.constant 0 : i32
    %c0_i32_1 = arith.constant 0 : i32
    return %c0_i32, %c0_i32_0 : i32, i32
  }
  func.func @transform_3(%arg0: i32) -> (i32, i32) {
    %c0_i32 = arith.constant 0 : i32
    %c0_i32_0 = arith.constant 0 : i32
    %c0_i32_1 = arith.constant 0 : i32
    return %c0_i32, %c0_i32_0 : i32, i32
  }
  func.func @transform_4(%arg0: i32) -> (i32, i32) {
    %c0_i32 = arith.constant 0 : i32
    %c0_i32_0 = arith.constant 0 : i32
    %c0_i32_1 = arith.constant 0 : i32
    return %c0_i32, %c0_i32_0 : i32, i32
  }
  func.func @transform_5(%arg0: i32) -> (i32, i32, i32) {
    %c0_i32 = arith.constant 0 : i32
    %c0_i32_0 = arith.constant 0 : i32
    %c0_i32_1 = arith.constant 0 : i32
    return %arg0, %c0_i32, %c0_i32_0 : i32, i32, i32
  }
}

</mosaic_0001>

<llo_original>
// kernel: _lambda_.7
$region0: #{_lambda_.7}
  #allocation0 [shape = 'u32[]', space=smem, size = 0x4, offset = 0x4, fixed_abs, tag = 'smem constant byte address 0x4 - core index']
  #allocation1 [shape = 'u32[144,128]{1,0:T(1,128)}', space=vmem, size = 0x12000, scoped, tag = 'internal scratch']
  %s0 = inlined_call_operand.vmem [shape: f32[2,256,4], index: 0, kind: input, shape index: {}]
  %s1 = inlined_call_operand.vmem [shape: f32[256,16], index: 1, kind: input, shape index: {}]
  %s2 = inlined_call_operand.vmem [shape: f32[1,16], index: 2, kind: input, shape index: {}]
  %s3 = inlined_call_operand.vmem [shape: f32[16,256], index: 3, kind: input, shape index: {}]
  %s4 = inlined_call_operand.vmem [shape: f32[1,256], index: 4, kind: input, shape index: {}]
  %s5 = inlined_call_operand.vmem [shape: f32[2,256,4], index: 5, kind: output, shape index: {}]
  %s6 = sld [smem:[#allocation0]]
  $region30: #{_lambda_.7} parent=0
    _
  %s8 = ssub.s32 1, %s6
  %s9 = scalar_select 0, %s8, %s6
  // Predicated region
  $region2: #{_lambda_.7} parent=0 // pred_check
    _
  $region3: #{_lambda_.7} parent=0 // pred_check_branch
    %11 = sbr.rel (0) target = $region5
  $region4: #{_lambda_.7} parent=0 // pred_region
    _
  $region5: #{_lambda_.7} parent=0 // pred_fallthru
    _
  // Predicated region
  $region6: #{_lambda_.7} parent=0 // pred_check
    _
  $region7: #{_lambda_.7} parent=0 // pred_check_branch
    %13 = sbr.rel (0) target = $region9
  $region8: #{_lambda_.7} parent=0 // pred_region
    _
  $region9: #{_lambda_.7} parent=0 // pred_fallthru
    _
  // Predicated region
  $region10: #{_lambda_.7} parent=0 // pred_check
    _
  $region11: #{_lambda_.7} parent=0 // pred_check_branch
    %15 = sbr.rel (0) target = $region13
  $region12: #{_lambda_.7} parent=0 // pred_region
    _
  $region13: #{_lambda_.7} parent=0 // pred_fallthru
    _
  // Predicated region
  $region14: #{_lambda_.7} parent=0 // pred_check
    _
  $region15: #{_lambda_.7} parent=0 // pred_check_branch
    %17 = sbr.rel (0) target = $region17
  $region16: #{_lambda_.7} parent=0 // pred_region
    _
  $region17: #{_lambda_.7} parent=0 // pred_fallthru
    _
  // Predicated region
  $region18: #{_lambda_.7} parent=0 // pred_check
    _
  $region19: #{_lambda_.7} parent=0 // pred_check_branch
    %19 = sbr.rel (0) target = $region21
  $region20: #{_lambda_.7} parent=0 // pred_region
    _
  $region21: #{_lambda_.7} parent=0 // pred_fallthru
    _
  %v20 = vld [vmem:[%s0] sm:$0xff]
  %v21 = vld [vmem:[%s0 + $0x8] sm:$0xff]
  %v22 = vld [vmem:[%s0 + $0x10] sm:$0xff]
  %v23 = vld [vmem:[%s0 + $0x18] sm:$0xff]
  %v24 = vld [vmem:[%s0 + $0x20] sm:$0xff]
  %v25 = vld [vmem:[%s0 + $0x28] sm:$0xff]
  %v26 = vld [vmem:[%s0 + $0x30] sm:$0xff]
  %v27 = vld [vmem:[%s0 + $0x38] sm:$0xff]
  %v28 = vld [vmem:[%s0 + $0x40] sm:$0xff]
  %v29 = vld [vmem:[%s0 + $0x48] sm:$0xff]
  %v30 = vld [vmem:[%s0 + $0x50] sm:$0xff]
  %v31 = vld [vmem:[%s0 + $0x58] sm:$0xff]
  %v32 = vld [vmem:[%s0 + $0x60] sm:$0xff]
  %v33 = vld [vmem:[%s0 + $0x68] sm:$0xff]
  %v34 = vld [vmem:[%s0 + $0x70] sm:$0xff]
  %v35 = vld [vmem:[%s0 + $0x78] sm:$0xff]
  %v36 = vld [vmem:[%s0 + $0x80] sm:$0xff]
  %v37 = vld [vmem:[%s0 + $0x88] sm:$0xff]
  %v38 = vld [vmem:[%s0 + $0x90] sm:$0xff]
  %v39 = vld [vmem:[%s0 + $0x98] sm:$0xff]
  %v40 = vld [vmem:[%s0 + $0xa0] sm:$0xff]
  %v41 = vld [vmem:[%s0 + $0xa8] sm:$0xff]
  %v42 = vld [vmem:[%s0 + $0xb0] sm:$0xff]
  %v43 = vld [vmem:[%s0 + $0xb8] sm:$0xff]
  %v44 = vld [vmem:[%s0 + $0xc0] sm:$0xff]
  %v45 = vld [vmem:[%s0 + $0xc8] sm:$0xff]
  %v46 = vld [vmem:[%s0 + $0xd0] sm:$0xff]
  %v47 = vld [vmem:[%s0 + $0xd8] sm:$0xff]
  %v48 = vld [vmem:[%s0 + $0xe0] sm:$0xff]
  %v49 = vld [vmem:[%s0 + $0xe8] sm:$0xff]
  %v50 = vld [vmem:[%s0 + $0xf0] sm:$0xff]
  %v51 = vld [vmem:[%s0 + $0xf8] sm:$0xff]
  %v52 = vld [vmem:[%s0 + $0x100] sm:$0xff]
  %v53 = vld [vmem:[%s0 + $0x108] sm:$0xff]
  %v54 = vld [vmem:[%s0 + $0x110] sm:$0xff]
  %v55 = vld [vmem:[%s0 + $0x118] sm:$0xff]
  %v56 = vld [vmem:[%s0 + $0x120] sm:$0xff]
  %v57 = vld [vmem:[%s0 + $0x128] sm:$0xff]
  %v58 = vld [vmem:[%s0 + $0x130] sm:$0xff]
  %v59 = vld [vmem:[%s0 + $0x138] sm:$0xff]
  %v60 = vld [vmem:[%s0 + $0x140] sm:$0xff]
  %v61 = vld [vmem:[%s0 + $0x148] sm:$0xff]
  %v62 = vld [vmem:[%s0 + $0x150] sm:$0xff]
  %v63 = vld [vmem:[%s0 + $0x158] sm:$0xff]
  %v64 = vld [vmem:[%s0 + $0x160] sm:$0xff]
  %v65 = vld [vmem:[%s0 + $0x168] sm:$0xff]
  %v66 = vld [vmem:[%s0 + $0x170] sm:$0xff]
  %v67 = vld [vmem:[%s0 + $0x178] sm:$0xff]
  %v68 = vld [vmem:[%s0 + $0x180] sm:$0xff]
  %v69 = vld [vmem:[%s0 + $0x188] sm:$0xff]
  %v70 = vld [vmem:[%s0 + $0x190] sm:$0xff]
  %v71 = vld [vmem:[%s0 + $0x198] sm:$0xff]
  %v72 = vld [vmem:[%s0 + $0x1a0] sm:$0xff]
  %v73 = vld [vmem:[%s0 + $0x1a8] sm:$0xff]
  %v74 = vld [vmem:[%s0 + $0x1b0] sm:$0xff]
  %v75 = vld [vmem:[%s0 + $0x1b8] sm:$0xff]
  %v76 = vld [vmem:[%s0 + $0x1c0] sm:$0xff]
  %v77 = vld [vmem:[%s0 + $0x1c8] sm:$0xff]
  %v78 = vld [vmem:[%s0 + $0x1d0] sm:$0xff]
  %v79 = vld [vmem:[%s0 + $0x1d8] sm:$0xff]
  %v80 = vld [vmem:[%s0 + $0x1e0] sm:$0xff]
  %v81 = vld [vmem:[%s0 + $0x1e8] sm:$0xff]
  %v82 = vld [vmem:[%s0 + $0x1f0] sm:$0xff]
  %v83 = vld [vmem:[%s0 + $0x1f8] sm:$0xff]
  %vm84 = vcmask 31744
  %v85 = vsel %vm84, %v20, 0.0
  %86 = vadd.xlane.f32.xlu0 %v85
  %v87 = vpop.xlane.xlu0 %86
  %v88 = vsel %vm84, %v21, 0.0
  %89 = vadd.xlane.f32.xlu0 %v88
  %v90 = vpop.xlane.xlu0 %89
  %v91 = vsel %vm84, %v22, 0.0
  %92 = vadd.xlane.f32.xlu0 %v91
  %v93 = vpop.xlane.xlu0 %92
  %v94 = vsel %vm84, %v23, 0.0
  %95 = vadd.xlane.f32.xlu0 %v94
  %v96 = vpop.xlane.xlu0 %95
  %v97 = vsel %vm84, %v24, 0.0
  %98 = vadd.xlane.f32.xlu0 %v97
  %v99 = vpop.xlane.xlu0 %98
  %v100 = vsel %vm84, %v25, 0.0
  %101 = vadd.xlane.f32.xlu0 %v100
  %v102 = vpop.xlane.xlu0 %101
  %v103 = vsel %vm84, %v26, 0.0
  %104 = vadd.xlane.f32.xlu0 %v103
  %v105 = vpop.xlane.xlu0 %104
  %v106 = vsel %vm84, %v27, 0.0
  %107 = vadd.xlane.f32.xlu0 %v106
  %v108 = vpop.xlane.xlu0 %107
  %v109 = vsel %vm84, %v28, 0.0
  %110 = vadd.xlane.f32.xlu0 %v109
  %v111 = vpop.xlane.xlu0 %110
  %v112 = vsel %vm84, %v29, 0.0
  %113 = vadd.xlane.f32.xlu0 %v112
  %v114 = vpop.xlane.xlu0 %113
  %v115 = vsel %vm84, %v30, 0.0
  %116 = vadd.xlane.f32.xlu0 %v115
  %v117 = vpop.xlane.xlu0 %116
  %v118 = vsel %vm84, %v31, 0.0
  %119 = vadd.xlane.f32.xlu0 %v118
  %v120 = vpop.xlane.xlu0 %119
  %v121 = vsel %vm84, %v32, 0.0
  %122 = vadd.xlane.f32.xlu0 %v121
  %v123 = vpop.xlane.xlu0 %122
  %v124 = vsel %vm84, %v33, 0.0
  %125 = vadd.xlane.f32.xlu0 %v124
  %v126 = vpop.xlane.xlu0 %125
  %v127 = vsel %vm84, %v34, 0.0
  %128 = vadd.xlane.f32.xlu0 %v127
  %v129 = vpop.xlane.xlu0 %128
  %v130 = vsel %vm84, %v35, 0.0
  %131 = vadd.xlane.f32.xlu0 %v130
  %v132 = vpop.xlane.xlu0 %131
  %v133 = vsel %vm84, %v36, 0.0
  %134 = vadd.xlane.f32.xlu0 %v133
  %v135 = vpop.xlane.xlu0 %134
  %v136 = vsel %vm84, %v37, 0.0
  %137 = vadd.xlane.f32.xlu0 %v136
  %v138 = vpop.xlane.xlu0 %137
  %v139 = vsel %vm84, %v38, 0.0
  %140 = vadd.xlane.f32.xlu0 %v139
  %v141 = vpop.xlane.xlu0 %140
  %v142 = vsel %vm84, %v39, 0.0
  %143 = vadd.xlane.f32.xlu0 %v142
  %v144 = vpop.xlane.xlu0 %143
  %v145 = vsel %vm84, %v40, 0.0
  %146 = vadd.xlane.f32.xlu0 %v145
  %v147 = vpop.xlane.xlu0 %146
  %v148 = vsel %vm84, %v41, 0.0
  %149 = vadd.xlane.f32.xlu0 %v148
  %v150 = vpop.xlane.xlu0 %149
  %v151 = vsel %vm84, %v42, 0.0
  %152 = vadd.xlane.f32.xlu0 %v151
  %v153 = vpop.xlane.xlu0 %152
  %v154 = vsel %vm84, %v43, 0.0
  %155 = vadd.xlane.f32.xlu0 %v154
  %v156 = vpop.xlane.xlu0 %155
  %v157 = vsel %vm84, %v44, 0.0
  %158 = vadd.xlane.f32.xlu0 %v157
  %v159 = vpop.xlane.xlu0 %158
  %v160 = vsel %vm84, %v45, 0.0
  %161 = vadd.xlane.f32.xlu0 %v160
  %v162 = vpop.xlane.xlu0 %161
  %v163 = vsel %vm84, %v46, 0.0
  %164 = vadd.xlane.f32.xlu0 %v163
  %v165 = vpop.xlane.xlu0 %164
  %v166 = vsel %vm84, %v47, 0.0
  %167 = vadd.xlane.f32.xlu0 %v166
  %v168 = vpop.xlane.xlu0 %167
  %v169 = vsel %vm84, %v48, 0.0
  %170 = vadd.xlane.f32.xlu0 %v169
  %v171 = vpop.xlane.xlu0 %170
  %v172 = vsel %vm84, %v49, 0.0
  %173 = vadd.xlane.f32.xlu0 %v172
  %v174 = vpop.xlane.xlu0 %173
  %v175 = vsel %vm84, %v50, 0.0
  %176 = vadd.xlane.f32.xlu0 %v175
  %v177 = vpop.xlane.xlu0 %176
  %v178 = vsel %vm84, %v51, 0.0
  %179 = vadd.xlane.f32.xlu0 %v178
  %v180 = vpop.xlane.xlu0 %179
  %v181 = vsel %vm84, %v52, 0.0
  %182 = vadd.xlane.f32.xlu0 %v181
  %v183 = vpop.xlane.xlu0 %182
  %v184 = vsel %vm84, %v53, 0.0
  %185 = vadd.xlane.f32.xlu0 %v184
  %v186 = vpop.xlane.xlu0 %185
  %v187 = vsel %vm84, %v54, 0.0
  %188 = vadd.xlane.f32.xlu0 %v187
  %v189 = vpop.xlane.xlu0 %188
  %v190 = vsel %vm84, %v55, 0.0
  %191 = vadd.xlane.f32.xlu0 %v190
  %v192 = vpop.xlane.xlu0 %191
  %v193 = vsel %vm84, %v56, 0.0
  %194 = vadd.xlane.f32.xlu0 %v193
  %v195 = vpop.xlane.xlu0 %194
  %v196 = vsel %vm84, %v57, 0.0
  %197 = vadd.xlane.f32.xlu0 %v196
  %v198 = vpop.xlane.xlu0 %197
  %v199 = vsel %vm84, %v58, 0.0
  %200 = vadd.xlane.f32.xlu0 %v199
  %v201 = vpop.xlane.xlu0 %200
  %v202 = vsel %vm84, %v59, 0.0
  %203 = vadd.xlane.f32.xlu0 %v202
  %v204 = vpop.xlane.xlu0 %203
  %v205 = vsel %vm84, %v60, 0.0
  %206 = vadd.xlane.f32.xlu0 %v205
  %v207 = vpop.xlane.xlu0 %206
  %v208 = vsel %vm84, %v61, 0.0
  %209 = vadd.xlane.f32.xlu0 %v208
  %v210 = vpop.xlane.xlu0 %209
  %v211 = vsel %vm84, %v62, 0.0
  %212 = vadd.xlane.f32.xlu0 %v211
  %v213 = vpop.xlane.xlu0 %212
  %v214 = vsel %vm84, %v63, 0.0
  %215 = vadd.xlane.f32.xlu0 %v214
  %v216 = vpop.xlane.xlu0 %215
  %v217 = vsel %vm84, %v64, 0.0
  %218 = vadd.xlane.f32.xlu0 %v217
  %v219 = vpop.xlane.xlu0 %218
  %v220 = vsel %vm84, %v65, 0.0
  %221 = vadd.xlane.f32.xlu0 %v220
  %v222 = vpop.xlane.xlu0 %221
  %v223 = vsel %vm84, %v66, 0.0
  %224 = vadd.xlane.f32.xlu0 %v223
  %v225 = vpop.xlane.xlu0 %224
  %v226 = vsel %vm84, %v67, 0.0
  %227 = vadd.xlane.f32.xlu0 %v226
  %v228 = vpop.xlane.xlu0 %227
  %v229 = vsel %vm84, %v68, 0.0
  %230 = vadd.xlane.f32.xlu0 %v229
  %v231 = vpop.xlane.xlu0 %230
  %v232 = vsel %vm84, %v69, 0.0
  %233 = vadd.xlane.f32.xlu0 %v232
  %v234 = vpop.xlane.xlu0 %233
  %v235 = vsel %vm84, %v70, 0.0
  %236 = vadd.xlane.f32.xlu0 %v235
  %v237 = vpop.xlane.xlu0 %236
  %v238 = vsel %vm84, %v71, 0.0
  %239 = vadd.xlane.f32.xlu0 %v238
  %v240 = vpop.xlane.xlu0 %239
  %v241 = vsel %vm84, %v72, 0.0
  %242 = vadd.xlane.f32.xlu0 %v241
  %v243 = vpop.xlane.xlu0 %242
  %v244 = vsel %vm84, %v73, 0.0
  %245 = vadd.xlane.f32.xlu0 %v244
  %v246 = vpop.xlane.xlu0 %245
  %v247 = vsel %vm84, %v74, 0.0
  %248 = vadd.xlane.f32.xlu0 %v247
  %v249 = vpop.xlane.xlu0 %248
  %v250 = vsel %vm84, %v75, 0.0
  %251 = vadd.xlane.f32.xlu0 %v250
  %v252 = vpop.xlane.xlu0 %251
  %v253 = vsel %vm84, %v76, 0.0
  %254 = vadd.xlane.f32.xlu0 %v253
  %v255 = vpop.xlane.xlu0 %254
  %v256 = vsel %vm84, %v77, 0.0
  %257 = vadd.xlane.f32.xlu0 %v256
  %v258 = vpop.xlane.xlu0 %257
  %v259 = vsel %vm84, %v78, 0.0
  %260 = vadd.xlane.f32.xlu0 %v259
  %v261 = vpop.xlane.xlu0 %260
  %v262 = vsel %vm84, %v79, 0.0
  %263 = vadd.xlane.f32.xlu0 %v262
  %v264 = vpop.xlane.xlu0 %263
  %v265 = vsel %vm84, %v80, 0.0
  %266 = vadd.xlane.f32.xlu0 %v265
  %v267 = vpop.xlane.xlu0 %266
  %v268 = vsel %vm84, %v81, 0.0
  %269 = vadd.xlane.f32.xlu0 %v268
  %v270 = vpop.xlane.xlu0 %269
  %v271 = vsel %vm84, %v82, 0.0
  %272 = vadd.xlane.f32.xlu0 %v271
  %v273 = vpop.xlane.xlu0 %272
  %v274 = vsel %vm84, %v83, 0.0
  %275 = vadd.xlane.f32.xlu0 %v274
  %v276 = vpop.xlane.xlu0 %275
  %v277 = vrcp.pop 4.0
  %v278 = vmul.f32 %v87, %v277
  %v279 = vmul.f32 %v90, %v277
  %v280 = vmul.f32 %v93, %v277
  %v281 = vmul.f32 %v96, %v277
  %v282 = vmul.f32 %v99, %v277
  %v283 = vmul.f32 %v102, %v277
  %v284 = vmul.f32 %v105, %v277
  %v285 = vmul.f32 %v108, %v277
  %v286 = vmul.f32 %v111, %v277
  %v287 = vmul.f32 %v114, %v277
  %v288 = vmul.f32 %v117, %v277
  %v289 = vmul.f32 %v120, %v277
  %v290 = vmul.f32 %v123, %v277
  %v291 = vmul.f32 %v126, %v277
  %v292 = vmul.f32 %v129, %v277
  %v293 = vmul.f32 %v132, %v277
  %v294 = vmul.f32 %v135, %v277
  %v295 = vmul.f32 %v138, %v277
  %v296 = vmul.f32 %v141, %v277
  %v297 = vmul.f32 %v144, %v277
  %v298 = vmul.f32 %v147, %v277
  %v299 = vmul.f32 %v150, %v277
  %v300 = vmul.f32 %v153, %v277
  %v301 = vmul.f32 %v156, %v277
  %v302 = vmul.f32 %v159, %v277
  %v303 = vmul.f32 %v162, %v277
  %v304 = vmul.f32 %v165, %v277
  %v305 = vmul.f32 %v168, %v277
  %v306 = vmul.f32 %v171, %v277
  %v307 = vmul.f32 %v174, %v277
  %v308 = vmul.f32 %v177, %v277
  %v309 = vmul.f32 %v180, %v277
  %v310 = vmul.f32 %v183, %v277
  %v311 = vmul.f32 %v186, %v277
  %v312 = vmul.f32 %v189, %v277
  %v313 = vmul.f32 %v192, %v277
  %v314 = vmul.f32 %v195, %v277
  %v315 = vmul.f32 %v198, %v277
  %v316 = vmul.f32 %v201, %v277
  %v317 = vmul.f32 %v204, %v277
  %v318 = vmul.f32 %v207, %v277
  %v319 = vmul.f32 %v210, %v277
  %v320 = vmul.f32 %v213, %v277
  %v321 = vmul.f32 %v216, %v277
  %v322 = vmul.f32 %v219, %v277
  %v323 = vmul.f32 %v222, %v277
  %v324 = vmul.f32 %v225, %v277
  %v325 = vmul.f32 %v228, %v277
  %v326 = vmul.f32 %v231, %v277
  %v327 = vmul.f32 %v234, %v277
  %v328 = vmul.f32 %v237, %v277
  %v329 = vmul.f32 %v240, %v277
  %v330 = vmul.f32 %v243, %v277
  %v331 = vmul.f32 %v246, %v277
  %v332 = vmul.f32 %v249, %v277
  %v333 = vmul.f32 %v252, %v277
  %v334 = vmul.f32 %v255, %v277
  %v335 = vmul.f32 %v258, %v277
  %v336 = vmul.f32 %v261, %v277
  %v337 = vmul.f32 %v264, %v277
  %v338 = vmul.f32 %v267, %v277
  %v339 = vmul.f32 %v270, %v277
  %v340 = vmul.f32 %v273, %v277
  %v341 = vmul.f32 %v276, %v277
  %v342 = vld [vmem:[%s1] sm:$0xff]
  %v343 = vld [vmem:[%s1 + $0x8] sm:$0xff]
  %v344 = vld [vmem:[%s1 + $0x10] sm:$0xff]
  %v345 = vld [vmem:[%s1 + $0x18] sm:$0xff]
  %v346 = vld [vmem:[%s1 + $0x20] sm:$0xff]
  %v347 = vld [vmem:[%s1 + $0x28] sm:$0xff]
  %v348 = vld [vmem:[%s1 + $0x30] sm:$0xff]
  %v349 = vld [vmem:[%s1 + $0x38] sm:$0xff]
  %v350 = vld [vmem:[%s1 + $0x40] sm:$0xff]
  %v351 = vld [vmem:[%s1 + $0x48] sm:$0xff]
  %v352 = vld [vmem:[%s1 + $0x50] sm:$0xff]
  %v353 = vld [vmem:[%s1 + $0x58] sm:$0xff]
  %v354 = vld [vmem:[%s1 + $0x60] sm:$0xff]
  %v355 = vld [vmem:[%s1 + $0x68] sm:$0xff]
  %v356 = vld [vmem:[%s1 + $0x70] sm:$0xff]
  %v357 = vld [vmem:[%s1 + $0x78] sm:$0xff]
  %v358 = vld [vmem:[%s1 + $0x80] sm:$0xff]
  %v359 = vld [vmem:[%s1 + $0x88] sm:$0xff]
  %v360 = vld [vmem:[%s1 + $0x90] sm:$0xff]
  %v361 = vld [vmem:[%s1 + $0x98] sm:$0xff]
  %v362 = vld [vmem:[%s1 + $0xa0] sm:$0xff]
  %v363 = vld [vmem:[%s1 + $0xa8] sm:$0xff]
  %v364 = vld [vmem:[%s1 + $0xb0] sm:$0xff]
  %v365 = vld [vmem:[%s1 + $0xb8] sm:$0xff]
  %v366 = vld [vmem:[%s1 + $0xc0] sm:$0xff]
  %v367 = vld [vmem:[%s1 + $0xc8] sm:$0xff]
  %v368 = vld [vmem:[%s1 + $0xd0] sm:$0xff]
  %v369 = vld [vmem:[%s1 + $0xd8] sm:$0xff]
  %v370 = vld [vmem:[%s1 + $0xe0] sm:$0xff]
  %v371 = vld [vmem:[%s1 + $0xe8] sm:$0xff]
  %v372 = vld [vmem:[%s1 + $0xf0] sm:$0xff]
  %v373 = vld [vmem:[%s1 + $0xf8] sm:$0xff]
  %v374 = vld [vmem:[%s2] sm:$0x1]
  %v376 = vlaneseq
  %v377 = vshrl.u32 %v376, 7
  %v378 = vsub.s32 0, %v377
  %v379 = vrot.slane %v374, %v378
  %v445 = vlaneseq
  %v446 = vand.u32 %v445, 127
  %v447 = vlaneseq
  %v448 = vshrl.u32 %v447, 7
  %v449 = vsub.s32 %v446, %v448
  %v450 = vrot.slane %v278, %v449
  %v451 = vadd.s32 %v446, 4294967288
  %v452 = vlaneseq
  %v453 = vshrl.u32 %v452, 7
  %v454 = vsub.s32 %v451, %v453
  %v455 = vrot.slane %v279, %v454
  %vm456 = vcmask 130112
  %v457 = vsel %vm456, %v455, %v450
  %v458 = vadd.s32 %v446, 4294967280
  %v459 = vlaneseq
  %v460 = vshrl.u32 %v459, 7
  %v461 = vsub.s32 %v458, %v460
  %v462 = vrot.slane %v280, %v461
  %vm463 = vcmask 195712
  %v464 = vsel %vm463, %v462, %v457
  %v465 = vadd.s32 %v446, 4294967272
  %v466 = vlaneseq
  %v467 = vshrl.u32 %v466, 7
  %v468 = vsub.s32 %v465, %v467
  %v469 = vrot.slane %v281, %v468
  %vm470 = vcmask 261312
  %v471 = vsel %vm470, %v469, %v464
  %v472 = vadd.s32 %v446, 4294967264
  %v473 = vlaneseq
  %v474 = vshrl.u32 %v473, 7
  %v475 = vsub.s32 %v472, %v474
  %v476 = vrot.slane %v282, %v475
  %vm477 = vcmask 326912
  %v478 = vsel %vm477, %v476, %v471
  %v479 = vadd.s32 %v446, 4294967256
  %v480 = vlaneseq
  %v481 = vshrl.u32 %v480, 7
  %v482 = vsub.s32 %v479, %v481
  %v483 = vrot.slane %v283, %v482
  %vm484 = vcmask 392512
  %v485 = vsel %vm484, %v483, %v478
  %v486 = vadd.s32 %v446, 4294967248
  %v487 = vlaneseq
  %v488 = vshrl.u32 %v487, 7
  %v489 = vsub.s32 %v486, %v488
  %v490 = vrot.slane %v284, %v489
  %vm491 = vcmask 458112
  %v492 = vsel %vm491, %v490, %v485
  %v493 = vadd.s32 %v446, 4294967240
  %v494 = vlaneseq
  %v495 = vshrl.u32 %v494, 7
  %v496 = vsub.s32 %v493, %v495
  %v497 = vrot.slane %v285, %v496
  %vm498 = vcmask 523712
  %v499 = vsel %vm498, %v497, %v492
  %v500 = vadd.s32 %v446, 4294967232
  %v501 = vlaneseq
  %v502 = vshrl.u32 %v501, 7
  %v503 = vsub.s32 %v500, %v502
  %v504 = vrot.slane %v286, %v503
  %vm505 = vcmask 589312
  %v506 = vsel %vm505, %v504, %v499
  %v507 = vadd.s32 %v446, 4294967224
  %v508 = vlaneseq
  %v509 = vshrl.u32 %v508, 7
  %v510 = vsub.s32 %v507, %v509
  %v511 = vrot.slane %v287, %v510
  %vm512 = vcmask 654912
  %v513 = vsel %vm512, %v511, %v506
  %v514 = vadd.s32 %v446, 4294967216
  %v515 = vlaneseq
  %v516 = vshrl.u32 %v515, 7
  %v517 = vsub.s32 %v514, %v516
  %v518 = vrot.slane %v288, %v517
  %vm519 = vcmask 720512
  %v520 = vsel %vm519, %v518, %v513
  %v521 = vadd.s32 %v446, 4294967208
  %v522 = vlaneseq
  %v523 = vshrl.u32 %v522, 7
  %v524 = vsub.s32 %v521, %v523
  %v525 = vrot.slane %v289, %v524
  %vm526 = vcmask 786112
  %v527 = vsel %vm526, %v525, %v520
  %v528 = vadd.s32 %v446, 4294967200
  %v529 = vlaneseq
  %v530 = vshrl.u32 %v529, 7
  %v531 = vsub.s32 %v528, %v530
  %v532 = vrot.slane %v290, %v531
  %vm533 = vcmask 851712
  %v534 = vsel %vm533, %v532, %v527
  %v535 = vadd.s32 %v446, 4294967192
  %v536 = vlaneseq
  %v537 = vshrl.u32 %v536, 7
  %v538 = vsub.s32 %v535, %v537
  %v539 = vrot.slane %v291, %v538
  %vm540 = vcmask 917312
  %v541 = vsel %vm540, %v539, %v534
  %v542 = vadd.s32 %v446, 4294967184
  %v543 = vlaneseq
  %v544 = vshrl.u32 %v543, 7
  %v545 = vsub.s32 %v542, %v544
  %v546 = vrot.slane %v292, %v545
  %vm547 = vcmask 982912
  %v548 = vsel %vm547, %v546, %v541
  %v549 = vadd.s32 %v446, 4294967176
  %v550 = vlaneseq
  %v551 = vshrl.u32 %v550, 7
  %v552 = vsub.s32 %v549, %v551
  %v553 = vrot.slane %v293, %v552
  %vm554 = vcmask 1048512
  %v555 = vsel %vm554, %v553, %v548
  %v556 = vlaneseq
  %v557 = vshrl.u32 %v556, 7
  %v558 = vsub.s32 %v446, %v557
  %v559 = vrot.slane %v294, %v558
  %v560 = vlaneseq
  %v561 = vshrl.u32 %v560, 7
  %v562 = vsub.s32 %v451, %v561
  %v563 = vrot.slane %v295, %v562
  %v564 = vsel %vm456, %v563, %v559
  %v565 = vlaneseq
  %v566 = vshrl.u32 %v565, 7
  %v567 = vsub.s32 %v458, %v566
  %v568 = vrot.slane %v296, %v567
  %v569 = vsel %vm463, %v568, %v564
  %v570 = vlaneseq
  %v571 = vshrl.u32 %v570, 7
  %v572 = vsub.s32 %v465, %v571
  %v573 = vrot.slane %v297, %v572
  %v574 = vsel %vm470, %v573, %v569
  %v575 = vlaneseq
  %v576 = vshrl.u32 %v575, 7
  %v577 = vsub.s32 %v472, %v576
  %v578 = vrot.slane %v298, %v577
  %v579 = vsel %vm477, %v578, %v574
  %v580 = vlaneseq
  %v581 = vshrl.u32 %v580, 7
  %v582 = vsub.s32 %v479, %v581
  %v583 = vrot.slane %v299, %v582
  %v584 = vsel %vm484, %v583, %v579
  %v585 = vlaneseq
  %v586 = vshrl.u32 %v585, 7
  %v587 = vsub.s32 %v486, %v586
  %v588 = vrot.slane %v300, %v587
  %v589 = vsel %vm491, %v588, %v584
  %v590 = vlaneseq
  %v591 = vshrl.u32 %v590, 7
  %v592 = vsub.s32 %v493, %v591
  %v593 = vrot.slane %v301, %v592
  %v594 = vsel %vm498, %v593, %v589
  %v595 = vlaneseq
  %v596 = vshrl.u32 %v595, 7
  %v597 = vsub.s32 %v500, %v596
  %v598 = vrot.slane %v302, %v597
  %v599 = vsel %vm505, %v598, %v594
  %v600 = vlaneseq
  %v601 = vshrl.u32 %v600, 7
  %v602 = vsub.s32 %v507, %v601
  %v603 = vrot.slane %v303, %v602
  %v604 = vsel %vm512, %v603, %v599
  %v605 = vlaneseq
  %v606 = vshrl.u32 %v605, 7
  %v607 = vsub.s32 %v514, %v606
  %v608 = vrot.slane %v304, %v607
  %v609 = vsel %vm519, %v608, %v604
  %v610 = vlaneseq
  %v611 = vshrl.u32 %v610, 7
  %v612 = vsub.s32 %v521, %v611
  %v613 = vrot.slane %v305, %v612
  %v614 = vsel %vm526, %v613, %v609
  %v615 = vlaneseq
  %v616 = vshrl.u32 %v615, 7
  %v617 = vsub.s32 %v528, %v616
  %v618 = vrot.slane %v306, %v617
  %v619 = vsel %vm533, %v618, %v614
  %v620 = vlaneseq
  %v621 = vshrl.u32 %v620, 7
  %v622 = vsub.s32 %v535, %v621
  %v623 = vrot.slane %v307, %v622
  %v624 = vsel %vm540, %v623, %v619
  %v625 = vlaneseq
  %v626 = vshrl.u32 %v625, 7
  %v627 = vsub.s32 %v542, %v626
  %v628 = vrot.slane %v308, %v627
  %v629 = vsel %vm547, %v628, %v624
  %v630 = vlaneseq
  %v631 = vshrl.u32 %v630, 7
  %v632 = vsub.s32 %v549, %v631
  %v633 = vrot.slane %v309, %v632
  %v634 = vsel %vm554, %v633, %v629
  %v635 = vlaneseq
  %v636 = vshrl.u32 %v635, 7
  %v637 = vsub.s32 %v446, %v636
  %v638 = vrot.slane %v310, %v637
  %v639 = vlaneseq
  %v640 = vshrl.u32 %v639, 7
  %v641 = vsub.s32 %v451, %v640
  %v642 = vrot.slane %v311, %v641
  %v643 = vsel %vm456, %v642, %v638
  %v644 = vlaneseq
  %v645 = vshrl.u32 %v644, 7
  %v646 = vsub.s32 %v458, %v645
  %v647 = vrot.slane %v312, %v646
  %v648 = vsel %vm463, %v647, %v643
  %v649 = vlaneseq
  %v650 = vshrl.u32 %v649, 7
  %v651 = vsub.s32 %v465, %v650
  %v652 = vrot.slane %v313, %v651
  %v653 = vsel %vm470, %v652, %v648
  %v654 = vlaneseq
  %v655 = vshrl.u32 %v654, 7
  %v656 = vsub.s32 %v472, %v655
  %v657 = vrot.slane %v314, %v656
  %v658 = vsel %vm477, %v657, %v653
  %v659 = vlaneseq
  %v660 = vshrl.u32 %v659, 7
  %v661 = vsub.s32 %v479, %v660
  %v662 = vrot.slane %v315, %v661
  %v663 = vsel %vm484, %v662, %v658
  %v664 = vlaneseq
  %v665 = vshrl.u32 %v664, 7
  %v666 = vsub.s32 %v486, %v665
  %v667 = vrot.slane %v316, %v666
  %v668 = vsel %vm491, %v667, %v663
  %v669 = vlaneseq
  %v670 = vshrl.u32 %v669, 7
  %v671 = vsub.s32 %v493, %v670
  %v672 = vrot.slane %v317, %v671
  %v673 = vsel %vm498, %v672, %v668
  %v674 = vlaneseq
  %v675 = vshrl.u32 %v674, 7
  %v676 = vsub.s32 %v500, %v675
  %v677 = vrot.slane %v318, %v676
  %v678 = vsel %vm505, %v677, %v673
  %v679 = vlaneseq
  %v680 = vshrl.u32 %v679, 7
  %v681 = vsub.s32 %v507, %v680
  %v682 = vrot.slane %v319, %v681
  %v683 = vsel %vm512, %v682, %v678
  %v684 = vlaneseq
  %v685 = vshrl.u32 %v684, 7
  %v686 = vsub.s32 %v514, %v685
  %v687 = vrot.slane %v320, %v686
  %v688 = vsel %vm519, %v687, %v683
  %v689 = vlaneseq
  %v690 = vshrl.u32 %v689, 7
  %v691 = vsub.s32 %v521, %v690
  %v692 = vrot.slane %v321, %v691
  %v693 = vsel %vm526, %v692, %v688
  %v694 = vlaneseq
  %v695 = vshrl.u32 %v694, 7
  %v696 = vsub.s32 %v528, %v695
  %v697 = vrot.slane %v322, %v696
  %v698 = vsel %vm533, %v697, %v693
  %v699 = vlaneseq
  %v700 = vshrl.u32 %v699, 7
  %v701 = vsub.s32 %v535, %v700
  %v702 = vrot.slane %v323, %v701
  %v703 = vsel %vm540, %v702, %v698
  %v704 = vlaneseq
  %v705 = vshrl.u32 %v704, 7
  %v706 = vsub.s32 %v542, %v705
  %v707 = vrot.slane %v324, %v706
  %v708 = vsel %vm547, %v707, %v703
  %v709 = vlaneseq
  %v710 = vshrl.u32 %v709, 7
  %v711 = vsub.s32 %v549, %v710
  %v712 = vrot.slane %v325, %v711
  %v713 = vsel %vm554, %v712, %v708
  %v714 = vlaneseq
  %v715 = vshrl.u32 %v714, 7
  %v716 = vsub.s32 %v446, %v715
  %v717 = vrot.slane %v326, %v716
  %v718 = vlaneseq
  %v719 = vshrl.u32 %v718, 7
  %v720 = vsub.s32 %v451, %v719
  %v721 = vrot.slane %v327, %v720
  %v722 = vsel %vm456, %v721, %v717
  %v723 = vlaneseq
  %v724 = vshrl.u32 %v723, 7
  %v725 = vsub.s32 %v458, %v724
  %v726 = vrot.slane %v328, %v725
  %v727 = vsel %vm463, %v726, %v722
  %v728 = vlaneseq
  %v729 = vshrl.u32 %v728, 7
  %v730 = vsub.s32 %v465, %v729
  %v731 = vrot.slane %v329, %v730
  %v732 = vsel %vm470, %v731, %v727
  %v733 = vlaneseq
  %v734 = vshrl.u32 %v733, 7
  %v735 = vsub.s32 %v472, %v734
  %v736 = vrot.slane %v330, %v735
  %v737 = vsel %vm477, %v736, %v732
  %v738 = vlaneseq
  %v739 = vshrl.u32 %v738, 7
  %v740 = vsub.s32 %v479, %v739
  %v741 = vrot.slane %v331, %v740
  %v742 = vsel %vm484, %v741, %v737
  %v743 = vlaneseq
  %v744 = vshrl.u32 %v743, 7
  %v745 = vsub.s32 %v486, %v744
  %v746 = vrot.slane %v332, %v745
  %v747 = vsel %vm491, %v746, %v742
  %v748 = vlaneseq
  %v749 = vshrl.u32 %v748, 7
  %v750 = vsub.s32 %v493, %v749
  %v751 = vrot.slane %v333, %v750
  %v752 = vsel %vm498, %v751, %v747
  %v753 = vlaneseq
  %v754 = vshrl.u32 %v753, 7
  %v755 = vsub.s32 %v500, %v754
  %v756 = vrot.slane %v334, %v755
  %v757 = vsel %vm505, %v756, %v752
  %v758 = vlaneseq
  %v759 = vshrl.u32 %v758, 7
  %v760 = vsub.s32 %v507, %v759
  %v761 = vrot.slane %v335, %v760
  %v762 = vsel %vm512, %v761, %v757
  %v763 = vlaneseq
  %v764 = vshrl.u32 %v763, 7
  %v765 = vsub.s32 %v514, %v764
  %v766 = vrot.slane %v336, %v765
  %v767 = vsel %vm519, %v766, %v762
  %v768 = vlaneseq
  %v769 = vshrl.u32 %v768, 7
  %v770 = vsub.s32 %v521, %v769
  %v771 = vrot.slane %v337, %v770
  %v772 = vsel %vm526, %v771, %v767
  %v773 = vlaneseq
  %v774 = vshrl.u32 %v773, 7
  %v775 = vsub.s32 %v528, %v774
  %v776 = vrot.slane %v338, %v775
  %v777 = vsel %vm533, %v776, %v772
  %v778 = vlaneseq
  %v779 = vshrl.u32 %v778, 7
  %v780 = vsub.s32 %v535, %v779
  %v781 = vrot.slane %v339, %v780
  %v782 = vsel %vm540, %v781, %v777
  %v783 = vlaneseq
  %v784 = vshrl.u32 %v783, 7
  %v785 = vsub.s32 %v542, %v784
  %v786 = vrot.slane %v340, %v785
  %v787 = vsel %vm547, %v786, %v782
  %v788 = vlaneseq
  %v789 = vshrl.u32 %v788, 7
  %v790 = vsub.s32 %v549, %v789
  %v791 = vrot.slane %v341, %v790
  %v792 = vsel %vm554, %v791, %v787
  %vm793 = vcmask 1041409
  %v794 = vsel %vm793, %v713, %v555
  %v795 = vsel %vm793, %v792, %v634
  %798 = vmatprep.subr.mxu0 0.0
  %799 = vmatpush1.msra.mxu0 %v357
  %800 = vmatprep.subr.mxu0 0.0
  %801 = vmatpush1.msra.mxu0 %v356
  %802 = vmatprep.subr.mxu0 0.0
  %803 = vmatpush1.msra.mxu0 %v355
  %804 = vmatprep.subr.mxu0 0.0
  %805 = vmatpush1.msra.mxu0 %v354
  %806 = vmatprep.subr.mxu0 0.0
  %807 = vmatpush1.msra.mxu0 %v353
  %808 = vmatprep.subr.mxu0 0.0
  %809 = vmatpush1.msra.mxu0 %v352
  %810 = vmatprep.subr.mxu0 0.0
  %811 = vmatpush1.msra.mxu0 %v351
  %812 = vmatprep.subr.mxu0 0.0
  %813 = vmatpush1.msra.mxu0 %v350
  %814 = vmatprep.subr.mxu0 0.0
  %815 = vmatpush1.msra.mxu0 %v349
  %816 = vmatprep.subr.mxu0 0.0
  %817 = vmatpush1.msra.mxu0 %v348
  %818 = vmatprep.subr.mxu0 0.0
  %819 = vmatpush1.msra.mxu0 %v347
  %820 = vmatprep.subr.mxu0 0.0
  %821 = vmatpush1.msra.mxu0 %v346
  %822 = vmatprep.subr.mxu0 0.0
  %823 = vmatpush1.msra.mxu0 %v345
  %824 = vmatprep.subr.mxu0 0.0
  %825 = vmatpush1.msra.mxu0 %v344
  %826 = vmatprep.subr.mxu0 0.0
  %827 = vmatpush1.msra.mxu0 %v343
  %828 = vmatprep.subr.mxu0 0.0
  %829 = vmatpush1.msra.mxu0 %v342
  %830 = vmatprep.subr.mxu0 0.0
  %831 = vmatpush2.msra.mxu0 %v373
  %832 = vmatprep.subr.mxu0 0.0
  %833 = vmatpush2.msra.mxu0 %v372
  %834 = vmatprep.subr.mxu0 0.0
  %835 = vmatpush2.msra.mxu0 %v371
  %836 = vmatprep.subr.mxu0 0.0
  %837 = vmatpush2.msra.mxu0 %v370
  %838 = vmatprep.subr.mxu0 0.0
  %839 = vmatpush2.msra.mxu0 %v369
  %840 = vmatprep.subr.mxu0 0.0
  %841 = vmatpush2.msra.mxu0 %v368
  %842 = vmatprep.subr.mxu0 0.0
  %843 = vmatpush2.msra.mxu0 %v367
  %844 = vmatprep.subr.mxu0 0.0
  %845 = vmatpush2.msra.mxu0 %v366
  %846 = vmatprep.subr.mxu0 0.0
  %847 = vmatpush2.msra.mxu0 %v365
  %848 = vmatprep.subr.mxu0 0.0
  %849 = vmatpush2.msra.mxu0 %v364
  %850 = vmatprep.subr.mxu0 0.0
  %851 = vmatpush2.msra.mxu0 %v363
  %852 = vmatprep.subr.mxu0 0.0
  %853 = vmatpush2.msra.mxu0 %v362
  %854 = vmatprep.subr.mxu0 0.0
  %855 = vmatpush2.msra.mxu0 %v361
  %856 = vmatprep.subr.mxu0 0.0
  %857 = vmatpush2.msra.mxu0 %v360
  %858 = vmatprep.subr.mxu0 0.0
  %859 = vmatpush2.msra.mxu0 %v359
  %860 = vmatprep.subr.mxu0 0.0
  %861 = vmatpush2.msra.mxu0 %v358
  %862 = vmatprep.mubr.f32.mxu0 %v795
  %863 = vmatmul.mubr.f32.gmra.mxu0 %v794
  %v864 = vpop.f32.mrf.mxu0
  %v865 = vadd.f32 %v379, %v864
  %v866 = vpop.f32.mrf.mxu0
  %867 = vdwg.mxu0
  %v868 = vmax.f32 %v865, 0.0
  %v869 = vld [vmem:[%s3] sm:$0xff]
  %v870 = vld [vmem:[%s3 + $0x8] sm:$0xff]
  %v871 = vld [vmem:[%s3 + $0x10] sm:$0xff]
  %v872 = vld [vmem:[%s3 + $0x18] sm:$0xff]
  %v873 = vld [vmem:[%s4] sm:$0x3]
  %v875 = vlaneseq
  %v876 = vshrl.u32 %v875, 7
  %v877 = vsub.s32 0, %v876
  %v878 = vrot.slane %v873, %v877
  %v879 = vlaneseq
  %v880 = vshrl.u32 %v879, 7
  %v881 = vsub.s32 1, %v880
  %v882 = vrot.slane %v873, %v881
  %vm885 = vcmask 130048
  %v887 = vsel %vm885, %v868, 0
  %889 = vmatprep.subr.mxu0 0.0
  %890 = vmatpush1.msra.mxu0 0.0
  %891 = vmatprep.subr.mxu0 0.0
  %892 = vmatpush1.msra.mxu0 0.0
  %893 = vmatprep.subr.mxu0 0.0
  %894 = vmatpush1.msra.mxu0 0.0
  %895 = vmatprep.subr.mxu0 0.0
  %896 = vmatpush1.msra.mxu0 0.0
  %897 = vmatprep.subr.mxu0 0.0
  %898 = vmatpush1.msra.mxu0 0.0
  %899 = vmatprep.subr.mxu0 0.0
  %900 = vmatpush1.msra.mxu0 0.0
  %901 = vmatprep.subr.mxu0 0.0
  %902 = vmatpush1.msra.mxu0 0.0
  %903 = vmatprep.subr.mxu0 0.0
  %904 = vmatpush1.msra.mxu0 0.0
  %905 = vmatprep.subr.mxu0 0.0
  %906 = vmatpush1.msra.mxu0 0.0
  %907 = vmatprep.subr.mxu0 0.0
  %908 = vmatpush1.msra.mxu0 0.0
  %909 = vmatprep.subr.mxu0 0.0
  %910 = vmatpush1.msra.mxu0 0.0
  %911 = vmatprep.subr.mxu0 0.0
  %912 = vmatpush1.msra.mxu0 0.0
  %913 = vmatprep.subr.mxu0 0.0
  %914 = vmatpush1.msra.mxu0 0.0
  %915 = vmatprep.subr.mxu0 0.0
  %916 = vmatpush1.msra.mxu0 0.0
  %917 = vmatprep.subr.mxu0 %v872
  %918 = vmatpush1.msra.mxu0 %v871
  %919 = vmatprep.subr.mxu0 %v870
  %920 = vmatpush1.msra.mxu0 %v869
  %921 = vmatprep.subr.mxu0 0.0
  %922 = vmatpush2.msra.mxu0 0.0
  %923 = vmatprep.subr.mxu0 0.0
  %924 = vmatpush2.msra.mxu0 0.0
  %925 = vmatprep.subr.mxu0 0.0
  %926 = vmatpush2.msra.mxu0 0.0
  %927 = vmatprep.subr.mxu0 0.0
  %928 = vmatpush2.msra.mxu0 0.0
  %929 = vmatprep.subr.mxu0 0.0
  %930 = vmatpush2.msra.mxu0 0.0
  %931 = vmatprep.subr.mxu0 0.0
  %932 = vmatpush2.msra.mxu0 0.0
  %933 = vmatprep.subr.mxu0 0.0
  %934 = vmatpush2.msra.mxu0 0.0
  %935 = vmatprep.subr.mxu0 0.0
  %936 = vmatpush2.msra.mxu0 0.0
  %937 = vmatprep.subr.mxu0 0.0
  %938 = vmatpush2.msra.mxu0 0.0
  %939 = vmatprep.subr.mxu0 0.0
  %940 = vmatpush2.msra.mxu0 0.0
  %941 = vmatprep.subr.mxu0 0.0
  %942 = vmatpush2.msra.mxu0 0.0
  %943 = vmatprep.subr.mxu0 0.0
  %944 = vmatpush2.msra.mxu0 0.0
  %945 = vmatprep.subr.mxu0 0.0
  %946 = vmatpush2.msra.mxu0 0.0
  %947 = vmatprep.subr.mxu0 0.0
  %948 = vmatpush2.msra.mxu0 0.0
  %949 = vmatprep.subr.mxu0 0.0
  %950 = vmatpush2.msra.mxu0 0.0
  %951 = vmatprep.subr.mxu0 0.0
  %952 = vmatpush2.msra.mxu0 0.0
  %953 = vmatprep.mubr.f32.mxu0 0.0
  %954 = vmatmul.mubr.f32.gmra.mxu0 %v887
  %v955 = vpop.f32.mrf.mxu0
  %v956 = vadd.f32 %v878, %v955
  %v957 = vpop.f32.mrf.mxu0
  %v958 = vadd.f32 %v882, %v957
  %959 = vdwg.mxu0
  %v960 = vxor.u32 %v956, 2147483648
  %v961 = vxor.u32 %v958, 2147483648
  %v962 = vmul.f32 %v960, 1.442695
  %v963 = vpow.pop %v962
  %v964 = vmul.f32 %v961, 1.442695
  %v965 = vpow.pop %v964
  %v966 = vadd.f32 %v963, 1.0
  %v967 = vadd.f32 %v965, 1.0
  %v968 = vrcp.pop %v966
  %v969 = vmul.f32 1.0, %v968
  %v970 = vrcp.pop %v967
  %v971 = vmul.f32 1.0, %v970
  %v972 = vadd.f32 %v969, 1.0
  %v973 = vadd.f32 %v971, 1.0
  %v974 = vlaneseq
  %v975 = vshrl.u32 %v974, 7
  %v976 = vsub.s32 0, %v975
  %v977 = vrot.slane %v972, %v976
  %979 = vbcast.lane.b32.xlu0 %v977, 256
  %v980 = vpop.permute.xlu0 %979
  %s982 = sor.u32 256, 8
  %983 = vbcast.lane.b32.xlu0 %v977, %s982
  %v984 = vpop.permute.xlu0 %983
  %s986 = sor.u32 256, 16
  %987 = vbcast.lane.b32.xlu0 %v977, %s986
  %v988 = vpop.permute.xlu0 %987
  %s990 = sor.u32 256, 24
  %991 = vbcast.lane.b32.xlu0 %v977, %s990
  %v992 = vpop.permute.xlu0 %991
  %s994 = sor.u32 256, 32
  %995 = vbcast.lane.b32.xlu0 %v977, %s994
  %v996 = vpop.permute.xlu0 %995
  %s998 = sor.u32 256, 40
  %999 = vbcast.lane.b32.xlu0 %v977, %s998
  %v1000 = vpop.permute.xlu0 %999
  %s1002 = sor.u32 256, 48
  %1003 = vbcast.lane.b32.xlu0 %v977, %s1002
  %v1004 = vpop.permute.xlu0 %1003
  %s1006 = sor.u32 256, 56
  %1007 = vbcast.lane.b32.xlu0 %v977, %s1006
  %v1008 = vpop.permute.xlu0 %1007
  %s1010 = sor.u32 256, 64
  %1011 = vbcast.lane.b32.xlu0 %v977, %s1010
  %v1012 = vpop.permute.xlu0 %1011
  %s1014 = sor.u32 256, 72
  %1015 = vbcast.lane.b32.xlu0 %v977, %s1014
  %v1016 = vpop.permute.xlu0 %1015
  %s1018 = sor.u32 256, 80
  %1019 = vbcast.lane.b32.xlu0 %v977, %s1018
  %v1020 = vpop.permute.xlu0 %1019
  %s1022 = sor.u32 256, 88
  %1023 = vbcast.lane.b32.xlu0 %v977, %s1022
  %v1024 = vpop.permute.xlu0 %1023
  %s1026 = sor.u32 256, 96
  %1027 = vbcast.lane.b32.xlu0 %v977, %s1026
  %v1028 = vpop.permute.xlu0 %1027
  %s1030 = sor.u32 256, 104
  %1031 = vbcast.lane.b32.xlu0 %v977, %s1030
  %v1032 = vpop.permute.xlu0 %1031
  %s1034 = sor.u32 256, 112
  %1035 = vbcast.lane.b32.xlu0 %v977, %s1034
  %v1036 = vpop.permute.xlu0 %1035
  %s1038 = sor.u32 256, 120
  %1039 = vbcast.lane.b32.xlu0 %v977, %s1038
  %v1040 = vpop.permute.xlu0 %1039
  %v1041 = vlaneseq
  %v1042 = vshrl.u32 %v1041, 7
  %v1043 = vsub.s32 0, %v1042
  %v1044 = vrot.slane %v973, %v1043
  %1046 = vbcast.lane.b32.xlu0 %v1044, 256
  %v1047 = vpop.permute.xlu0 %1046
  %s1049 = sor.u32 256, 8
  %1050 = vbcast.lane.b32.xlu0 %v1044, %s1049
  %v1051 = vpop.permute.xlu0 %1050
  %s1053 = sor.u32 256, 16
  %1054 = vbcast.lane.b32.xlu0 %v1044, %s1053
  %v1055 = vpop.permute.xlu0 %1054
  %s1057 = sor.u32 256, 24
  %1058 = vbcast.lane.b32.xlu0 %v1044, %s1057
  %v1059 = vpop.permute.xlu0 %1058
  %s1061 = sor.u32 256, 32
  %1062 = vbcast.lane.b32.xlu0 %v1044, %s1061
  %v1063 = vpop.permute.xlu0 %1062
  %s1065 = sor.u32 256, 40
  %1066 = vbcast.lane.b32.xlu0 %v1044, %s1065
  %v1067 = vpop.permute.xlu0 %1066
  %s1069 = sor.u32 256, 48
  %1070 = vbcast.lane.b32.xlu0 %v1044, %s1069
  %v1071 = vpop.permute.xlu0 %1070
  %s1073 = sor.u32 256, 56
  %1074 = vbcast.lane.b32.xlu0 %v1044, %s1073
  %v1075 = vpop.permute.xlu0 %1074
  %s1077 = sor.u32 256, 64
  %1078 = vbcast.lane.b32.xlu0 %v1044, %s1077
  %v1079 = vpop.permute.xlu0 %1078
  %s1081 = sor.u32 256, 72
  %1082 = vbcast.lane.b32.xlu0 %v1044, %s1081
  %v1083 = vpop.permute.xlu0 %1082
  %s1085 = sor.u32 256, 80
  %1086 = vbcast.lane.b32.xlu0 %v1044, %s1085
  %v1087 = vpop.permute.xlu0 %1086
  %s1089 = sor.u32 256, 88
  %1090 = vbcast.lane.b32.xlu0 %v1044, %s1089
  %v1091 = vpop.permute.xlu0 %1090
  %s1093 = sor.u32 256, 96
  %1094 = vbcast.lane.b32.xlu0 %v1044, %s1093
  %v1095 = vpop.permute.xlu0 %1094
  %s1097 = sor.u32 256, 104
  %1098 = vbcast.lane.b32.xlu0 %v1044, %s1097
  %v1099 = vpop.permute.xlu0 %1098
  %s1101 = sor.u32 256, 112
  %1102 = vbcast.lane.b32.xlu0 %v1044, %s1101
  %v1103 = vpop.permute.xlu0 %1102
  %s1105 = sor.u32 256, 120
  %1106 = vbcast.lane.b32.xlu0 %v1044, %s1105
  %v1107 = vpop.permute.xlu0 %1106
  %v1108 = vlaneseq
  %v1109 = vshrl.u32 %v1108, 7
  %v1110 = vsub.s32 1, %v1109
  %v1111 = vrot.slane %v972, %v1110
  %1113 = vbcast.lane.b32.xlu0 %v1111, 256
  %v1114 = vpop.permute.xlu0 %1113
  %s1116 = sor.u32 256, 8
  %1117 = vbcast.lane.b32.xlu0 %v1111, %s1116
  %v1118 = vpop.permute.xlu0 %1117
  %s1120 = sor.u32 256, 16
  %1121 = vbcast.lane.b32.xlu0 %v1111, %s1120
  %v1122 = vpop.permute.xlu0 %1121
  %s1124 = sor.u32 256, 24
  %1125 = vbcast.lane.b32.xlu0 %v1111, %s1124
  %v1126 = vpop.permute.xlu0 %1125
  %s1128 = sor.u32 256, 32
  %1129 = vbcast.lane.b32.xlu0 %v1111, %s1128
  %v1130 = vpop.permute.xlu0 %1129
  %s1132 = sor.u32 256, 40
  %1133 = vbcast.lane.b32.xlu0 %v1111, %s1132
  %v1134 = vpop.permute.xlu0 %1133
  %s1136 = sor.u32 256, 48
  %1137 = vbcast.lane.b32.xlu0 %v1111, %s1136
  %v1138 = vpop.permute.xlu0 %1137
  %s1140 = sor.u32 256, 56
  %1141 = vbcast.lane.b32.xlu0 %v1111, %s1140
  %v1142 = vpop.permute.xlu0 %1141
  %s1144 = sor.u32 256, 64
  %1145 = vbcast.lane.b32.xlu0 %v1111, %s1144
  %v1146 = vpop.permute.xlu0 %1145
  %s1148 = sor.u32 256, 72
  %1149 = vbcast.lane.b32.xlu0 %v1111, %s1148
  %v1150 = vpop.permute.xlu0 %1149
  %s1152 = sor.u32 256, 80
  %1153 = vbcast.lane.b32.xlu0 %v1111, %s1152
  %v1154 = vpop.permute.xlu0 %1153
  %s1156 = sor.u32 256, 88
  %1157 = vbcast.lane.b32.xlu0 %v1111, %s1156
  %v1158 = vpop.permute.xlu0 %1157
  %s1160 = sor.u32 256, 96
  %1161 = vbcast.lane.b32.xlu0 %v1111, %s1160
  %v1162 = vpop.permute.xlu0 %1161
  %s1164 = sor.u32 256, 104
  %1165 = vbcast.lane.b32.xlu0 %v1111, %s1164
  %v1166 = vpop.permute.xlu0 %1165
  %s1168 = sor.u32 256, 112
  %1169 = vbcast.lane.b32.xlu0 %v1111, %s1168
  %v1170 = vpop.permute.xlu0 %1169
  %s1172 = sor.u32 256, 120
  %1173 = vbcast.lane.b32.xlu0 %v1111, %s1172
  %v1174 = vpop.permute.xlu0 %1173
  %v1175 = vlaneseq
  %v1176 = vshrl.u32 %v1175, 7
  %v1177 = vsub.s32 1, %v1176
  %v1178 = vrot.slane %v973, %v1177
  %1180 = vbcast.lane.b32.xlu0 %v1178, 256
  %v1181 = vpop.permute.xlu0 %1180
  %s1183 = sor.u32 256, 8
  %1184 = vbcast.lane.b32.xlu0 %v1178, %s1183
  %v1185 = vpop.permute.xlu0 %1184
  %s1187 = sor.u32 256, 16
  %1188 = vbcast.lane.b32.xlu0 %v1178, %s1187
  %v1189 = vpop.permute.xlu0 %1188
  %s1191 = sor.u32 256, 24
  %1192 = vbcast.lane.b32.xlu0 %v1178, %s1191
  %v1193 = vpop.permute.xlu0 %1192
  %s1195 = sor.u32 256, 32
  %1196 = vbcast.lane.b32.xlu0 %v1178, %s1195
  %v1197 = vpop.permute.xlu0 %1196
  %s1199 = sor.u32 256, 40
  %1200 = vbcast.lane.b32.xlu0 %v1178, %s1199
  %v1201 = vpop.permute.xlu0 %1200
  %s1203 = sor.u32 256, 48
  %1204 = vbcast.lane.b32.xlu0 %v1178, %s1203
  %v1205 = vpop.permute.xlu0 %1204
  %s1207 = sor.u32 256, 56
  %1208 = vbcast.lane.b32.xlu0 %v1178, %s1207
  %v1209 = vpop.permute.xlu0 %1208
  %s1211 = sor.u32 256, 64
  %1212 = vbcast.lane.b32.xlu0 %v1178, %s1211
  %v1213 = vpop.permute.xlu0 %1212
  %s1215 = sor.u32 256, 72
  %1216 = vbcast.lane.b32.xlu0 %v1178, %s1215
  %v1217 = vpop.permute.xlu0 %1216
  %s1219 = sor.u32 256, 80
  %1220 = vbcast.lane.b32.xlu0 %v1178, %s1219
  %v1221 = vpop.permute.xlu0 %1220
  %s1223 = sor.u32 256, 88
  %1224 = vbcast.lane.b32.xlu0 %v1178, %s1223
  %v1225 = vpop.permute.xlu0 %1224
  %s1227 = sor.u32 256, 96
  %1228 = vbcast.lane.b32.xlu0 %v1178, %s1227
  %v1229 = vpop.permute.xlu0 %1228
  %s1231 = sor.u32 256, 104
  %1232 = vbcast.lane.b32.xlu0 %v1178, %s1231
  %v1233 = vpop.permute.xlu0 %1232
  %s1235 = sor.u32 256, 112
  %1236 = vbcast.lane.b32.xlu0 %v1178, %s1235
  %v1237 = vpop.permute.xlu0 %1236
  %s1239 = sor.u32 256, 120
  %1240 = vbcast.lane.b32.xlu0 %v1178, %s1239
  %v1241 = vpop.permute.xlu0 %1240
  %v1242 = vmul.f32 %v20, %v980
  %v1243 = vmul.f32 %v21, %v984
  %v1244 = vmul.f32 %v22, %v988
  %v1245 = vmul.f32 %v23, %v992
  %v1246 = vmul.f32 %v24, %v996
  %v1247 = vmul.f32 %v25, %v1000
  %v1248 = vmul.f32 %v26, %v1004
  %v1249 = vmul.f32 %v27, %v1008
  %v1250 = vmul.f32 %v28, %v1012
  %v1251 = vmul.f32 %v29, %v1016
  %v1252 = vmul.f32 %v30, %v1020
  %v1253 = vmul.f32 %v31, %v1024
  %v1254 = vmul.f32 %v32, %v1028
  %v1255 = vmul.f32 %v33, %v1032
  %v1256 = vmul.f32 %v34, %v1036
  %v1257 = vmul.f32 %v35, %v1040
  %v1258 = vmul.f32 %v36, %v1047
  %v1259 = vmul.f32 %v37, %v1051
  %v1260 = vmul.f32 %v38, %v1055
  %v1261 = vmul.f32 %v39, %v1059
  %v1262 = vmul.f32 %v40, %v1063
  %v1263 = vmul.f32 %v41, %v1067
  %v1264 = vmul.f32 %v42, %v1071
  %v1265 = vmul.f32 %v43, %v1075
  %v1266 = vmul.f32 %v44, %v1079
  %v1267 = vmul.f32 %v45, %v1083
  %v1268 = vmul.f32 %v46, %v1087
  %v1269 = vmul.f32 %v47, %v1091
  %v1270 = vmul.f32 %v48, %v1095
  %v1271 = vmul.f32 %v49, %v1099
  %v1272 = vmul.f32 %v50, %v1103
  %v1273 = vmul.f32 %v51, %v1107
  %v1274 = vmul.f32 %v52, %v1114
  %v1275 = vmul.f32 %v53, %v1118
  %v1276 = vmul.f32 %v54, %v1122
  %v1277 = vmul.f32 %v55, %v1126
  %v1278 = vmul.f32 %v56, %v1130
  %v1279 = vmul.f32 %v57, %v1134
  %v1280 = vmul.f32 %v58, %v1138
  %v1281 = vmul.f32 %v59, %v1142
  %v1282 = vmul.f32 %v60, %v1146
  %v1283 = vmul.f32 %v61, %v1150
  %v1284 = vmul.f32 %v62, %v1154
  %v1285 = vmul.f32 %v63, %v1158
  %v1286 = vmul.f32 %v64, %v1162
  %v1287 = vmul.f32 %v65, %v1166
  %v1288 = vmul.f32 %v66, %v1170
  %v1289 = vmul.f32 %v67, %v1174
  %v1290 = vmul.f32 %v68, %v1181
  %v1291 = vmul.f32 %v69, %v1185
  %v1292 = vmul.f32 %v70, %v1189
  %v1293 = vmul.f32 %v71, %v1193
  %v1294 = vmul.f32 %v72, %v1197
  %v1295 = vmul.f32 %v73, %v1201
  %v1296 = vmul.f32 %v74, %v1205
  %v1297 = vmul.f32 %v75, %v1209
  %v1298 = vmul.f32 %v76, %v1213
  %v1299 = vmul.f32 %v77, %v1217
  %v1300 = vmul.f32 %v78, %v1221
  %v1301 = vmul.f32 %v79, %v1225
  %v1302 = vmul.f32 %v80, %v1229
  %v1303 = vmul.f32 %v81, %v1233
  %v1304 = vmul.f32 %v82, %v1237
  %v1305 = vmul.f32 %v83, %v1241
  %1306 = vst.msk [vmem:[%s5] sm:$0xff] %vm84, %v1242
  %1307 = vst.msk [vmem:[%s5 + $0x8] sm:$0xff] %vm84, %v1243
  %1308 = vst.msk [vmem:[%s5 + $0x10] sm:$0xff] %vm84, %v1244
  %1309 = vst.msk [vmem:[%s5 + $0x18] sm:$0xff] %vm84, %v1245
  %1310 = vst.msk [vmem:[%s5 + $0x20] sm:$0xff] %vm84, %v1246
  %1311 = vst.msk [vmem:[%s5 + $0x28] sm:$0xff] %vm84, %v1247
  %1312 = vst.msk [vmem:[%s5 + $0x30] sm:$0xff] %vm84, %v1248
  %1313 = vst.msk [vmem:[%s5 + $0x38] sm:$0xff] %vm84, %v1249
  %1314 = vst.msk [vmem:[%s5 + $0x40] sm:$0xff] %vm84, %v1250
  %1315 = vst.msk [vmem:[%s5 + $0x48] sm:$0xff] %vm84, %v1251
  %1316 = vst.msk [vmem:[%s5 + $0x50] sm:$0xff] %vm84, %v1252
  %1317 = vst.msk [vmem:[%s5 + $0x58] sm:$0xff] %vm84, %v1253
  %1318 = vst.msk [vmem:[%s5 + $0x60] sm:$0xff] %vm84, %v1254
  %1319 = vst.msk [vmem:[%s5 + $0x68] sm:$0xff] %vm84, %v1255
  %1320 = vst.msk [vmem:[%s5 + $0x70] sm:$0xff] %vm84, %v1256
  %1321 = vst.msk [vmem:[%s5 + $0x78] sm:$0xff] %vm84, %v1257
  %1322 = vst.msk [vmem:[%s5 + $0x80] sm:$0xff] %vm84, %v1258
  %1323 = vst.msk [vmem:[%s5 + $0x88] sm:$0xff] %vm84, %v1259
  %1324 = vst.msk [vmem:[%s5 + $0x90] sm:$0xff] %vm84, %v1260
  %1325 = vst.msk [vmem:[%s5 + $0x98] sm:$0xff] %vm84, %v1261
  %1326 = vst.msk [vmem:[%s5 + $0xa0] sm:$0xff] %vm84, %v1262
  %1327 = vst.msk [vmem:[%s5 + $0xa8] sm:$0xff] %vm84, %v1263
  %1328 = vst.msk [vmem:[%s5 + $0xb0] sm:$0xff] %vm84, %v1264
  %1329 = vst.msk [vmem:[%s5 + $0xb8] sm:$0xff] %vm84, %v1265
  %1330 = vst.msk [vmem:[%s5 + $0xc0] sm:$0xff] %vm84, %v1266
  %1331 = vst.msk [vmem:[%s5 + $0xc8] sm:$0xff] %vm84, %v1267
  %1332 = vst.msk [vmem:[%s5 + $0xd0] sm:$0xff] %vm84, %v1268
  %1333 = vst.msk [vmem:[%s5 + $0xd8] sm:$0xff] %vm84, %v1269
  %1334 = vst.msk [vmem:[%s5 + $0xe0] sm:$0xff] %vm84, %v1270
  %1335 = vst.msk [vmem:[%s5 + $0xe8] sm:$0xff] %vm84, %v1271
  %1336 = vst.msk [vmem:[%s5 + $0xf0] sm:$0xff] %vm84, %v1272
  %1337 = vst.msk [vmem:[%s5 + $0xf8] sm:$0xff] %vm84, %v1273
  %1338 = vst.msk [vmem:[%s5 + $0x100] sm:$0xff] %vm84, %v1274
  %1339 = vst.msk [vmem:[%s5 + $0x108] sm:$0xff] %vm84, %v1275
  %1340 = vst.msk [vmem:[%s5 + $0x110] sm:$0xff] %vm84, %v1276
  %1341 = vst.msk [vmem:[%s5 + $0x118] sm:$0xff] %vm84, %v1277
  %1342 = vst.msk [vmem:[%s5 + $0x120] sm:$0xff] %vm84, %v1278
  %1343 = vst.msk [vmem:[%s5 + $0x128] sm:$0xff] %vm84, %v1279
  %1344 = vst.msk [vmem:[%s5 + $0x130] sm:$0xff] %vm84, %v1280
  %1345 = vst.msk [vmem:[%s5 + $0x138] sm:$0xff] %vm84, %v1281
  %1346 = vst.msk [vmem:[%s5 + $0x140] sm:$0xff] %vm84, %v1282
  %1347 = vst.msk [vmem:[%s5 + $0x148] sm:$0xff] %vm84, %v1283
  %1348 = vst.msk [vmem:[%s5 + $0x150] sm:$0xff] %vm84, %v1284
  %1349 = vst.msk [vmem:[%s5 + $0x158] sm:$0xff] %vm84, %v1285
  %1350 = vst.msk [vmem:[%s5 + $0x160] sm:$0xff] %vm84, %v1286
  %1351 = vst.msk [vmem:[%s5 + $0x168] sm:$0xff] %vm84, %v1287
  %1352 = vst.msk [vmem:[%s5 + $0x170] sm:$0xff] %vm84, %v1288
  %1353 = vst.msk [vmem:[%s5 + $0x178] sm:$0xff] %vm84, %v1289
  %1354 = vst.msk [vmem:[%s5 + $0x180] sm:$0xff] %vm84, %v1290
  %1355 = vst.msk [vmem:[%s5 + $0x188] sm:$0xff] %vm84, %v1291
  %1356 = vst.msk [vmem:[%s5 + $0x190] sm:$0xff] %vm84, %v1292
  %1357 = vst.msk [vmem:[%s5 + $0x198] sm:$0xff] %vm84, %v1293
  %1358 = vst.msk [vmem:[%s5 + $0x1a0] sm:$0xff] %vm84, %v1294
  %1359 = vst.msk [vmem:[%s5 + $0x1a8] sm:$0xff] %vm84, %v1295
  %1360 = vst.msk [vmem:[%s5 + $0x1b0] sm:$0xff] %vm84, %v1296
  %1361 = vst.msk [vmem:[%s5 + $0x1b8] sm:$0xff] %vm84, %v1297
  %1362 = vst.msk [vmem:[%s5 + $0x1c0] sm:$0xff] %vm84, %v1298
  %1363 = vst.msk [vmem:[%s5 + $0x1c8] sm:$0xff] %vm84, %v1299
  %1364 = vst.msk [vmem:[%s5 + $0x1d0] sm:$0xff] %vm84, %v1300
  %1365 = vst.msk [vmem:[%s5 + $0x1d8] sm:$0xff] %vm84, %v1301
  %1366 = vst.msk [vmem:[%s5 + $0x1e0] sm:$0xff] %vm84, %v1302
  %1367 = vst.msk [vmem:[%s5 + $0x1e8] sm:$0xff] %vm84, %v1303
  %1368 = vst.msk [vmem:[%s5 + $0x1f0] sm:$0xff] %vm84, %v1304
  %1369 = vst.msk [vmem:[%s5 + $0x1f8] sm:$0xff] %vm84, %v1305
  // Predicated region
  $region22: #{_lambda_.7} parent=0 // pred_check
    _
  $region23: #{_lambda_.7} parent=0 // pred_check_branch
    %1371 = sbr.rel (0) target = $region25
  $region24: #{_lambda_.7} parent=0 // pred_region
    _
  $region25: #{_lambda_.7} parent=0 // pred_fallthru
    _
  // Predicated region
  $region26: #{_lambda_.7} parent=0 // pred_check
    _
  $region27: #{_lambda_.7} parent=0 // pred_check_branch
    %1373 = sbr.rel (0) target = $region29
  $region28: #{_lambda_.7} parent=0 // pred_region
    _
  $region29: #{_lambda_.7} parent=0 // pred_fallthru
    _

// kernel: _lambda_.6
$region0: #{_lambda_.6}
  #allocation0 [shape = 'u32[]', space=smem, size = 0x4, offset = 0x4, fixed_abs, tag = 'smem constant byte address 0x4 - core index']
  #allocation1 [shape = 'u32[144,128]{1,0:T(1,128)}', space=vmem, size = 0x12000, scoped, tag = 'internal scratch']
  %s0 = inlined_call_operand.vmem [shape: f32[2,128,16], index: 0, kind: input, shape index: {}]
  %s1 = inlined_call_operand.vmem [shape: f32[128,8], index: 1, kind: input, shape index: {}]
  %s2 = inlined_call_operand.vmem [shape: f32[1,8], index: 2, kind: input, shape index: {}]
  %s3 = inlined_call_operand.vmem [shape: f32[8,128], index: 3, kind: input, shape index: {}]
  %s4 = inlined_call_operand.vmem [shape: f32[1,128], index: 4, kind: input, shape index: {}]
  %s5 = inlined_call_operand.vmem [shape: f32[2,128,16], index: 5, kind: output, shape index: {}]
  %s6 = sld [smem:[#allocation0]]
  $region30: #{_lambda_.6} parent=0
    _
  %s8 = ssub.s32 1, %s6
  %s9 = scalar_select 0, %s8, %s6
  // Predicated region
  $region2: #{_lambda_.6} parent=0 // pred_check
    _
  $region3: #{_lambda_.6} parent=0 // pred_check_branch
    %11 = sbr.rel (0) target = $region5
  $region4: #{_lambda_.6} parent=0 // pred_region
    _
  $region5: #{_lambda_.6} parent=0 // pred_fallthru
    _
  // Predicated region
  $region6: #{_lambda_.6} parent=0 // pred_check
    _
  $region7: #{_lambda_.6} parent=0 // pred_check_branch
    %13 = sbr.rel (0) target = $region9
  $region8: #{_lambda_.6} parent=0 // pred_region
    _
  $region9: #{_lambda_.6} parent=0 // pred_fallthru
    _
  // Predicated region
  $region10: #{_lambda_.6} parent=0 // pred_check
    _
  $region11: #{_lambda_.6} parent=0 // pred_check_branch
    %15 = sbr.rel (0) target = $region13
  $region12: #{_lambda_.6} parent=0 // pred_region
    _
  $region13: #{_lambda_.6} parent=0 // pred_fallthru
    _
  // Predicated region
  $region14: #{_lambda_.6} parent=0 // pred_check
    _
  $region15: #{_lambda_.6} parent=0 // pred_check_branch
    %17 = sbr.rel (0) target = $region17
  $region16: #{_lambda_.6} parent=0 // pred_region
    _
  $region17: #{_lambda_.6} parent=0 // pred_fallthru
    _
  // Predicated region
  $region18: #{_lambda_.6} parent=0 // pred_check
    _
  $region19: #{_lambda_.6} parent=0 // pred_check_branch
    %19 = sbr.rel (0) target = $region21
  $region20: #{_lambda_.6} parent=0 // pred_region
    _
  $region21: #{_lambda_.6} parent=0 // pred_fallthru
    _
  %v20 = vld [vmem:[%s0] sm:$0xff]
  %v21 = vld [vmem:[%s0 + $0x8] sm:$0xff]
  %v22 = vld [vmem:[%s0 + $0x10] sm:$0xff]
  %v23 = vld [vmem:[%s0 + $0x18] sm:$0xff]
  %v24 = vld [vmem:[%s0 + $0x20] sm:$0xff]
  %v25 = vld [vmem:[%s0 + $0x28] sm:$0xff]
  %v26 = vld [vmem:[%s0 + $0x30] sm:$0xff]
  %v27 = vld [vmem:[%s0 + $0x38] sm:$0xff]
  %v28 = vld [vmem:[%s0 + $0x40] sm:$0xff]
  %v29 = vld [vmem:[%s0 + $0x48] sm:$0xff]
  %v30 = vld [vmem:[%s0 + $0x50] sm:$0xff]
  %v31 = vld [vmem:[%s0 + $0x58] sm:$0xff]
  %v32 = vld [vmem:[%s0 + $0x60] sm:$0xff]
  %v33 = vld [vmem:[%s0 + $0x68] sm:$0xff]
  %v34 = vld [vmem:[%s0 + $0x70] sm:$0xff]
  %v35 = vld [vmem:[%s0 + $0x78] sm:$0xff]
  %v36 = vld [vmem:[%s0 + $0x80] sm:$0xff]
  %v37 = vld [vmem:[%s0 + $0x88] sm:$0xff]
  %v38 = vld [vmem:[%s0 + $0x90] sm:$0xff]
  %v39 = vld [vmem:[%s0 + $0x98] sm:$0xff]
  %v40 = vld [vmem:[%s0 + $0xa0] sm:$0xff]
  %v41 = vld [vmem:[%s0 + $0xa8] sm:$0xff]
  %v42 = vld [vmem:[%s0 + $0xb0] sm:$0xff]
  %v43 = vld [vmem:[%s0 + $0xb8] sm:$0xff]
  %v44 = vld [vmem:[%s0 + $0xc0] sm:$0xff]
  %v45 = vld [vmem:[%s0 + $0xc8] sm:$0xff]
  %v46 = vld [vmem:[%s0 + $0xd0] sm:$0xff]
  %v47 = vld [vmem:[%s0 + $0xd8] sm:$0xff]
  %v48 = vld [vmem:[%s0 + $0xe0] sm:$0xff]
  %v49 = vld [vmem:[%s0 + $0xe8] sm:$0xff]
  %v50 = vld [vmem:[%s0 + $0xf0] sm:$0xff]
  %v51 = vld [vmem:[%s0 + $0xf8] sm:$0xff]
  %vm52 = vcmask 130048
  %v53 = vsel %vm52, %v20, 0.0
  %54 = vadd.xlane.f32.xlu0 %v53
  %v55 = vpop.xlane.xlu0 %54
  %v56 = vsel %vm52, %v21, 0.0
  %57 = vadd.xlane.f32.xlu0 %v56
  %v58 = vpop.xlane.xlu0 %57
  %v59 = vsel %vm52, %v22, 0.0
  %60 = vadd.xlane.f32.xlu0 %v59
  %v61 = vpop.xlane.xlu0 %60
  %v62 = vsel %vm52, %v23, 0.0
  %63 = vadd.xlane.f32.xlu0 %v62
  %v64 = vpop.xlane.xlu0 %63
  %v65 = vsel %vm52, %v24, 0.0
  %66 = vadd.xlane.f32.xlu0 %v65
  %v67 = vpop.xlane.xlu0 %66
  %v68 = vsel %vm52, %v25, 0.0
  %69 = vadd.xlane.f32.xlu0 %v68
  %v70 = vpop.xlane.xlu0 %69
  %v71 = vsel %vm52, %v26, 0.0
  %72 = vadd.xlane.f32.xlu0 %v71
  %v73 = vpop.xlane.xlu0 %72
  %v74 = vsel %vm52, %v27, 0.0
  %75 = vadd.xlane.f32.xlu0 %v74
  %v76 = vpop.xlane.xlu0 %75
  %v77 = vsel %vm52, %v28, 0.0
  %78 = vadd.xlane.f32.xlu0 %v77
  %v79 = vpop.xlane.xlu0 %78
  %v80 = vsel %vm52, %v29, 0.0
  %81 = vadd.xlane.f32.xlu0 %v80
  %v82 = vpop.xlane.xlu0 %81
  %v83 = vsel %vm52, %v30, 0.0
  %84 = vadd.xlane.f32.xlu0 %v83
  %v85 = vpop.xlane.xlu0 %84
  %v86 = vsel %vm52, %v31, 0.0
  %87 = vadd.xlane.f32.xlu0 %v86
  %v88 = vpop.xlane.xlu0 %87
  %v89 = vsel %vm52, %v32, 0.0
  %90 = vadd.xlane.f32.xlu0 %v89
  %v91 = vpop.xlane.xlu0 %90
  %v92 = vsel %vm52, %v33, 0.0
  %93 = vadd.xlane.f32.xlu0 %v92
  %v94 = vpop.xlane.xlu0 %93
  %v95 = vsel %vm52, %v34, 0.0
  %96 = vadd.xlane.f32.xlu0 %v95
  %v97 = vpop.xlane.xlu0 %96
  %v98 = vsel %vm52, %v35, 0.0
  %99 = vadd.xlane.f32.xlu0 %v98
  %v100 = vpop.xlane.xlu0 %99
  %v101 = vsel %vm52, %v36, 0.0
  %102 = vadd.xlane.f32.xlu0 %v101
  %v103 = vpop.xlane.xlu0 %102
  %v104 = vsel %vm52, %v37, 0.0
  %105 = vadd.xlane.f32.xlu0 %v104
  %v106 = vpop.xlane.xlu0 %105
  %v107 = vsel %vm52, %v38, 0.0
  %108 = vadd.xlane.f32.xlu0 %v107
  %v109 = vpop.xlane.xlu0 %108
  %v110 = vsel %vm52, %v39, 0.0
  %111 = vadd.xlane.f32.xlu0 %v110
  %v112 = vpop.xlane.xlu0 %111
  %v113 = vsel %vm52, %v40, 0.0
  %114 = vadd.xlane.f32.xlu0 %v113
  %v115 = vpop.xlane.xlu0 %114
  %v116 = vsel %vm52, %v41, 0.0
  %117 = vadd.xlane.f32.xlu0 %v116
  %v118 = vpop.xlane.xlu0 %117
  %v119 = vsel %vm52, %v42, 0.0
  %120 = vadd.xlane.f32.xlu0 %v119
  %v121 = vpop.xlane.xlu0 %120
  %v122 = vsel %vm52, %v43, 0.0
  %123 = vadd.xlane.f32.xlu0 %v122
  %v124 = vpop.xlane.xlu0 %123
  %v125 = vsel %vm52, %v44, 0.0
  %126 = vadd.xlane.f32.xlu0 %v125
  %v127 = vpop.xlane.xlu0 %126
  %v128 = vsel %vm52, %v45, 0.0
  %129 = vadd.xlane.f32.xlu0 %v128
  %v130 = vpop.xlane.xlu0 %129
  %v131 = vsel %vm52, %v46, 0.0
  %132 = vadd.xlane.f32.xlu0 %v131
  %v133 = vpop.xlane.xlu0 %132
  %v134 = vsel %vm52, %v47, 0.0
  %135 = vadd.xlane.f32.xlu0 %v134
  %v136 = vpop.xlane.xlu0 %135
  %v137 = vsel %vm52, %v48, 0.0
  %138 = vadd.xlane.f32.xlu0 %v137
  %v139 = vpop.xlane.xlu0 %138
  %v140 = vsel %vm52, %v49, 0.0
  %141 = vadd.xlane.f32.xlu0 %v140
  %v142 = vpop.xlane.xlu0 %141
  %v143 = vsel %vm52, %v50, 0.0
  %144 = vadd.xlane.f32.xlu0 %v143
  %v145 = vpop.xlane.xlu0 %144
  %v146 = vsel %vm52, %v51, 0.0
  %147 = vadd.xlane.f32.xlu0 %v146
  %v148 = vpop.xlane.xlu0 %147
  %v149 = vrcp.pop 16.0
  %v150 = vmul.f32 %v55, %v149
  %v151 = vmul.f32 %v58, %v149
  %v152 = vmul.f32 %v61, %v149
  %v153 = vmul.f32 %v64, %v149
  %v154 = vmul.f32 %v67, %v149
  %v155 = vmul.f32 %v70, %v149
  %v156 = vmul.f32 %v73, %v149
  %v157 = vmul.f32 %v76, %v149
  %v158 = vmul.f32 %v79, %v149
  %v159 = vmul.f32 %v82, %v149
  %v160 = vmul.f32 %v85, %v149
  %v161 = vmul.f32 %v88, %v149
  %v162 = vmul.f32 %v91, %v149
  %v163 = vmul.f32 %v94, %v149
  %v164 = vmul.f32 %v97, %v149
  %v165 = vmul.f32 %v100, %v149
  %v166 = vmul.f32 %v103, %v149
  %v167 = vmul.f32 %v106, %v149
  %v168 = vmul.f32 %v109, %v149
  %v169 = vmul.f32 %v112, %v149
  %v170 = vmul.f32 %v115, %v149
  %v171 = vmul.f32 %v118, %v149
  %v172 = vmul.f32 %v121, %v149
  %v173 = vmul.f32 %v124, %v149
  %v174 = vmul.f32 %v127, %v149
  %v175 = vmul.f32 %v130, %v149
  %v176 = vmul.f32 %v133, %v149
  %v177 = vmul.f32 %v136, %v149
  %v178 = vmul.f32 %v139, %v149
  %v179 = vmul.f32 %v142, %v149
  %v180 = vmul.f32 %v145, %v149
  %v181 = vmul.f32 %v148, %v149
  %v182 = vld [vmem:[%s1] sm:$0xff]
  %v183 = vld [vmem:[%s1 + $0x8] sm:$0xff]
  %v184 = vld [vmem:[%s1 + $0x10] sm:$0xff]
  %v185 = vld [vmem:[%s1 + $0x18] sm:$0xff]
  %v186 = vld [vmem:[%s1 + $0x20] sm:$0xff]
  %v187 = vld [vmem:[%s1 + $0x28] sm:$0xff]
  %v188 = vld [vmem:[%s1 + $0x30] sm:$0xff]
  %v189 = vld [vmem:[%s1 + $0x38] sm:$0xff]
  %v190 = vld [vmem:[%s1 + $0x40] sm:$0xff]
  %v191 = vld [vmem:[%s1 + $0x48] sm:$0xff]
  %v192 = vld [vmem:[%s1 + $0x50] sm:$0xff]
  %v193 = vld [vmem:[%s1 + $0x58] sm:$0xff]
  %v194 = vld [vmem:[%s1 + $0x60] sm:$0xff]
  %v195 = vld [vmem:[%s1 + $0x68] sm:$0xff]
  %v196 = vld [vmem:[%s1 + $0x70] sm:$0xff]
  %v197 = vld [vmem:[%s1 + $0x78] sm:$0xff]
  %v198 = vld [vmem:[%s2] sm:$0x1]
  %v200 = vlaneseq
  %v201 = vshrl.u32 %v200, 7
  %v202 = vsub.s32 0, %v201
  %v203 = vrot.slane %v198, %v202
  %v237 = vlaneseq
  %v238 = vand.u32 %v237, 127
  %v239 = vlaneseq
  %v240 = vshrl.u32 %v239, 7
  %v241 = vsub.s32 %v238, %v240
  %v242 = vrot.slane %v150, %v241
  %v243 = vadd.s32 %v238, 4294967288
  %v244 = vlaneseq
  %v245 = vshrl.u32 %v244, 7
  %v246 = vsub.s32 %v243, %v245
  %v247 = vrot.slane %v151, %v246
  %vm248 = vcmask 130112
  %v249 = vsel %vm248, %v247, %v242
  %v250 = vadd.s32 %v238, 4294967280
  %v251 = vlaneseq
  %v252 = vshrl.u32 %v251, 7
  %v253 = vsub.s32 %v250, %v252
  %v254 = vrot.slane %v152, %v253
  %vm255 = vcmask 195712
  %v256 = vsel %vm255, %v254, %v249
  %v257 = vadd.s32 %v238, 4294967272
  %v258 = vlaneseq
  %v259 = vshrl.u32 %v258, 7
  %v260 = vsub.s32 %v257, %v259
  %v261 = vrot.slane %v153, %v260
  %vm262 = vcmask 261312
  %v263 = vsel %vm262, %v261, %v256
  %v264 = vadd.s32 %v238, 4294967264
  %v265 = vlaneseq
  %v266 = vshrl.u32 %v265, 7
  %v267 = vsub.s32 %v264, %v266
  %v268 = vrot.slane %v154, %v267
  %vm269 = vcmask 326912
  %v270 = vsel %vm269, %v268, %v263
  %v271 = vadd.s32 %v238, 4294967256
  %v272 = vlaneseq
  %v273 = vshrl.u32 %v272, 7
  %v274 = vsub.s32 %v271, %v273
  %v275 = vrot.slane %v155, %v274
  %vm276 = vcmask 392512
  %v277 = vsel %vm276, %v275, %v270
  %v278 = vadd.s32 %v238, 4294967248
  %v279 = vlaneseq
  %v280 = vshrl.u32 %v279, 7
  %v281 = vsub.s32 %v278, %v280
  %v282 = vrot.slane %v156, %v281
  %vm283 = vcmask 458112
  %v284 = vsel %vm283, %v282, %v277
  %v285 = vadd.s32 %v238, 4294967240
  %v286 = vlaneseq
  %v287 = vshrl.u32 %v286, 7
  %v288 = vsub.s32 %v285, %v287
  %v289 = vrot.slane %v157, %v288
  %vm290 = vcmask 523712
  %v291 = vsel %vm290, %v289, %v284
  %v292 = vadd.s32 %v238, 4294967232
  %v293 = vlaneseq
  %v294 = vshrl.u32 %v293, 7
  %v295 = vsub.s32 %v292, %v294
  %v296 = vrot.slane %v158, %v295
  %vm297 = vcmask 589312
  %v298 = vsel %vm297, %v296, %v291
  %v299 = vadd.s32 %v238, 4294967224
  %v300 = vlaneseq
  %v301 = vshrl.u32 %v300, 7
  %v302 = vsub.s32 %v299, %v301
  %v303 = vrot.slane %v159, %v302
  %vm304 = vcmask 654912
  %v305 = vsel %vm304, %v303, %v298
  %v306 = vadd.s32 %v238, 4294967216
  %v307 = vlaneseq
  %v308 = vshrl.u32 %v307, 7
  %v309 = vsub.s32 %v306, %v308
  %v310 = vrot.slane %v160, %v309
  %vm311 = vcmask 720512
  %v312 = vsel %vm311, %v310, %v305
  %v313 = vadd.s32 %v238, 4294967208
  %v314 = vlaneseq
  %v315 = vshrl.u32 %v314, 7
  %v316 = vsub.s32 %v313, %v315
  %v317 = vrot.slane %v161, %v316
  %vm318 = vcmask 786112
  %v319 = vsel %vm318, %v317, %v312
  %v320 = vadd.s32 %v238, 4294967200
  %v321 = vlaneseq
  %v322 = vshrl.u32 %v321, 7
  %v323 = vsub.s32 %v320, %v322
  %v324 = vrot.slane %v162, %v323
  %vm325 = vcmask 851712
  %v326 = vsel %vm325, %v324, %v319
  %v327 = vadd.s32 %v238, 4294967192
  %v328 = vlaneseq
  %v329 = vshrl.u32 %v328, 7
  %v330 = vsub.s32 %v327, %v329
  %v331 = vrot.slane %v163, %v330
  %vm332 = vcmask 917312
  %v333 = vsel %vm332, %v331, %v326
  %v334 = vadd.s32 %v238, 4294967184
  %v335 = vlaneseq
  %v336 = vshrl.u32 %v335, 7
  %v337 = vsub.s32 %v334, %v336
  %v338 = vrot.slane %v164, %v337
  %vm339 = vcmask 982912
  %v340 = vsel %vm339, %v338, %v333
  %v341 = vadd.s32 %v238, 4294967176
  %v342 = vlaneseq
  %v343 = vshrl.u32 %v342, 7
  %v344 = vsub.s32 %v341, %v343
  %v345 = vrot.slane %v165, %v344
  %vm346 = vcmask 1048512
  %v347 = vsel %vm346, %v345, %v340
  %v348 = vlaneseq
  %v349 = vshrl.u32 %v348, 7
  %v350 = vsub.s32 %v238, %v349
  %v351 = vrot.slane %v166, %v350
  %v352 = vlaneseq
  %v353 = vshrl.u32 %v352, 7
  %v354 = vsub.s32 %v243, %v353
  %v355 = vrot.slane %v167, %v354
  %v356 = vsel %vm248, %v355, %v351
  %v357 = vlaneseq
  %v358 = vshrl.u32 %v357, 7
  %v359 = vsub.s32 %v250, %v358
  %v360 = vrot.slane %v168, %v359
  %v361 = vsel %vm255, %v360, %v356
  %v362 = vlaneseq
  %v363 = vshrl.u32 %v362, 7
  %v364 = vsub.s32 %v257, %v363
  %v365 = vrot.slane %v169, %v364
  %v366 = vsel %vm262, %v365, %v361
  %v367 = vlaneseq
  %v368 = vshrl.u32 %v367, 7
  %v369 = vsub.s32 %v264, %v368
  %v370 = vrot.slane %v170, %v369
  %v371 = vsel %vm269, %v370, %v366
  %v372 = vlaneseq
  %v373 = vshrl.u32 %v372, 7
  %v374 = vsub.s32 %v271, %v373
  %v375 = vrot.slane %v171, %v374
  %v376 = vsel %vm276, %v375, %v371
  %v377 = vlaneseq
  %v378 = vshrl.u32 %v377, 7
  %v379 = vsub.s32 %v278, %v378
  %v380 = vrot.slane %v172, %v379
  %v381 = vsel %vm283, %v380, %v376
  %v382 = vlaneseq
  %v383 = vshrl.u32 %v382, 7
  %v384 = vsub.s32 %v285, %v383
  %v385 = vrot.slane %v173, %v384
  %v386 = vsel %vm290, %v385, %v381
  %v387 = vlaneseq
  %v388 = vshrl.u32 %v387, 7
  %v389 = vsub.s32 %v292, %v388
  %v390 = vrot.slane %v174, %v389
  %v391 = vsel %vm297, %v390, %v386
  %v392 = vlaneseq
  %v393 = vshrl.u32 %v392, 7
  %v394 = vsub.s32 %v299, %v393
  %v395 = vrot.slane %v175, %v394
  %v396 = vsel %vm304, %v395, %v391
  %v397 = vlaneseq
  %v398 = vshrl.u32 %v397, 7
  %v399 = vsub.s32 %v306, %v398
  %v400 = vrot.slane %v176, %v399
  %v401 = vsel %vm311, %v400, %v396
  %v402 = vlaneseq
  %v403 = vshrl.u32 %v402, 7
  %v404 = vsub.s32 %v313, %v403
  %v405 = vrot.slane %v177, %v404
  %v406 = vsel %vm318, %v405, %v401
  %v407 = vlaneseq
  %v408 = vshrl.u32 %v407, 7
  %v409 = vsub.s32 %v320, %v408
  %v410 = vrot.slane %v178, %v409
  %v411 = vsel %vm325, %v410, %v406
  %v412 = vlaneseq
  %v413 = vshrl.u32 %v412, 7
  %v414 = vsub.s32 %v327, %v413
  %v415 = vrot.slane %v179, %v414
  %v416 = vsel %vm332, %v415, %v411
  %v417 = vlaneseq
  %v418 = vshrl.u32 %v417, 7
  %v419 = vsub.s32 %v334, %v418
  %v420 = vrot.slane %v180, %v419
  %v421 = vsel %vm339, %v420, %v416
  %v422 = vlaneseq
  %v423 = vshrl.u32 %v422, 7
  %v424 = vsub.s32 %v341, %v423
  %v425 = vrot.slane %v181, %v424
  %v426 = vsel %vm346, %v425, %v421
  %vm427 = vcmask 1041409
  %v428 = vsel %vm427, %v426, %v347
  %430 = vmatprep.subr.mxu0 0.0
  %431 = vmatpush1.msra.mxu0 %v197
  %432 = vmatprep.subr.mxu0 0.0
  %433 = vmatpush1.msra.mxu0 %v196
  %434 = vmatprep.subr.mxu0 0.0
  %435 = vmatpush1.msra.mxu0 %v195
  %436 = vmatprep.subr.mxu0 0.0
  %437 = vmatpush1.msra.mxu0 %v194
  %438 = vmatprep.subr.mxu0 0.0
  %439 = vmatpush1.msra.mxu0 %v193
  %440 = vmatprep.subr.mxu0 0.0
  %441 = vmatpush1.msra.mxu0 %v192
  %442 = vmatprep.subr.mxu0 0.0
  %443 = vmatpush1.msra.mxu0 %v191
  %444 = vmatprep.subr.mxu0 0.0
  %445 = vmatpush1.msra.mxu0 %v190
  %446 = vmatprep.subr.mxu0 0.0
  %447 = vmatpush1.msra.mxu0 %v189
  %448 = vmatprep.subr.mxu0 0.0
  %449 = vmatpush1.msra.mxu0 %v188
  %450 = vmatprep.subr.mxu0 0.0
  %451 = vmatpush1.msra.mxu0 %v187
  %452 = vmatprep.subr.mxu0 0.0
  %453 = vmatpush1.msra.mxu0 %v186
  %454 = vmatprep.subr.mxu0 0.0
  %455 = vmatpush1.msra.mxu0 %v185
  %456 = vmatprep.subr.mxu0 0.0
  %457 = vmatpush1.msra.mxu0 %v184
  %458 = vmatprep.subr.mxu0 0.0
  %459 = vmatpush1.msra.mxu0 %v183
  %460 = vmatprep.subr.mxu0 0.0
  %461 = vmatpush1.msra.mxu0 %v182
  %462 = vmatprep.subr.mxu0 0.0
  %463 = vmatpush2.msra.mxu0 0.0
  %464 = vmatprep.subr.mxu0 0.0
  %465 = vmatpush2.msra.mxu0 0.0
  %466 = vmatprep.subr.mxu0 0.0
  %467 = vmatpush2.msra.mxu0 0.0
  %468 = vmatprep.subr.mxu0 0.0
  %469 = vmatpush2.msra.mxu0 0.0
  %470 = vmatprep.subr.mxu0 0.0
  %471 = vmatpush2.msra.mxu0 0.0
  %472 = vmatprep.subr.mxu0 0.0
  %473 = vmatpush2.msra.mxu0 0.0
  %474 = vmatprep.subr.mxu0 0.0
  %475 = vmatpush2.msra.mxu0 0.0
  %476 = vmatprep.subr.mxu0 0.0
  %477 = vmatpush2.msra.mxu0 0.0
  %478 = vmatprep.subr.mxu0 0.0
  %479 = vmatpush2.msra.mxu0 0.0
  %480 = vmatprep.subr.mxu0 0.0
  %481 = vmatpush2.msra.mxu0 0.0
  %482 = vmatprep.subr.mxu0 0.0
  %483 = vmatpush2.msra.mxu0 0.0
  %484 = vmatprep.subr.mxu0 0.0
  %485 = vmatpush2.msra.mxu0 0.0
  %486 = vmatprep.subr.mxu0 0.0
  %487 = vmatpush2.msra.mxu0 0.0
  %488 = vmatprep.subr.mxu0 0.0
  %489 = vmatpush2.msra.mxu0 0.0
  %490 = vmatprep.subr.mxu0 0.0
  %491 = vmatpush2.msra.mxu0 0.0
  %492 = vmatprep.subr.mxu0 0.0
  %493 = vmatpush2.msra.mxu0 0.0
  %494 = vmatprep.mubr.f32.mxu0 0.0
  %495 = vmatmul.mubr.f32.gmra.mxu0 %v428
  %v496 = vpop.f32.mrf.mxu0
  %v497 = vadd.f32 %v203, %v496
  %v498 = vpop.f32.mrf.mxu0
  %499 = vdwg.mxu0
  %v500 = vmax.f32 %v497, 0.0
  %v501 = vld [vmem:[%s3] sm:$0xff]
  %v502 = vld [vmem:[%s4] sm:$0x1]
  %v504 = vlaneseq
  %v505 = vshrl.u32 %v504, 7
  %v506 = vsub.s32 0, %v505
  %v507 = vrot.slane %v502, %v506
  %vm509 = vcmask 64512
  %v511 = vsel %vm509, %v500, 0
  %513 = vmatprep.subr.mxu0 0.0
  %514 = vmatpush1.msra.mxu0 0.0
  %515 = vmatprep.subr.mxu0 0.0
  %516 = vmatpush1.msra.mxu0 0.0
  %517 = vmatprep.subr.mxu0 0.0
  %518 = vmatpush1.msra.mxu0 0.0
  %519 = vmatprep.subr.mxu0 0.0
  %520 = vmatpush1.msra.mxu0 0.0
  %521 = vmatprep.subr.mxu0 0.0
  %522 = vmatpush1.msra.mxu0 0.0
  %523 = vmatprep.subr.mxu0 0.0
  %524 = vmatpush1.msra.mxu0 0.0
  %525 = vmatprep.subr.mxu0 0.0
  %526 = vmatpush1.msra.mxu0 0.0
  %527 = vmatprep.subr.mxu0 0.0
  %528 = vmatpush1.msra.mxu0 0.0
  %529 = vmatprep.subr.mxu0 0.0
  %530 = vmatpush1.msra.mxu0 0.0
  %531 = vmatprep.subr.mxu0 0.0
  %532 = vmatpush1.msra.mxu0 0.0
  %533 = vmatprep.subr.mxu0 0.0
  %534 = vmatpush1.msra.mxu0 0.0
  %535 = vmatprep.subr.mxu0 0.0
  %536 = vmatpush1.msra.mxu0 0.0
  %537 = vmatprep.subr.mxu0 0.0
  %538 = vmatpush1.msra.mxu0 0.0
  %539 = vmatprep.subr.mxu0 0.0
  %540 = vmatpush1.msra.mxu0 0.0
  %541 = vmatprep.subr.mxu0 0.0
  %542 = vmatpush1.msra.mxu0 0.0
  %543 = vmatprep.subr.mxu0 0.0
  %544 = vmatpush1.msra.mxu0 %v501
  %545 = vmatprep.subr.mxu0 0.0
  %546 = vmatpush2.msra.mxu0 0.0
  %547 = vmatprep.subr.mxu0 0.0
  %548 = vmatpush2.msra.mxu0 0.0
  %549 = vmatprep.subr.mxu0 0.0
  %550 = vmatpush2.msra.mxu0 0.0
  %551 = vmatprep.subr.mxu0 0.0
  %552 = vmatpush2.msra.mxu0 0.0
  %553 = vmatprep.subr.mxu0 0.0
  %554 = vmatpush2.msra.mxu0 0.0
  %555 = vmatprep.subr.mxu0 0.0
  %556 = vmatpush2.msra.mxu0 0.0
  %557 = vmatprep.subr.mxu0 0.0
  %558 = vmatpush2.msra.mxu0 0.0
  %559 = vmatprep.subr.mxu0 0.0
  %560 = vmatpush2.msra.mxu0 0.0
  %561 = vmatprep.subr.mxu0 0.0
  %562 = vmatpush2.msra.mxu0 0.0
  %563 = vmatprep.subr.mxu0 0.0
  %564 = vmatpush2.msra.mxu0 0.0
  %565 = vmatprep.subr.mxu0 0.0
  %566 = vmatpush2.msra.mxu0 0.0
  %567 = vmatprep.subr.mxu0 0.0
  %568 = vmatpush2.msra.mxu0 0.0
  %569 = vmatprep.subr.mxu0 0.0
  %570 = vmatpush2.msra.mxu0 0.0
  %571 = vmatprep.subr.mxu0 0.0
  %572 = vmatpush2.msra.mxu0 0.0
  %573 = vmatprep.subr.mxu0 0.0
  %574 = vmatpush2.msra.mxu0 0.0
  %575 = vmatprep.subr.mxu0 0.0
  %576 = vmatpush2.msra.mxu0 0.0
  %577 = vmatprep.mubr.f32.mxu0 0.0
  %578 = vmatmul.mubr.f32.gmra.mxu0 %v511
  %v579 = vpop.f32.mrf.mxu0
  %v580 = vadd.f32 %v507, %v579
  %v581 = vpop.f32.mrf.mxu0
  %582 = vdwg.mxu0
  %v583 = vxor.u32 %v580, 2147483648
  %v584 = vmul.f32 %v583, 1.442695
  %v585 = vpow.pop %v584
  %v586 = vadd.f32 %v585, 1.0
  %v587 = vrcp.pop %v586
  %v588 = vmul.f32 1.0, %v587
  %v589 = vadd.f32 %v588, 1.0
  %v590 = vlaneseq
  %v591 = vshrl.u32 %v590, 7
  %v592 = vsub.s32 0, %v591
  %v593 = vrot.slane %v589, %v592
  %595 = vbcast.lane.b32.xlu0 %v593, 256
  %v596 = vpop.permute.xlu0 %595
  %s598 = sor.u32 256, 8
  %599 = vbcast.lane.b32.xlu0 %v593, %s598
  %v600 = vpop.permute.xlu0 %599
  %s602 = sor.u32 256, 16
  %603 = vbcast.lane.b32.xlu0 %v593, %s602
  %v604 = vpop.permute.xlu0 %603
  %s606 = sor.u32 256, 24
  %607 = vbcast.lane.b32.xlu0 %v593, %s606
  %v608 = vpop.permute.xlu0 %607
  %s610 = sor.u32 256, 32
  %611 = vbcast.lane.b32.xlu0 %v593, %s610
  %v612 = vpop.permute.xlu0 %611
  %s614 = sor.u32 256, 40
  %615 = vbcast.lane.b32.xlu0 %v593, %s614
  %v616 = vpop.permute.xlu0 %615
  %s618 = sor.u32 256, 48
  %619 = vbcast.lane.b32.xlu0 %v593, %s618
  %v620 = vpop.permute.xlu0 %619
  %s622 = sor.u32 256, 56
  %623 = vbcast.lane.b32.xlu0 %v593, %s622
  %v624 = vpop.permute.xlu0 %623
  %s626 = sor.u32 256, 64
  %627 = vbcast.lane.b32.xlu0 %v593, %s626
  %v628 = vpop.permute.xlu0 %627
  %s630 = sor.u32 256, 72
  %631 = vbcast.lane.b32.xlu0 %v593, %s630
  %v632 = vpop.permute.xlu0 %631
  %s634 = sor.u32 256, 80
  %635 = vbcast.lane.b32.xlu0 %v593, %s634
  %v636 = vpop.permute.xlu0 %635
  %s638 = sor.u32 256, 88
  %639 = vbcast.lane.b32.xlu0 %v593, %s638
  %v640 = vpop.permute.xlu0 %639
  %s642 = sor.u32 256, 96
  %643 = vbcast.lane.b32.xlu0 %v593, %s642
  %v644 = vpop.permute.xlu0 %643
  %s646 = sor.u32 256, 104
  %647 = vbcast.lane.b32.xlu0 %v593, %s646
  %v648 = vpop.permute.xlu0 %647
  %s650 = sor.u32 256, 112
  %651 = vbcast.lane.b32.xlu0 %v593, %s650
  %v652 = vpop.permute.xlu0 %651
  %s654 = sor.u32 256, 120
  %655 = vbcast.lane.b32.xlu0 %v593, %s654
  %v656 = vpop.permute.xlu0 %655
  %v657 = vlaneseq
  %v658 = vshrl.u32 %v657, 7
  %v659 = vsub.s32 1, %v658
  %v660 = vrot.slane %v589, %v659
  %662 = vbcast.lane.b32.xlu0 %v660, 256
  %v663 = vpop.permute.xlu0 %662
  %s665 = sor.u32 256, 8
  %666 = vbcast.lane.b32.xlu0 %v660, %s665
  %v667 = vpop.permute.xlu0 %666
  %s669 = sor.u32 256, 16
  %670 = vbcast.lane.b32.xlu0 %v660, %s669
  %v671 = vpop.permute.xlu0 %670
  %s673 = sor.u32 256, 24
  %674 = vbcast.lane.b32.xlu0 %v660, %s673
  %v675 = vpop.permute.xlu0 %674
  %s677 = sor.u32 256, 32
  %678 = vbcast.lane.b32.xlu0 %v660, %s677
  %v679 = vpop.permute.xlu0 %678
  %s681 = sor.u32 256, 40
  %682 = vbcast.lane.b32.xlu0 %v660, %s681
  %v683 = vpop.permute.xlu0 %682
  %s685 = sor.u32 256, 48
  %686 = vbcast.lane.b32.xlu0 %v660, %s685
  %v687 = vpop.permute.xlu0 %686
  %s689 = sor.u32 256, 56
  %690 = vbcast.lane.b32.xlu0 %v660, %s689
  %v691 = vpop.permute.xlu0 %690
  %s693 = sor.u32 256, 64
  %694 = vbcast.lane.b32.xlu0 %v660, %s693
  %v695 = vpop.permute.xlu0 %694
  %s697 = sor.u32 256, 72
  %698 = vbcast.lane.b32.xlu0 %v660, %s697
  %v699 = vpop.permute.xlu0 %698
  %s701 = sor.u32 256, 80
  %702 = vbcast.lane.b32.xlu0 %v660, %s701
  %v703 = vpop.permute.xlu0 %702
  %s705 = sor.u32 256, 88
  %706 = vbcast.lane.b32.xlu0 %v660, %s705
  %v707 = vpop.permute.xlu0 %706
  %s709 = sor.u32 256, 96
  %710 = vbcast.lane.b32.xlu0 %v660, %s709
  %v711 = vpop.permute.xlu0 %710
  %s713 = sor.u32 256, 104
  %714 = vbcast.lane.b32.xlu0 %v660, %s713
  %v715 = vpop.permute.xlu0 %714
  %s717 = sor.u32 256, 112
  %718 = vbcast.lane.b32.xlu0 %v660, %s717
  %v719 = vpop.permute.xlu0 %718
  %s721 = sor.u32 256, 120
  %722 = vbcast.lane.b32.xlu0 %v660, %s721
  %v723 = vpop.permute.xlu0 %722
  %v724 = vmul.f32 %v20, %v596
  %v725 = vmul.f32 %v21, %v600
  %v726 = vmul.f32 %v22, %v604
  %v727 = vmul.f32 %v23, %v608
  %v728 = vmul.f32 %v24, %v612
  %v729 = vmul.f32 %v25, %v616
  %v730 = vmul.f32 %v26, %v620
  %v731 = vmul.f32 %v27, %v624
  %v732 = vmul.f32 %v28, %v628
  %v733 = vmul.f32 %v29, %v632
  %v734 = vmul.f32 %v30, %v636
  %v735 = vmul.f32 %v31, %v640
  %v736 = vmul.f32 %v32, %v644
  %v737 = vmul.f32 %v33, %v648
  %v738 = vmul.f32 %v34, %v652
  %v739 = vmul.f32 %v35, %v656
  %v740 = vmul.f32 %v36, %v663
  %v741 = vmul.f32 %v37, %v667
  %v742 = vmul.f32 %v38, %v671
  %v743 = vmul.f32 %v39, %v675
  %v744 = vmul.f32 %v40, %v679
  %v745 = vmul.f32 %v41, %v683
  %v746 = vmul.f32 %v42, %v687
  %v747 = vmul.f32 %v43, %v691
  %v748 = vmul.f32 %v44, %v695
  %v749 = vmul.f32 %v45, %v699
  %v750 = vmul.f32 %v46, %v703
  %v751 = vmul.f32 %v47, %v707
  %v752 = vmul.f32 %v48, %v711
  %v753 = vmul.f32 %v49, %v715
  %v754 = vmul.f32 %v50, %v719
  %v755 = vmul.f32 %v51, %v723
  %756 = vst.msk [vmem:[%s5] sm:$0xff] %vm52, %v724
  %757 = vst.msk [vmem:[%s5 + $0x8] sm:$0xff] %vm52, %v725
  %758 = vst.msk [vmem:[%s5 + $0x10] sm:$0xff] %vm52, %v726
  %759 = vst.msk [vmem:[%s5 + $0x18] sm:$0xff] %vm52, %v727
  %760 = vst.msk [vmem:[%s5 + $0x20] sm:$0xff] %vm52, %v728
  %761 = vst.msk [vmem:[%s5 + $0x28] sm:$0xff] %vm52, %v729
  %762 = vst.msk [vmem:[%s5 + $0x30] sm:$0xff] %vm52, %v730
  %763 = vst.msk [vmem:[%s5 + $0x38] sm:$0xff] %vm52, %v731
  %764 = vst.msk [vmem:[%s5 + $0x40] sm:$0xff] %vm52, %v732
  %765 = vst.msk [vmem:[%s5 + $0x48] sm:$0xff] %vm52, %v733
  %766 = vst.msk [vmem:[%s5 + $0x50] sm:$0xff] %vm52, %v734
  %767 = vst.msk [vmem:[%s5 + $0x58] sm:$0xff] %vm52, %v735
  %768 = vst.msk [vmem:[%s5 + $0x60] sm:$0xff] %vm52, %v736
  %769 = vst.msk [vmem:[%s5 + $0x68] sm:$0xff] %vm52, %v737
  %770 = vst.msk [vmem:[%s5 + $0x70] sm:$0xff] %vm52, %v738
  %771 = vst.msk [vmem:[%s5 + $0x78] sm:$0xff] %vm52, %v739
  %772 = vst.msk [vmem:[%s5 + $0x80] sm:$0xff] %vm52, %v740
  %773 = vst.msk [vmem:[%s5 + $0x88] sm:$0xff] %vm52, %v741
  %774 = vst.msk [vmem:[%s5 + $0x90] sm:$0xff] %vm52, %v742
  %775 = vst.msk [vmem:[%s5 + $0x98] sm:$0xff] %vm52, %v743
  %776 = vst.msk [vmem:[%s5 + $0xa0] sm:$0xff] %vm52, %v744
  %777 = vst.msk [vmem:[%s5 + $0xa8] sm:$0xff] %vm52, %v745
  %778 = vst.msk [vmem:[%s5 + $0xb0] sm:$0xff] %vm52, %v746
  %779 = vst.msk [vmem:[%s5 + $0xb8] sm:$0xff] %vm52, %v747
  %780 = vst.msk [vmem:[%s5 + $0xc0] sm:$0xff] %vm52, %v748
  %781 = vst.msk [vmem:[%s5 + $0xc8] sm:$0xff] %vm52, %v749
  %782 = vst.msk [vmem:[%s5 + $0xd0] sm:$0xff] %vm52, %v750
  %783 = vst.msk [vmem:[%s5 + $0xd8] sm:$0xff] %vm52, %v751
  %784 = vst.msk [vmem:[%s5 + $0xe0] sm:$0xff] %vm52, %v752
  %785 = vst.msk [vmem:[%s5 + $0xe8] sm:$0xff] %vm52, %v753
  %786 = vst.msk [vmem:[%s5 + $0xf0] sm:$0xff] %vm52, %v754
  %787 = vst.msk [vmem:[%s5 + $0xf8] sm:$0xff] %vm52, %v755
  // Predicated region
  $region22: #{_lambda_.6} parent=0 // pred_check
    _
  $region23: #{_lambda_.6} parent=0 // pred_check_branch
    %789 = sbr.rel (0) target = $region25
  $region24: #{_lambda_.6} parent=0 // pred_region
    _
  $region25: #{_lambda_.6} parent=0 // pred_fallthru
    _
  // Predicated region
  $region26: #{_lambda_.6} parent=0 // pred_check
    _
  $region27: #{_lambda_.6} parent=0 // pred_check_branch
    %791 = sbr.rel (0) target = $region29
  $region28: #{_lambda_.6} parent=0 // pred_region
    _
  $region29: #{_lambda_.6} parent=0 // pred_fallthru
    _

// kernel: _lambda_.4
$region0: #{_lambda_.4}
  #allocation0 [shape = 'u32[]', space=smem, size = 0x4, offset = 0x4, fixed_abs, tag = 'smem constant byte address 0x4 - core index']
  #allocation1 [shape = 'u32[144,128]{1,0:T(1,128)}', space=vmem, size = 0x12000, scoped, tag = 'internal scratch']
  %s0 = inlined_call_operand.vmem [shape: f32[2,32,256], index: 0, kind: input, shape index: {}]
  %s1 = inlined_call_operand.vmem [shape: f32[32,2], index: 1, kind: input, shape index: {}]
  %s2 = inlined_call_operand.vmem [shape: f32[1,2], index: 2, kind: input, shape index: {}]
  %s3 = inlined_call_operand.vmem [shape: f32[2,32], index: 3, kind: input, shape index: {}]
  %s4 = inlined_call_operand.vmem [shape: f32[1,32], index: 4, kind: input, shape index: {}]
  %s5 = inlined_call_operand.vmem [shape: f32[2,32,256], index: 5, kind: output, shape index: {}]
  %s6 = sld [smem:[#allocation0]]
  $region30: #{_lambda_.4} parent=0
    _
  %s8 = ssub.s32 1, %s6
  %s9 = scalar_select 0, %s8, %s6
  // Predicated region
  $region2: #{_lambda_.4} parent=0 // pred_check
    _
  $region3: #{_lambda_.4} parent=0 // pred_check_branch
    %11 = sbr.rel (0) target = $region5
  $region4: #{_lambda_.4} parent=0 // pred_region
    _
  $region5: #{_lambda_.4} parent=0 // pred_fallthru
    _
  // Predicated region
  $region6: #{_lambda_.4} parent=0 // pred_check
    _
  $region7: #{_lambda_.4} parent=0 // pred_check_branch
    %13 = sbr.rel (0) target = $region9
  $region8: #{_lambda_.4} parent=0 // pred_region
    _
  $region9: #{_lambda_.4} parent=0 // pred_fallthru
    _
  // Predicated region
  $region10: #{_lambda_.4} parent=0 // pred_check
    _
  $region11: #{_lambda_.4} parent=0 // pred_check_branch
    %15 = sbr.rel (0) target = $region13
  $region12: #{_lambda_.4} parent=0 // pred_region
    _
  $region13: #{_lambda_.4} parent=0 // pred_fallthru
    _
  // Predicated region
  $region14: #{_lambda_.4} parent=0 // pred_check
    _
  $region15: #{_lambda_.4} parent=0 // pred_check_branch
    %17 = sbr.rel (0) target = $region17
  $region16: #{_lambda_.4} parent=0 // pred_region
    _
  $region17: #{_lambda_.4} parent=0 // pred_fallthru
    _
  // Predicated region
  $region18: #{_lambda_.4} parent=0 // pred_check
    _
  $region19: #{_lambda_.4} parent=0 // pred_check_branch
    %19 = sbr.rel (0) target = $region21
  $region20: #{_lambda_.4} parent=0 // pred_region
    _
  $region21: #{_lambda_.4} parent=0 // pred_fallthru
    _
  %v20 = vld [vmem:[%s0] sm:$0xff]
  %v21 = vld [vmem:[%s0 + $0x8] sm:$0xff]
  %v22 = vld [vmem:[%s0 + $0x10] sm:$0xff]
  %v23 = vld [vmem:[%s0 + $0x18] sm:$0xff]
  %v24 = vld [vmem:[%s0 + $0x20] sm:$0xff]
  %v25 = vld [vmem:[%s0 + $0x28] sm:$0xff]
  %v26 = vld [vmem:[%s0 + $0x30] sm:$0xff]
  %v27 = vld [vmem:[%s0 + $0x38] sm:$0xff]
  %v28 = vld [vmem:[%s0 + $0x40] sm:$0xff]
  %v29 = vld [vmem:[%s0 + $0x48] sm:$0xff]
  %v30 = vld [vmem:[%s0 + $0x50] sm:$0xff]
  %v31 = vld [vmem:[%s0 + $0x58] sm:$0xff]
  %v32 = vld [vmem:[%s0 + $0x60] sm:$0xff]
  %v33 = vld [vmem:[%s0 + $0x68] sm:$0xff]
  %v34 = vld [vmem:[%s0 + $0x70] sm:$0xff]
  %v35 = vld [vmem:[%s0 + $0x78] sm:$0xff]
  %v36 = vadd.f32 %v20, %v21
  %37 = vadd.xlane.f32.xlu0 %v36
  %v38 = vpop.xlane.xlu0 %37
  %v39 = vadd.f32 %v22, %v23
  %40 = vadd.xlane.f32.xlu0 %v39
  %v41 = vpop.xlane.xlu0 %40
  %v42 = vadd.f32 %v24, %v25
  %43 = vadd.xlane.f32.xlu0 %v42
  %v44 = vpop.xlane.xlu0 %43
  %v45 = vadd.f32 %v26, %v27
  %46 = vadd.xlane.f32.xlu0 %v45
  %v47 = vpop.xlane.xlu0 %46
  %v48 = vadd.f32 %v28, %v29
  %49 = vadd.xlane.f32.xlu0 %v48
  %v50 = vpop.xlane.xlu0 %49
  %v51 = vadd.f32 %v30, %v31
  %52 = vadd.xlane.f32.xlu0 %v51
  %v53 = vpop.xlane.xlu0 %52
  %v54 = vadd.f32 %v32, %v33
  %55 = vadd.xlane.f32.xlu0 %v54
  %v56 = vpop.xlane.xlu0 %55
  %v57 = vadd.f32 %v34, %v35
  %58 = vadd.xlane.f32.xlu0 %v57
  %v59 = vpop.xlane.xlu0 %58
  %v60 = vrcp.pop 256.0
  %v61 = vmul.f32 %v38, %v60
  %v62 = vmul.f32 %v41, %v60
  %v63 = vmul.f32 %v44, %v60
  %v64 = vmul.f32 %v47, %v60
  %v65 = vmul.f32 %v50, %v60
  %v66 = vmul.f32 %v53, %v60
  %v67 = vmul.f32 %v56, %v60
  %v68 = vmul.f32 %v59, %v60
  %v69 = vld [vmem:[%s1] sm:$0xff]
  %v70 = vld [vmem:[%s1 + $0x8] sm:$0xff]
  %v71 = vld [vmem:[%s1 + $0x10] sm:$0xff]
  %v72 = vld [vmem:[%s1 + $0x18] sm:$0xff]
  %v73 = vld [vmem:[%s2] sm:$0x1]
  %v75 = vlaneseq
  %v76 = vshrl.u32 %v75, 7
  %v77 = vsub.s32 0, %v76
  %v78 = vrot.slane %v73, %v77
  %v88 = vlaneseq
  %v89 = vand.u32 %v88, 127
  %v90 = vlaneseq
  %v91 = vshrl.u32 %v90, 7
  %v92 = vsub.s32 %v89, %v91
  %v93 = vrot.slane %v61, %v92
  %v94 = vadd.s32 %v89, 4294967288
  %v95 = vlaneseq
  %v96 = vshrl.u32 %v95, 7
  %v97 = vsub.s32 %v94, %v96
  %v98 = vrot.slane %v62, %v97
  %vm99 = vcmask 130112
  %v100 = vsel %vm99, %v98, %v93
  %v101 = vadd.s32 %v89, 4294967280
  %v102 = vlaneseq
  %v103 = vshrl.u32 %v102, 7
  %v104 = vsub.s32 %v101, %v103
  %v105 = vrot.slane %v63, %v104
  %vm106 = vcmask 195712
  %v107 = vsel %vm106, %v105, %v100
  %v108 = vadd.s32 %v89, 4294967272
  %v109 = vlaneseq
  %v110 = vshrl.u32 %v109, 7
  %v111 = vsub.s32 %v108, %v110
  %v112 = vrot.slane %v64, %v111
  %vm113 = vcmask 261312
  %v114 = vsel %vm113, %v112, %v107
  %v115 = vlaneseq
  %v116 = vshrl.u32 %v115, 7
  %v117 = vsub.s32 %v89, %v116
  %v118 = vrot.slane %v65, %v117
  %v119 = vlaneseq
  %v120 = vshrl.u32 %v119, 7
  %v121 = vsub.s32 %v94, %v120
  %v122 = vrot.slane %v66, %v121
  %v123 = vsel %vm99, %v122, %v118
  %v124 = vlaneseq
  %v125 = vshrl.u32 %v124, 7
  %v126 = vsub.s32 %v101, %v125
  %v127 = vrot.slane %v67, %v126
  %v128 = vsel %vm106, %v127, %v123
  %v129 = vlaneseq
  %v130 = vshrl.u32 %v129, 7
  %v131 = vsub.s32 %v108, %v130
  %v132 = vrot.slane %v68, %v131
  %v133 = vsel %vm113, %v132, %v128
  %vm134 = vcmask 1041409
  %v135 = vsel %vm134, %v133, %v114
  %vm136 = vcmask 261120
  %v137 = vsel %vm136, %v135, 0
  %139 = vmatprep.subr.mxu0 0.0
  %140 = vmatpush1.msra.mxu0 0.0
  %141 = vmatprep.subr.mxu0 0.0
  %142 = vmatpush1.msra.mxu0 0.0
  %143 = vmatprep.subr.mxu0 0.0
  %144 = vmatpush1.msra.mxu0 0.0
  %145 = vmatprep.subr.mxu0 0.0
  %146 = vmatpush1.msra.mxu0 0.0
  %147 = vmatprep.subr.mxu0 0.0
  %148 = vmatpush1.msra.mxu0 0.0
  %149 = vmatprep.subr.mxu0 0.0
  %150 = vmatpush1.msra.mxu0 0.0
  %151 = vmatprep.subr.mxu0 0.0
  %152 = vmatpush1.msra.mxu0 0.0
  %153 = vmatprep.subr.mxu0 0.0
  %154 = vmatpush1.msra.mxu0 0.0
  %155 = vmatprep.subr.mxu0 0.0
  %156 = vmatpush1.msra.mxu0 0.0
  %157 = vmatprep.subr.mxu0 0.0
  %158 = vmatpush1.msra.mxu0 0.0
  %159 = vmatprep.subr.mxu0 0.0
  %160 = vmatpush1.msra.mxu0 0.0
  %161 = vmatprep.subr.mxu0 0.0
  %162 = vmatpush1.msra.mxu0 0.0
  %163 = vmatprep.subr.mxu0 0.0
  %164 = vmatpush1.msra.mxu0 %v72
  %165 = vmatprep.subr.mxu0 0.0
  %166 = vmatpush1.msra.mxu0 %v71
  %167 = vmatprep.subr.mxu0 0.0
  %168 = vmatpush1.msra.mxu0 %v70
  %169 = vmatprep.subr.mxu0 0.0
  %170 = vmatpush1.msra.mxu0 %v69
  %171 = vmatprep.subr.mxu0 0.0
  %172 = vmatpush2.msra.mxu0 0.0
  %173 = vmatprep.subr.mxu0 0.0
  %174 = vmatpush2.msra.mxu0 0.0
  %175 = vmatprep.subr.mxu0 0.0
  %176 = vmatpush2.msra.mxu0 0.0
  %177 = vmatprep.subr.mxu0 0.0
  %178 = vmatpush2.msra.mxu0 0.0
  %179 = vmatprep.subr.mxu0 0.0
  %180 = vmatpush2.msra.mxu0 0.0
  %181 = vmatprep.subr.mxu0 0.0
  %182 = vmatpush2.msra.mxu0 0.0
  %183 = vmatprep.subr.mxu0 0.0
  %184 = vmatpush2.msra.mxu0 0.0
  %185 = vmatprep.subr.mxu0 0.0
  %186 = vmatpush2.msra.mxu0 0.0
  %187 = vmatprep.subr.mxu0 0.0
  %188 = vmatpush2.msra.mxu0 0.0
  %189 = vmatprep.subr.mxu0 0.0
  %190 = vmatpush2.msra.mxu0 0.0
  %191 = vmatprep.subr.mxu0 0.0
  %192 = vmatpush2.msra.mxu0 0.0
  %193 = vmatprep.subr.mxu0 0.0
  %194 = vmatpush2.msra.mxu0 0.0
  %195 = vmatprep.subr.mxu0 0.0
  %196 = vmatpush2.msra.mxu0 0.0
  %197 = vmatprep.subr.mxu0 0.0
  %198 = vmatpush2.msra.mxu0 0.0
  %199 = vmatprep.subr.mxu0 0.0
  %200 = vmatpush2.msra.mxu0 0.0
  %201 = vmatprep.subr.mxu0 0.0
  %202 = vmatpush2.msra.mxu0 0.0
  %203 = vmatprep.mubr.f32.mxu0 0.0
  %204 = vmatmul.mubr.f32.gmra.mxu0 %v137
  %v205 = vpop.f32.mrf.mxu0
  %v206 = vadd.f32 %v78, %v205
  %v207 = vpop.f32.mrf.mxu0
  %208 = vdwg.mxu0
  %v209 = vmax.f32 %v206, 0.0
  %v210 = vld [vmem:[%s3] sm:$0x3]
  %v211 = vld [vmem:[%s4] sm:$0x1]
  %v213 = vlaneseq
  %v214 = vshrl.u32 %v213, 7
  %v215 = vsub.s32 0, %v214
  %v216 = vrot.slane %v211, %v215
  %vm218 = vcmask 15360
  %v220 = vsel %vm218, %v209, 0
  %vm222 = vcmask 1041408
  %v224 = vsel %vm222, %v210, 0
  %226 = vmatprep.subr.mxu0 0.0
  %227 = vmatpush1.msra.mxu0 0.0
  %228 = vmatprep.subr.mxu0 0.0
  %229 = vmatpush1.msra.mxu0 0.0
  %230 = vmatprep.subr.mxu0 0.0
  %231 = vmatpush1.msra.mxu0 0.0
  %232 = vmatprep.subr.mxu0 0.0
  %233 = vmatpush1.msra.mxu0 0.0
  %234 = vmatprep.subr.mxu0 0.0
  %235 = vmatpush1.msra.mxu0 0.0
  %236 = vmatprep.subr.mxu0 0.0
  %237 = vmatpush1.msra.mxu0 0.0
  %238 = vmatprep.subr.mxu0 0.0
  %239 = vmatpush1.msra.mxu0 0.0
  %240 = vmatprep.subr.mxu0 0.0
  %241 = vmatpush1.msra.mxu0 0.0
  %242 = vmatprep.subr.mxu0 0.0
  %243 = vmatpush1.msra.mxu0 0.0
  %244 = vmatprep.subr.mxu0 0.0
  %245 = vmatpush1.msra.mxu0 0.0
  %246 = vmatprep.subr.mxu0 0.0
  %247 = vmatpush1.msra.mxu0 0.0
  %248 = vmatprep.subr.mxu0 0.0
  %249 = vmatpush1.msra.mxu0 0.0
  %250 = vmatprep.subr.mxu0 0.0
  %251 = vmatpush1.msra.mxu0 0.0
  %252 = vmatprep.subr.mxu0 0.0
  %253 = vmatpush1.msra.mxu0 0.0
  %254 = vmatprep.subr.mxu0 0.0
  %255 = vmatpush1.msra.mxu0 0.0
  %256 = vmatprep.subr.mxu0 0.0
  %257 = vmatpush1.msra.mxu0 %v224
  %258 = vmatprep.subr.mxu0 0.0
  %259 = vmatpush2.msra.mxu0 0.0
  %260 = vmatprep.subr.mxu0 0.0
  %261 = vmatpush2.msra.mxu0 0.0
  %262 = vmatprep.subr.mxu0 0.0
  %263 = vmatpush2.msra.mxu0 0.0
  %264 = vmatprep.subr.mxu0 0.0
  %265 = vmatpush2.msra.mxu0 0.0
  %266 = vmatprep.subr.mxu0 0.0
  %267 = vmatpush2.msra.mxu0 0.0
  %268 = vmatprep.subr.mxu0 0.0
  %269 = vmatpush2.msra.mxu0 0.0
  %270 = vmatprep.subr.mxu0 0.0
  %271 = vmatpush2.msra.mxu0 0.0
  %272 = vmatprep.subr.mxu0 0.0
  %273 = vmatpush2.msra.mxu0 0.0
  %274 = vmatprep.subr.mxu0 0.0
  %275 = vmatpush2.msra.mxu0 0.0
  %276 = vmatprep.subr.mxu0 0.0
  %277 = vmatpush2.msra.mxu0 0.0
  %278 = vmatprep.subr.mxu0 0.0
  %279 = vmatpush2.msra.mxu0 0.0
  %280 = vmatprep.subr.mxu0 0.0
  %281 = vmatpush2.msra.mxu0 0.0
  %282 = vmatprep.subr.mxu0 0.0
  %283 = vmatpush2.msra.mxu0 0.0
  %284 = vmatprep.subr.mxu0 0.0
  %285 = vmatpush2.msra.mxu0 0.0
  %286 = vmatprep.subr.mxu0 0.0
  %287 = vmatpush2.msra.mxu0 0.0
  %288 = vmatprep.subr.mxu0 0.0
  %289 = vmatpush2.msra.mxu0 0.0
  %290 = vmatprep.mubr.f32.mxu0 0.0
  %291 = vmatmul.mubr.f32.gmra.mxu0 %v220
  %v292 = vpop.f32.mrf.mxu0
  %v293 = vadd.f32 %v216, %v292
  %v294 = vpop.f32.mrf.mxu0
  %295 = vdwg.mxu0
  %v296 = vxor.u32 %v293, 2147483648
  %v297 = vmul.f32 %v296, 1.442695
  %v298 = vpow.pop %v297
  %v299 = vadd.f32 %v298, 1.0
  %v300 = vrcp.pop %v299
  %v301 = vmul.f32 1.0, %v300
  %v302 = vadd.f32 %v301, 1.0
  %v303 = vlaneseq
  %v304 = vshrl.u32 %v303, 7
  %v305 = vsub.s32 0, %v304
  %v306 = vrot.slane %v302, %v305
  %308 = vbcast.lane.b32.xlu0 %v306, 256
  %v309 = vpop.permute.xlu0 %308
  %s311 = sor.u32 256, 8
  %312 = vbcast.lane.b32.xlu0 %v306, %s311
  %v313 = vpop.permute.xlu0 %312
  %s315 = sor.u32 256, 16
  %316 = vbcast.lane.b32.xlu0 %v306, %s315
  %v317 = vpop.permute.xlu0 %316
  %s319 = sor.u32 256, 24
  %320 = vbcast.lane.b32.xlu0 %v306, %s319
  %v321 = vpop.permute.xlu0 %320
  %v322 = vlaneseq
  %v323 = vshrl.u32 %v322, 7
  %v324 = vsub.s32 1, %v323
  %v325 = vrot.slane %v302, %v324
  %327 = vbcast.lane.b32.xlu0 %v325, 256
  %v328 = vpop.permute.xlu0 %327
  %s330 = sor.u32 256, 8
  %331 = vbcast.lane.b32.xlu0 %v325, %s330
  %v332 = vpop.permute.xlu0 %331
  %s334 = sor.u32 256, 16
  %335 = vbcast.lane.b32.xlu0 %v325, %s334
  %v336 = vpop.permute.xlu0 %335
  %s338 = sor.u32 256, 24
  %339 = vbcast.lane.b32.xlu0 %v325, %s338
  %v340 = vpop.permute.xlu0 %339
  %v341 = vmul.f32 %v20, %v309
  %v342 = vmul.f32 %v21, %v309
  %v343 = vmul.f32 %v22, %v313
  %v344 = vmul.f32 %v23, %v313
  %v345 = vmul.f32 %v24, %v317
  %v346 = vmul.f32 %v25, %v317
  %v347 = vmul.f32 %v26, %v321
  %v348 = vmul.f32 %v27, %v321
  %v349 = vmul.f32 %v28, %v328
  %v350 = vmul.f32 %v29, %v328
  %v351 = vmul.f32 %v30, %v332
  %v352 = vmul.f32 %v31, %v332
  %v353 = vmul.f32 %v32, %v336
  %v354 = vmul.f32 %v33, %v336
  %v355 = vmul.f32 %v34, %v340
  %v356 = vmul.f32 %v35, %v340
  %357 = vst [vmem:[%s5] sm:$0xff] %v341
  %358 = vst [vmem:[%s5 + $0x8] sm:$0xff] %v342
  %359 = vst [vmem:[%s5 + $0x10] sm:$0xff] %v343
  %360 = vst [vmem:[%s5 + $0x18] sm:$0xff] %v344
  %361 = vst [vmem:[%s5 + $0x20] sm:$0xff] %v345
  %362 = vst [vmem:[%s5 + $0x28] sm:$0xff] %v346
  %363 = vst [vmem:[%s5 + $0x30] sm:$0xff] %v347
  %364 = vst [vmem:[%s5 + $0x38] sm:$0xff] %v348
  %365 = vst [vmem:[%s5 + $0x40] sm:$0xff] %v349
  %366 = vst [vmem:[%s5 + $0x48] sm:$0xff] %v350
  %367 = vst [vmem:[%s5 + $0x50] sm:$0xff] %v351
  %368 = vst [vmem:[%s5 + $0x58] sm:$0xff] %v352
  %369 = vst [vmem:[%s5 + $0x60] sm:$0xff] %v353
  %370 = vst [vmem:[%s5 + $0x68] sm:$0xff] %v354
  %371 = vst [vmem:[%s5 + $0x70] sm:$0xff] %v355
  %372 = vst [vmem:[%s5 + $0x78] sm:$0xff] %v356
  // Predicated region
  $region22: #{_lambda_.4} parent=0 // pred_check
    _
  $region23: #{_lambda_.4} parent=0 // pred_check_branch
    %374 = sbr.rel (0) target = $region25
  $region24: #{_lambda_.4} parent=0 // pred_region
    _
  $region25: #{_lambda_.4} parent=0 // pred_fallthru
    _
  // Predicated region
  $region26: #{_lambda_.4} parent=0 // pred_check
    _
  $region27: #{_lambda_.4} parent=0 // pred_check_branch
    %376 = sbr.rel (0) target = $region29
  $region28: #{_lambda_.4} parent=0 // pred_region
    _
  $region29: #{_lambda_.4} parent=0 // pred_fallthru
    _

// kernel: _lambda_.5
$region0: #{_lambda_.5}
  #allocation0 [shape = 'u32[]', space=smem, size = 0x4, offset = 0x4, fixed_abs, tag = 'smem constant byte address 0x4 - core index']
  #allocation1 [shape = 'u32[144,128]{1,0:T(1,128)}', space=vmem, size = 0x12000, scoped, tag = 'internal scratch']
  %s0 = inlined_call_operand.vmem [shape: f32[2,64,64], index: 0, kind: input, shape index: {}]
  %s1 = inlined_call_operand.vmem [shape: f32[64,4], index: 1, kind: input, shape index: {}]
  %s2 = inlined_call_operand.vmem [shape: f32[1,4], index: 2, kind: input, shape index: {}]
  %s3 = inlined_call_operand.vmem [shape: f32[4,64], index: 3, kind: input, shape index: {}]
  %s4 = inlined_call_operand.vmem [shape: f32[1,64], index: 4, kind: input, shape index: {}]
  %s5 = inlined_call_operand.vmem [shape: f32[2,64,64], index: 5, kind: output, shape index: {}]
  %s6 = sld [smem:[#allocation0]]
  $region30: #{_lambda_.5} parent=0
    _
  %s8 = ssub.s32 1, %s6
  %s9 = scalar_select 0, %s8, %s6
  // Predicated region
  $region2: #{_lambda_.5} parent=0 // pred_check
    _
  $region3: #{_lambda_.5} parent=0 // pred_check_branch
    %11 = sbr.rel (0) target = $region5
  $region4: #{_lambda_.5} parent=0 // pred_region
    _
  $region5: #{_lambda_.5} parent=0 // pred_fallthru
    _
  // Predicated region
  $region6: #{_lambda_.5} parent=0 // pred_check
    _
  $region7: #{_lambda_.5} parent=0 // pred_check_branch
    %13 = sbr.rel (0) target = $region9
  $region8: #{_lambda_.5} parent=0 // pred_region
    _
  $region9: #{_lambda_.5} parent=0 // pred_fallthru
    _
  // Predicated region
  $region10: #{_lambda_.5} parent=0 // pred_check
    _
  $region11: #{_lambda_.5} parent=0 // pred_check_branch
    %15 = sbr.rel (0) target = $region13
  $region12: #{_lambda_.5} parent=0 // pred_region
    _
  $region13: #{_lambda_.5} parent=0 // pred_fallthru
    _
  // Predicated region
  $region14: #{_lambda_.5} parent=0 // pred_check
    _
  $region15: #{_lambda_.5} parent=0 // pred_check_branch
    %17 = sbr.rel (0) target = $region17
  $region16: #{_lambda_.5} parent=0 // pred_region
    _
  $region17: #{_lambda_.5} parent=0 // pred_fallthru
    _
  // Predicated region
  $region18: #{_lambda_.5} parent=0 // pred_check
    _
  $region19: #{_lambda_.5} parent=0 // pred_check_branch
    %19 = sbr.rel (0) target = $region21
  $region20: #{_lambda_.5} parent=0 // pred_region
    _
  $region21: #{_lambda_.5} parent=0 // pred_fallthru
    _
  %v20 = vld [vmem:[%s0] sm:$0xff]
  %v21 = vld [vmem:[%s0 + $0x8] sm:$0xff]
  %v22 = vld [vmem:[%s0 + $0x10] sm:$0xff]
  %v23 = vld [vmem:[%s0 + $0x18] sm:$0xff]
  %v24 = vld [vmem:[%s0 + $0x20] sm:$0xff]
  %v25 = vld [vmem:[%s0 + $0x28] sm:$0xff]
  %v26 = vld [vmem:[%s0 + $0x30] sm:$0xff]
  %v27 = vld [vmem:[%s0 + $0x38] sm:$0xff]
  %v28 = vld [vmem:[%s0 + $0x40] sm:$0xff]
  %v29 = vld [vmem:[%s0 + $0x48] sm:$0xff]
  %v30 = vld [vmem:[%s0 + $0x50] sm:$0xff]
  %v31 = vld [vmem:[%s0 + $0x58] sm:$0xff]
  %v32 = vld [vmem:[%s0 + $0x60] sm:$0xff]
  %v33 = vld [vmem:[%s0 + $0x68] sm:$0xff]
  %v34 = vld [vmem:[%s0 + $0x70] sm:$0xff]
  %v35 = vld [vmem:[%s0 + $0x78] sm:$0xff]
  %vm36 = vcmask 523264
  %v37 = vsel %vm36, %v20, 0.0
  %38 = vadd.xlane.f32.xlu0 %v37
  %v39 = vpop.xlane.xlu0 %38
  %v40 = vsel %vm36, %v21, 0.0
  %41 = vadd.xlane.f32.xlu0 %v40
  %v42 = vpop.xlane.xlu0 %41
  %v43 = vsel %vm36, %v22, 0.0
  %44 = vadd.xlane.f32.xlu0 %v43
  %v45 = vpop.xlane.xlu0 %44
  %v46 = vsel %vm36, %v23, 0.0
  %47 = vadd.xlane.f32.xlu0 %v46
  %v48 = vpop.xlane.xlu0 %47
  %v49 = vsel %vm36, %v24, 0.0
  %50 = vadd.xlane.f32.xlu0 %v49
  %v51 = vpop.xlane.xlu0 %50
  %v52 = vsel %vm36, %v25, 0.0
  %53 = vadd.xlane.f32.xlu0 %v52
  %v54 = vpop.xlane.xlu0 %53
  %v55 = vsel %vm36, %v26, 0.0
  %56 = vadd.xlane.f32.xlu0 %v55
  %v57 = vpop.xlane.xlu0 %56
  %v58 = vsel %vm36, %v27, 0.0
  %59 = vadd.xlane.f32.xlu0 %v58
  %v60 = vpop.xlane.xlu0 %59
  %v61 = vsel %vm36, %v28, 0.0
  %62 = vadd.xlane.f32.xlu0 %v61
  %v63 = vpop.xlane.xlu0 %62
  %v64 = vsel %vm36, %v29, 0.0
  %65 = vadd.xlane.f32.xlu0 %v64
  %v66 = vpop.xlane.xlu0 %65
  %v67 = vsel %vm36, %v30, 0.0
  %68 = vadd.xlane.f32.xlu0 %v67
  %v69 = vpop.xlane.xlu0 %68
  %v70 = vsel %vm36, %v31, 0.0
  %71 = vadd.xlane.f32.xlu0 %v70
  %v72 = vpop.xlane.xlu0 %71
  %v73 = vsel %vm36, %v32, 0.0
  %74 = vadd.xlane.f32.xlu0 %v73
  %v75 = vpop.xlane.xlu0 %74
  %v76 = vsel %vm36, %v33, 0.0
  %77 = vadd.xlane.f32.xlu0 %v76
  %v78 = vpop.xlane.xlu0 %77
  %v79 = vsel %vm36, %v34, 0.0
  %80 = vadd.xlane.f32.xlu0 %v79
  %v81 = vpop.xlane.xlu0 %80
  %v82 = vsel %vm36, %v35, 0.0
  %83 = vadd.xlane.f32.xlu0 %v82
  %v84 = vpop.xlane.xlu0 %83
  %v85 = vrcp.pop 64.0
  %v86 = vmul.f32 %v39, %v85
  %v87 = vmul.f32 %v42, %v85
  %v88 = vmul.f32 %v45, %v85
  %v89 = vmul.f32 %v48, %v85
  %v90 = vmul.f32 %v51, %v85
  %v91 = vmul.f32 %v54, %v85
  %v92 = vmul.f32 %v57, %v85
  %v93 = vmul.f32 %v60, %v85
  %v94 = vmul.f32 %v63, %v85
  %v95 = vmul.f32 %v66, %v85
  %v96 = vmul.f32 %v69, %v85
  %v97 = vmul.f32 %v72, %v85
  %v98 = vmul.f32 %v75, %v85
  %v99 = vmul.f32 %v78, %v85
  %v100 = vmul.f32 %v81, %v85
  %v101 = vmul.f32 %v84, %v85
  %v102 = vld [vmem:[%s1] sm:$0xff]
  %v103 = vld [vmem:[%s1 + $0x8] sm:$0xff]
  %v104 = vld [vmem:[%s1 + $0x10] sm:$0xff]
  %v105 = vld [vmem:[%s1 + $0x18] sm:$0xff]
  %v106 = vld [vmem:[%s1 + $0x20] sm:$0xff]
  %v107 = vld [vmem:[%s1 + $0x28] sm:$0xff]
  %v108 = vld [vmem:[%s1 + $0x30] sm:$0xff]
  %v109 = vld [vmem:[%s1 + $0x38] sm:$0xff]
  %v110 = vld [vmem:[%s2] sm:$0x1]
  %v112 = vlaneseq
  %v113 = vshrl.u32 %v112, 7
  %v114 = vsub.s32 0, %v113
  %v115 = vrot.slane %v110, %v114
  %v133 = vlaneseq
  %v134 = vand.u32 %v133, 127
  %v135 = vlaneseq
  %v136 = vshrl.u32 %v135, 7
  %v137 = vsub.s32 %v134, %v136
  %v138 = vrot.slane %v86, %v137
  %v139 = vadd.s32 %v134, 4294967288
  %v140 = vlaneseq
  %v141 = vshrl.u32 %v140, 7
  %v142 = vsub.s32 %v139, %v141
  %v143 = vrot.slane %v87, %v142
  %vm144 = vcmask 130112
  %v145 = vsel %vm144, %v143, %v138
  %v146 = vadd.s32 %v134, 4294967280
  %v147 = vlaneseq
  %v148 = vshrl.u32 %v147, 7
  %v149 = vsub.s32 %v146, %v148
  %v150 = vrot.slane %v88, %v149
  %vm151 = vcmask 195712
  %v152 = vsel %vm151, %v150, %v145
  %v153 = vadd.s32 %v134, 4294967272
  %v154 = vlaneseq
  %v155 = vshrl.u32 %v154, 7
  %v156 = vsub.s32 %v153, %v155
  %v157 = vrot.slane %v89, %v156
  %vm158 = vcmask 261312
  %v159 = vsel %vm158, %v157, %v152
  %v160 = vadd.s32 %v134, 4294967264
  %v161 = vlaneseq
  %v162 = vshrl.u32 %v161, 7
  %v163 = vsub.s32 %v160, %v162
  %v164 = vrot.slane %v90, %v163
  %vm165 = vcmask 326912
  %v166 = vsel %vm165, %v164, %v159
  %v167 = vadd.s32 %v134, 4294967256
  %v168 = vlaneseq
  %v169 = vshrl.u32 %v168, 7
  %v170 = vsub.s32 %v167, %v169
  %v171 = vrot.slane %v91, %v170
  %vm172 = vcmask 392512
  %v173 = vsel %vm172, %v171, %v166
  %v174 = vadd.s32 %v134, 4294967248
  %v175 = vlaneseq
  %v176 = vshrl.u32 %v175, 7
  %v177 = vsub.s32 %v174, %v176
  %v178 = vrot.slane %v92, %v177
  %vm179 = vcmask 458112
  %v180 = vsel %vm179, %v178, %v173
  %v181 = vadd.s32 %v134, 4294967240
  %v182 = vlaneseq
  %v183 = vshrl.u32 %v182, 7
  %v184 = vsub.s32 %v181, %v183
  %v185 = vrot.slane %v93, %v184
  %vm186 = vcmask 523712
  %v187 = vsel %vm186, %v185, %v180
  %v188 = vlaneseq
  %v189 = vshrl.u32 %v188, 7
  %v190 = vsub.s32 %v134, %v189
  %v191 = vrot.slane %v94, %v190
  %v192 = vlaneseq
  %v193 = vshrl.u32 %v192, 7
  %v194 = vsub.s32 %v139, %v193
  %v195 = vrot.slane %v95, %v194
  %v196 = vsel %vm144, %v195, %v191
  %v197 = vlaneseq
  %v198 = vshrl.u32 %v197, 7
  %v199 = vsub.s32 %v146, %v198
  %v200 = vrot.slane %v96, %v199
  %v201 = vsel %vm151, %v200, %v196
  %v202 = vlaneseq
  %v203 = vshrl.u32 %v202, 7
  %v204 = vsub.s32 %v153, %v203
  %v205 = vrot.slane %v97, %v204
  %v206 = vsel %vm158, %v205, %v201
  %v207 = vlaneseq
  %v208 = vshrl.u32 %v207, 7
  %v209 = vsub.s32 %v160, %v208
  %v210 = vrot.slane %v98, %v209
  %v211 = vsel %vm165, %v210, %v206
  %v212 = vlaneseq
  %v213 = vshrl.u32 %v212, 7
  %v214 = vsub.s32 %v167, %v213
  %v215 = vrot.slane %v99, %v214
  %v216 = vsel %vm172, %v215, %v211
  %v217 = vlaneseq
  %v218 = vshrl.u32 %v217, 7
  %v219 = vsub.s32 %v174, %v218
  %v220 = vrot.slane %v100, %v219
  %v221 = vsel %vm179, %v220, %v216
  %v222 = vlaneseq
  %v223 = vshrl.u32 %v222, 7
  %v224 = vsub.s32 %v181, %v223
  %v225 = vrot.slane %v101, %v224
  %v226 = vsel %vm186, %v225, %v221
  %vm227 = vcmask 1041409
  %v228 = vsel %vm227, %v226, %v187
  %v229 = vsel %vm36, %v228, 0
  %231 = vmatprep.subr.mxu0 0.0
  %232 = vmatpush1.msra.mxu0 0.0
  %233 = vmatprep.subr.mxu0 0.0
  %234 = vmatpush1.msra.mxu0 0.0
  %235 = vmatprep.subr.mxu0 0.0
  %236 = vmatpush1.msra.mxu0 0.0
  %237 = vmatprep.subr.mxu0 0.0
  %238 = vmatpush1.msra.mxu0 0.0
  %239 = vmatprep.subr.mxu0 0.0
  %240 = vmatpush1.msra.mxu0 0.0
  %241 = vmatprep.subr.mxu0 0.0
  %242 = vmatpush1.msra.mxu0 0.0
  %243 = vmatprep.subr.mxu0 0.0
  %244 = vmatpush1.msra.mxu0 0.0
  %245 = vmatprep.subr.mxu0 0.0
  %246 = vmatpush1.msra.mxu0 0.0
  %247 = vmatprep.subr.mxu0 0.0
  %248 = vmatpush1.msra.mxu0 %v109
  %249 = vmatprep.subr.mxu0 0.0
  %250 = vmatpush1.msra.mxu0 %v108
  %251 = vmatprep.subr.mxu0 0.0
  %252 = vmatpush1.msra.mxu0 %v107
  %253 = vmatprep.subr.mxu0 0.0
  %254 = vmatpush1.msra.mxu0 %v106
  %255 = vmatprep.subr.mxu0 0.0
  %256 = vmatpush1.msra.mxu0 %v105
  %257 = vmatprep.subr.mxu0 0.0
  %258 = vmatpush1.msra.mxu0 %v104
  %259 = vmatprep.subr.mxu0 0.0
  %260 = vmatpush1.msra.mxu0 %v103
  %261 = vmatprep.subr.mxu0 0.0
  %262 = vmatpush1.msra.mxu0 %v102
  %263 = vmatprep.subr.mxu0 0.0
  %264 = vmatpush2.msra.mxu0 0.0
  %265 = vmatprep.subr.mxu0 0.0
  %266 = vmatpush2.msra.mxu0 0.0
  %267 = vmatprep.subr.mxu0 0.0
  %268 = vmatpush2.msra.mxu0 0.0
  %269 = vmatprep.subr.mxu0 0.0
  %270 = vmatpush2.msra.mxu0 0.0
  %271 = vmatprep.subr.mxu0 0.0
  %272 = vmatpush2.msra.mxu0 0.0
  %273 = vmatprep.subr.mxu0 0.0
  %274 = vmatpush2.msra.mxu0 0.0
  %275 = vmatprep.subr.mxu0 0.0
  %276 = vmatpush2.msra.mxu0 0.0
  %277 = vmatprep.subr.mxu0 0.0
  %278 = vmatpush2.msra.mxu0 0.0
  %279 = vmatprep.subr.mxu0 0.0
  %280 = vmatpush2.msra.mxu0 0.0
  %281 = vmatprep.subr.mxu0 0.0
  %282 = vmatpush2.msra.mxu0 0.0
  %283 = vmatprep.subr.mxu0 0.0
  %284 = vmatpush2.msra.mxu0 0.0
  %285 = vmatprep.subr.mxu0 0.0
  %286 = vmatpush2.msra.mxu0 0.0
  %287 = vmatprep.subr.mxu0 0.0
  %288 = vmatpush2.msra.mxu0 0.0
  %289 = vmatprep.subr.mxu0 0.0
  %290 = vmatpush2.msra.mxu0 0.0
  %291 = vmatprep.subr.mxu0 0.0
  %292 = vmatpush2.msra.mxu0 0.0
  %293 = vmatprep.subr.mxu0 0.0
  %294 = vmatpush2.msra.mxu0 0.0
  %295 = vmatprep.mubr.f32.mxu0 0.0
  %296 = vmatmul.mubr.f32.gmra.mxu0 %v229
  %v297 = vpop.f32.mrf.mxu0
  %v298 = vadd.f32 %v115, %v297
  %v299 = vpop.f32.mrf.mxu0
  %300 = vdwg.mxu0
  %v301 = vmax.f32 %v298, 0.0
  %v302 = vld [vmem:[%s3] sm:$0xf]
  %v303 = vld [vmem:[%s4] sm:$0x1]
  %v305 = vlaneseq
  %v306 = vshrl.u32 %v305, 7
  %v307 = vsub.s32 0, %v306
  %v308 = vrot.slane %v303, %v307
  %vm310 = vcmask 31744
  %v312 = vsel %vm310, %v301, 0
  %vm314 = vcmask 1043456
  %v316 = vsel %vm314, %v302, 0
  %318 = vmatprep.subr.mxu0 0.0
  %319 = vmatpush1.msra.mxu0 0.0
  %320 = vmatprep.subr.mxu0 0.0
  %321 = vmatpush1.msra.mxu0 0.0
  %322 = vmatprep.subr.mxu0 0.0
  %323 = vmatpush1.msra.mxu0 0.0
  %324 = vmatprep.subr.mxu0 0.0
  %325 = vmatpush1.msra.mxu0 0.0
  %326 = vmatprep.subr.mxu0 0.0
  %327 = vmatpush1.msra.mxu0 0.0
  %328 = vmatprep.subr.mxu0 0.0
  %329 = vmatpush1.msra.mxu0 0.0
  %330 = vmatprep.subr.mxu0 0.0
  %331 = vmatpush1.msra.mxu0 0.0
  %332 = vmatprep.subr.mxu0 0.0
  %333 = vmatpush1.msra.mxu0 0.0
  %334 = vmatprep.subr.mxu0 0.0
  %335 = vmatpush1.msra.mxu0 0.0
  %336 = vmatprep.subr.mxu0 0.0
  %337 = vmatpush1.msra.mxu0 0.0
  %338 = vmatprep.subr.mxu0 0.0
  %339 = vmatpush1.msra.mxu0 0.0
  %340 = vmatprep.subr.mxu0 0.0
  %341 = vmatpush1.msra.mxu0 0.0
  %342 = vmatprep.subr.mxu0 0.0
  %343 = vmatpush1.msra.mxu0 0.0
  %344 = vmatprep.subr.mxu0 0.0
  %345 = vmatpush1.msra.mxu0 0.0
  %346 = vmatprep.subr.mxu0 0.0
  %347 = vmatpush1.msra.mxu0 0.0
  %348 = vmatprep.subr.mxu0 0.0
  %349 = vmatpush1.msra.mxu0 %v316
  %350 = vmatprep.subr.mxu0 0.0
  %351 = vmatpush2.msra.mxu0 0.0
  %352 = vmatprep.subr.mxu0 0.0
  %353 = vmatpush2.msra.mxu0 0.0
  %354 = vmatprep.subr.mxu0 0.0
  %355 = vmatpush2.msra.mxu0 0.0
  %356 = vmatprep.subr.mxu0 0.0
  %357 = vmatpush2.msra.mxu0 0.0
  %358 = vmatprep.subr.mxu0 0.0
  %359 = vmatpush2.msra.mxu0 0.0
  %360 = vmatprep.subr.mxu0 0.0
  %361 = vmatpush2.msra.mxu0 0.0
  %362 = vmatprep.subr.mxu0 0.0
  %363 = vmatpush2.msra.mxu0 0.0
  %364 = vmatprep.subr.mxu0 0.0
  %365 = vmatpush2.msra.mxu0 0.0
  %366 = vmatprep.subr.mxu0 0.0
  %367 = vmatpush2.msra.mxu0 0.0
  %368 = vmatprep.subr.mxu0 0.0
  %369 = vmatpush2.msra.mxu0 0.0
  %370 = vmatprep.subr.mxu0 0.0
  %371 = vmatpush2.msra.mxu0 0.0
  %372 = vmatprep.subr.mxu0 0.0
  %373 = vmatpush2.msra.mxu0 0.0
  %374 = vmatprep.subr.mxu0 0.0
  %375 = vmatpush2.msra.mxu0 0.0
  %376 = vmatprep.subr.mxu0 0.0
  %377 = vmatpush2.msra.mxu0 0.0
  %378 = vmatprep.subr.mxu0 0.0
  %379 = vmatpush2.msra.mxu0 0.0
  %380 = vmatprep.subr.mxu0 0.0
  %381 = vmatpush2.msra.mxu0 0.0
  %382 = vmatprep.mubr.f32.mxu0 0.0
  %383 = vmatmul.mubr.f32.gmra.mxu0 %v312
  %v384 = vpop.f32.mrf.mxu0
  %v385 = vadd.f32 %v308, %v384
  %v386 = vpop.f32.mrf.mxu0
  %387 = vdwg.mxu0
  %v388 = vxor.u32 %v385, 2147483648
  %v389 = vmul.f32 %v388, 1.442695
  %v390 = vpow.pop %v389
  %v391 = vadd.f32 %v390, 1.0
  %v392 = vrcp.pop %v391
  %v393 = vmul.f32 1.0, %v392
  %v394 = vadd.f32 %v393, 1.0
  %v395 = vlaneseq
  %v396 = vshrl.u32 %v395, 7
  %v397 = vsub.s32 0, %v396
  %v398 = vrot.slane %v394, %v397
  %400 = vbcast.lane.b32.xlu0 %v398, 256
  %v401 = vpop.permute.xlu0 %400
  %s403 = sor.u32 256, 8
  %404 = vbcast.lane.b32.xlu0 %v398, %s403
  %v405 = vpop.permute.xlu0 %404
  %s407 = sor.u32 256, 16
  %408 = vbcast.lane.b32.xlu0 %v398, %s407
  %v409 = vpop.permute.xlu0 %408
  %s411 = sor.u32 256, 24
  %412 = vbcast.lane.b32.xlu0 %v398, %s411
  %v413 = vpop.permute.xlu0 %412
  %s415 = sor.u32 256, 32
  %416 = vbcast.lane.b32.xlu0 %v398, %s415
  %v417 = vpop.permute.xlu0 %416
  %s419 = sor.u32 256, 40
  %420 = vbcast.lane.b32.xlu0 %v398, %s419
  %v421 = vpop.permute.xlu0 %420
  %s423 = sor.u32 256, 48
  %424 = vbcast.lane.b32.xlu0 %v398, %s423
  %v425 = vpop.permute.xlu0 %424
  %s427 = sor.u32 256, 56
  %428 = vbcast.lane.b32.xlu0 %v398, %s427
  %v429 = vpop.permute.xlu0 %428
  %v430 = vlaneseq
  %v431 = vshrl.u32 %v430, 7
  %v432 = vsub.s32 1, %v431
  %v433 = vrot.slane %v394, %v432
  %435 = vbcast.lane.b32.xlu0 %v433, 256
  %v436 = vpop.permute.xlu0 %435
  %s438 = sor.u32 256, 8
  %439 = vbcast.lane.b32.xlu0 %v433, %s438
  %v440 = vpop.permute.xlu0 %439
  %s442 = sor.u32 256, 16
  %443 = vbcast.lane.b32.xlu0 %v433, %s442
  %v444 = vpop.permute.xlu0 %443
  %s446 = sor.u32 256, 24
  %447 = vbcast.lane.b32.xlu0 %v433, %s446
  %v448 = vpop.permute.xlu0 %447
  %s450 = sor.u32 256, 32
  %451 = vbcast.lane.b32.xlu0 %v433, %s450
  %v452 = vpop.permute.xlu0 %451
  %s454 = sor.u32 256, 40
  %455 = vbcast.lane.b32.xlu0 %v433, %s454
  %v456 = vpop.permute.xlu0 %455
  %s458 = sor.u32 256, 48
  %459 = vbcast.lane.b32.xlu0 %v433, %s458
  %v460 = vpop.permute.xlu0 %459
  %s462 = sor.u32 256, 56
  %463 = vbcast.lane.b32.xlu0 %v433, %s462
  %v464 = vpop.permute.xlu0 %463
  %v465 = vmul.f32 %v20, %v401
  %v466 = vmul.f32 %v21, %v405
  %v467 = vmul.f32 %v22, %v409
  %v468 = vmul.f32 %v23, %v413
  %v469 = vmul.f32 %v24, %v417
  %v470 = vmul.f32 %v25, %v421
  %v471 = vmul.f32 %v26, %v425
  %v472 = vmul.f32 %v27, %v429
  %v473 = vmul.f32 %v28, %v436
  %v474 = vmul.f32 %v29, %v440
  %v475 = vmul.f32 %v30, %v444
  %v476 = vmul.f32 %v31, %v448
  %v477 = vmul.f32 %v32, %v452
  %v478 = vmul.f32 %v33, %v456
  %v479 = vmul.f32 %v34, %v460
  %v480 = vmul.f32 %v35, %v464
  %481 = vst.msk [vmem:[%s5] sm:$0xff] %vm36, %v465
  %482 = vst.msk [vmem:[%s5 + $0x8] sm:$0xff] %vm36, %v466
  %483 = vst.msk [vmem:[%s5 + $0x10] sm:$0xff] %vm36, %v467
  %484 = vst.msk [vmem:[%s5 + $0x18] sm:$0xff] %vm36, %v468
  %485 = vst.msk [vmem:[%s5 + $0x20] sm:$0xff] %vm36, %v469
  %486 = vst.msk [vmem:[%s5 + $0x28] sm:$0xff] %vm36, %v470
  %487 = vst.msk [vmem:[%s5 + $0x30] sm:$0xff] %vm36, %v471
  %488 = vst.msk [vmem:[%s5 + $0x38] sm:$0xff] %vm36, %v472
  %489 = vst.msk [vmem:[%s5 + $0x40] sm:$0xff] %vm36, %v473
  %490 = vst.msk [vmem:[%s5 + $0x48] sm:$0xff] %vm36, %v474
  %491 = vst.msk [vmem:[%s5 + $0x50] sm:$0xff] %vm36, %v475
  %492 = vst.msk [vmem:[%s5 + $0x58] sm:$0xff] %vm36, %v476
  %493 = vst.msk [vmem:[%s5 + $0x60] sm:$0xff] %vm36, %v477
  %494 = vst.msk [vmem:[%s5 + $0x68] sm:$0xff] %vm36, %v478
  %495 = vst.msk [vmem:[%s5 + $0x70] sm:$0xff] %vm36, %v479
  %496 = vst.msk [vmem:[%s5 + $0x78] sm:$0xff] %vm36, %v480
  // Predicated region
  $region22: #{_lambda_.5} parent=0 // pred_check
    _
  $region23: #{_lambda_.5} parent=0 // pred_check_branch
    %498 = sbr.rel (0) target = $region25
  $region24: #{_lambda_.5} parent=0 // pred_region
    _
  $region25: #{_lambda_.5} parent=0 // pred_fallthru
    _
  // Predicated region
  $region26: #{_lambda_.5} parent=0 // pred_check
    _
  $region27: #{_lambda_.5} parent=0 // pred_check_branch
    %500 = sbr.rel (0) target = $region29
  $region28: #{_lambda_.5} parent=0 // pred_region
    _
  $region29: #{_lambda_.5} parent=0 // pred_fallthru
    _

</llo_original>
